<compile_context>
chip_gen: v6e
topology: v6e:2x2x1
jax: 0.10.0
libtpu: 0.0.40
codegen_flags: <defaults>
</compile_context>

<pallas_src>
import functools

import numpy as np
import jax
import jax.numpy as jnp
from jax import lax
from jax.experimental import pallas as pl
from jax.experimental.pallas import tpu as pltpu

LEAKY_SLOPE = 0.2


def _leaky(y, slope):
    return jnp.where(y >= 0, y, slope * y)


# ----------------------------------------------------------------------------
# Generation-aware VMEM budget and Buffered(1) feature probe
# ----------------------------------------------------------------------------
_VMEM_LIMIT = None


def _vmem_limit_bytes():
    """~3/4 of physical VMEM, capped at 100 MiB (v5e/v6e -> 96 MiB, v7x -> 48 MiB)."""
    global _VMEM_LIMIT
    if _VMEM_LIMIT is None:
        try:
            cap = pltpu.get_tpu_info().vmem_capacity_bytes
        except Exception:
            cap = 64 * 1024 * 1024          # conservative fallback
        _VMEM_LIMIT = int(min(cap * 3 // 4, 100 * 1024 * 1024))
    return _VMEM_LIMIT


_BUFFERED_OK = None


def _buffered_supported():
    """Probe whether BlockSpec(pipeline_mode=pl.Buffered(1)) lowers here."""
    global _BUFFERED_OK
    if _BUFFERED_OK is None:
        try:
            spec = pl.BlockSpec((8, 128), lambda i: (0, 0),
                                pipeline_mode=pl.Buffered(1))

            def _probe_kernel(x_ref, o_ref):
                o_ref[...] = x_ref[...]

            fn = pl.pallas_call(
                _probe_kernel,
                grid=(2,),
                in_specs=[spec],
                out_specs=pl.BlockSpec((8, 128), lambda i: (i, 0)),
                out_shape=jax.ShapeDtypeStruct((16, 128), jnp.float32))
            jax.block_until_ready(fn(jnp.zeros((8, 128), jnp.float32)))
            _BUFFERED_OK = True
        except Exception:
            _BUFFERED_OK = False
    return _BUFFERED_OK


def _spec(block_shape, index_map, *, resident=False):
    """BlockSpec; 'resident' (constant index_map) operands get single-buffering
    so they do not occupy 2x their size in VMEM."""
    if resident and _buffered_supported():
        return pl.BlockSpec(block_shape, index_map,
                            pipeline_mode=pl.Buffered(1))
    return pl.BlockSpec(block_shape, index_map)


# ----------------------------------------------------------------------------
# Conv2d(3, stride 2, no pad, NCHW semantics) + bias + LeakyReLU
# Activations flow in NHCW layout: x[n, h, c, w].
# ----------------------------------------------------------------------------
def _conv_kernel(w_ref, b_ref, xe_ref, xo_ref, xe2_ref, o_ref, *, slope):
    # w: (3, 3, Co, C) per-tap weights      b: (Co, 1)
    # xe/xo/xe2: (Hn, C, Wo)  column-parity views of one sample (rows 0..2Ho)
    # o: (Ho, Co, Wo) for the same sample
    Ho, Co, Wo = o_ref.shape
    col_refs = (xe_ref, xo_ref, xe2_ref)

    # Hoist resident weights / bias out of the row loop.
    wts = [[w_ref[kh, kw] for kw in range(3)] for kh in range(3)]
    bias = b_ref[...].astype(jnp.float32)                     # (Co, 1)

    def row_body(ho, carry):
        acc = jnp.zeros((Co, Wo), jnp.float32)
        for kh in range(3):
            r = 2 * ho + kh
            for kw in range(3):
                tap = col_refs[kw][r]                          # (C, Wo)
                acc = acc + jnp.dot(wts[kh][kw], tap,
                                    preferred_element_type=jnp.float32)
        acc = acc + bias
        o_ref[ho] = _leaky(acc, slope).astype(o_ref.dtype)
        return carry

    lax.fori_loop(0, Ho, row_body, 0)


def conv2d_act(x, w, b, *, slope=LEAKY_SLOPE, compute_dtype=jnp.float32):
    """x: (N, H, C, W) NHCW; w: (Co, C, 3, 3) (PyTorch layout); b: (Co,).
    Returns (N, Ho, Co, Wo) NHCW, in compute_dtype."""
    N, H, C, W = x.shape
    Co = w.shape[0]
    Ho = (H - 3) // 2 + 1
    Wo = (W - 3) // 2 + 1
    Hn = 2 * Ho + 1                      # rows 0 .. 2*Ho are the only ones used

    xcd = x.astype(compute_dtype)
    # Column-parity views: ~1.5x of the input instead of the 9x im2col blowup.
    xe = xcd[:, :Hn, :, 0:2 * Wo - 1:2]      # input cols 2*wo       -> (N,Hn,C,Wo)
    xo = xcd[:, :Hn, :, 1:2 * Wo:2]          # input cols 2*wo + 1
    xe2 = xcd[:, :Hn, :, 2:2 * Wo + 1:2]     # input cols 2*wo + 2
    # TODO(synk): fold the parity split into the kernel with sublane-strided
    # pl.ds loads to reach 1.0x HBM traffic, and pad Wo->128 multiple at the
    # 256x256 scale for fully unmasked lane stores.

    w_taps = jnp.transpose(w, (2, 3, 0, 1)).astype(compute_dtype)  # (3,3,Co,C)
    b2 = b.reshape(Co, 1).astype(jnp.float32)

    out = pl.pallas_call(
        functools.partial(_conv_kernel, slope=slope),
        grid=(N,),
        in_specs=[
            _spec((3, 3, Co, C), lambda n: (0, 0, 0, 0), resident=True),
            _spec((Co, 1), lambda n: (0, 0), resident=True),
            pl.BlockSpec((None, Hn, C, Wo), lambda n: (n, 0, 0, 0)),
            pl.BlockSpec((None, Hn, C, Wo), lambda n: (n, 0, 0, 0)),
            pl.BlockSpec((None, Hn, C, Wo), lambda n: (n, 0, 0, 0)),
        ],
        out_specs=pl.BlockSpec((None, Ho, Co, Wo), lambda n: (n, 0, 0, 0)),
        out_shape=jax.ShapeDtypeStruct((N, Ho, Co, Wo), compute_dtype),
        compiler_params=pltpu.CompilerParams(
            dimension_semantics=("parallel",),
            vmem_limit_bytes=_vmem_limit_bytes()),
    )(w_taps, b2, xe, xo, xe2)
    return out


# ----------------------------------------------------------------------------
# Whole combined_linear stack (+ folded [x, par] concat) in ONE pallas_call,
# with the first layer's contraction tiled over a trailing grid axis.
# ----------------------------------------------------------------------------
def _fc_stack_kernel(*refs, num_layers, slope):
    x_ref, par_ref, w0x_ref, w0p_ref, b0_ref = refs[:5]
    o_ref, acc_ref = refs[-2], refs[-1]
    wb = refs[5:-2]                       # (w1, b1, w2, b2, ...)

    k = pl.program_id(1)

    @pl.when(k == 0)
    def _init():
        acc_ref[...] = jnp.zeros_like(acc_ref)

    # Layer-0 partial contraction for this K block (f32 accumulation).
    acc_ref[...] += jnp.dot(x_ref[...], w0x_ref[...],
                            preferred_element_type=jnp.float32)

    @pl.when(k == pl.num_programs(1) - 1)
    def _finish():
        h = acc_ref[...]
        # Folded [x, par] concat: + par @ W0[F:].
        if par_ref.shape[1] == 1:
            h = h + (par_ref[...].astype(jnp.float32)
                     * w0p_ref[...].astype(jnp.float32))
        else:
            h = h + jnp.dot(par_ref[...], w0p_ref[...],
                            preferred_element_type=jnp.float32)
        h = h + b0_ref[...]
        # activation -> linear for the remaining layers; no trailing activation.
        for li in range(1, num_layers):
            w_ref = wb[2 * (li - 1)]
            b_ref = wb[2 * (li - 1) + 1]
            h = _leaky(h, slope)
            h = jnp.dot(h.astype(w_ref.dtype), w_ref[...],
                        preferred_element_type=jnp.float32) + b_ref[...]
        o_ref[...] = h.astype(o_ref.dtype)


def fc_stack(x, par, weights, biases, *, slope=LEAKY_SLOPE,
             compute_dtype=jnp.float32, tile_b=256, tile_k=2048):
    B, Fx = x.shape
    P = par.shape[1]
    L = len(weights)
    n_out = weights[-1].shape[1]
    n1 = weights[0].shape[1]

    w0 = weights[0].astype(compute_dtype)
    w0x, w0p = w0[:Fx, :], w0[Fx:, :]          # split = folded concat
    assert w0p.shape[0] == P, (w0p.shape, P)
    rest_w = [wi.astype(compute_dtype) for wi in weights[1:]]
    b_rows = [bi.reshape(1, -1).astype(jnp.float32) for bi in biases]
    x = x.astype(compute_dtype)
    par = par.astype(compute_dtype)

    # Batch tiling; B>8 gets >=2 blocks so both v7x TensorCores do work.
    if B <= 8:
        TB = B
    elif B <= tile_b:
        TB = ((B + 1) // 2 + 7) // 8 * 8
    else:
        TB = tile_b
    Bp = pl.cdiv(B, TB) * TB
    if Bp != B:
        x = jnp.pad(x, ((0, Bp - B), (0, 0)))
        par = jnp.pad(par, ((0, Bp - B), (0, 0)))

    # First-layer contraction tiling (bounds VMEM at the 256x256 scale).
    if Fx <= tile_k:
        TK, Fxp = Fx, Fx
    else:
        TK = tile_k
        Fxp = pl.cdiv(Fx, TK) * TK
        x = jnp.pad(x, ((0, 0), (0, Fxp - Fx)))
        w0x = jnp.pad(w0x, ((0, Fxp - Fx), (0, 0)))

    operands = [x, par, w0x, w0p, b_rows[0]]
    in_specs = [
        pl.BlockSpec((TB, TK), lambda i, k: (i, k)),
        pl.BlockSpec((TB, P), lambda i, k: (i, 0)),
        pl.BlockSpec((TK, n1), lambda i, k: (k, 0)),
        _spec((P, n1), lambda i, k: (0, 0), resident=True),
        _spec((1, n1), lambda i, k: (0, 0), resident=True),
    ]
    for li in range(1, L):
        operands += [rest_w[li - 1], b_rows[li]]
        in_specs += [
            _spec(rest_w[li - 1].shape, lambda i, k: (0, 0), resident=True),
            _spec(b_rows[li].shape, lambda i, k: (0, 0), resident=True),
        ]

    out = pl.pallas_call(
        functools.partial(_fc_stack_kernel, num_layers=L, slope=slope),
        grid=(Bp // TB, Fxp // TK),
        in_specs=in_specs,
        out_specs=pl.BlockSpec((TB, n_out), lambda i, k: (i, 0)),
        out_shape=jax.ShapeDtypeStruct((Bp, n_out), jnp.float32),
        scratch_shapes=[pltpu.VMEM((TB, n1), jnp.float32)],
        compiler_params=pltpu.CompilerParams(
            dimension_semantics=("parallel", "arbitrary"),
            vmem_limit_bytes=_vmem_limit_bytes()),
    )(*operands)
    return out[:B]


# ----------------------------------------------------------------------------
# The module
# ----------------------------------------------------------------------------
class ParameterCriticPipeFlowPallas:
    def __init__(self, critic_channels, par_dim, combined_neurons,
                 input_hw=16, compute_dtype=jnp.float32, slope=LEAKY_SLOPE,
                 key=None):
        if key is None:
            key = jax.random.PRNGKey(0)
        self.compute_dtype = compute_dtype
        self.slope = slope               # `activation` arg -> LeakyReLU(slope)

        # replicate: channels.reverse(); channels.insert(0, 2)
        channels = list(critic_channels)
        channels.reverse()
        channels.insert(0, 2)
        self.channels = channels
        self.par_dim = par_dim

        ksz, stride, pad, dil = 3, 2, 0, 1
        dim_out = input_hw               # original uses 256; parameterised here
        for _ in range(len(channels) - 1):
            dim_out = int(np.floor(
                (dim_out + 2 * pad - dil * (ksz - 1) - 1) / stride + 1))
        self.dim_out = dim_out

        neurons = list(combined_neurons)
        neurons.insert(0, dim_out * dim_out * channels[-1] + 1)
        neurons.append(par_dim)
        self.neurons = neurons
        # NB: in the PyTorch code every constructed linear has bias=True.

        n_keys = 2 * (len(channels) - 1) + 2 * (len(neurons) - 1)
        keys = jax.random.split(key, n_keys)
        ki = 0
        self.conv_w, self.conv_b = [], []
        for i in range(len(channels) - 1):
            ci, co = channels[i], channels[i + 1]
            self.conv_w.append(
                0.1 * jax.random.normal(keys[ki], (co, ci, ksz, ksz),
                                        jnp.float32)); ki += 1
            self.conv_b.append(
                0.1 * jax.random.normal(keys[ki], (co,), jnp.float32)); ki += 1

        self.lin_w, self.lin_b = [], []
        for i in range(len(neurons) - 1):
            fi, fo = neurons[i], neurons[i + 1]
            self.lin_w.append(
                (0.1 / np.sqrt(fi)) * jax.random.normal(keys[ki], (fi, fo),
                                                        jnp.float32)); ki += 1
            self.lin_b.append(
                0.1 * jax.random.normal(keys[ki], (fo,), jnp.float32)); ki += 1

    def __call__(self, x, par):
        # x: (N, C, H, W) NCHW as in PyTorch.  One relayout to NHCW up front,
        # then every conv layer stays NHCW (no per-layer copies/transposes).
        h = jnp.transpose(x, (0, 2, 1, 3))                    # (N, H, C, W)
        for w, b in zip(self.conv_w, self.conv_b):
            h = conv2d_act(h, w, b, slope=self.slope,
                           compute_dtype=self.compute_dtype)
        # Single transpose back so the flatten order matches torch Flatten on
        # NCHW exactly; the concat with par is folded into the first FC layer.
        h = jnp.transpose(h, (0, 2, 1, 3))                    # (N, C, Ho, Wo)
        n = h.shape[0]
        flat = h.reshape(n, -1)
        return fc_stack(flat, par, self.lin_w, self.lin_b, slope=self.slope,
                        compute_dtype=self.compute_dtype)


if __name__ == "__main__":
    key = jax.random.PRNGKey(0)
    kx, kp, kparams = jax.random.split(key, 3)

    batch = 2
    input_hw = 16                 # original module assumes 256x256
    critic_channels = [8, 4]      # module reverses -> channels = [2, 4, 8]
    par_dim = 1
    combined_neurons = [32, 16]   # -> neurons = [3*3*8 + 1, 32, 16, 1]

    model = ParameterCriticPipeFlowPallas(
        critic_channels, par_dim, combined_neurons,
        input_hw=input_hw, key=kparams)

    x = jax.random.normal(kx, (batch, 2, input_hw, input_hw), jnp.float32)
    par = jax.random.normal(kp, (batch, par_dim), jnp.float32)

    fwd = jax.jit(model.__call__)
    out = fwd(x, par)
    jax.block_until_ready(out)
    assert out.shape == (batch, par_dim), out.shape
    assert bool(jnp.all(jnp.isfinite(out)))
    print("KERNEL_OK")
</pallas_src>

<mosaic_0001>
module attributes {stable_mosaic.version = 11 : i64} {
  func.func @_conv_kernel(%arg0: i32, %arg1: memref<3x3x4x2xf32, #tpu.memory_space<vmem>>, %arg2: memref<4x1xf32, #tpu.memory_space<vmem>>, %arg3: memref<1x15x2x7xf32, #tpu.memory_space<vmem>>, %arg4: memref<1x15x2x7xf32, #tpu.memory_space<vmem>>, %arg5: memref<1x15x2x7xf32, #tpu.memory_space<vmem>>, %arg6: memref<1x7x4x7xf32, #tpu.memory_space<vmem>>) attributes {dimension_semantics = [#tpu.dimension_semantics<parallel>], iteration_bounds = array<i64: 2>, scalar_prefetch = 0 : i64, scratch_operands = 0 : i64, tpu.core_type = #tpu.core_type<tc>, window_params = [{pipeline_mode = #tpu.pipeline_mode<synchronous>, transform_indices = @transform_0, window_bounds = array<i64: 3, 3, 4, 2>}, {pipeline_mode = #tpu.pipeline_mode<synchronous>, transform_indices = @transform_1, window_bounds = array<i64: 4, 1>}, {transform_indices = @transform_2, window_bounds = array<i64: 1, 15, 2, 7>}, {transform_indices = @transform_3, window_bounds = array<i64: 1, 15, 2, 7>}, {transform_indices = @transform_4, window_bounds = array<i64: 1, 15, 2, 7>}, {transform_indices = @transform_5, window_bounds = array<i64: 1, 7, 4, 7>}]} {
    %c0 = arith.constant 0 : index
    %c0_0 = arith.constant 0 : index
    %c0_1 = arith.constant 0 : index
    %c0_2 = arith.constant 0 : index
    %0 = vector.load %arg1[%c0, %c0_0, %c0_1, %c0_2] : memref<3x3x4x2xf32, #tpu.memory_space<vmem>>, vector<1x1x4x2xf32>
    %1 = vector.shape_cast %0 : vector<1x1x4x2xf32> to vector<4x2xf32>
    %c0_3 = arith.constant 0 : index
    %c1 = arith.constant 1 : index
    %c0_4 = arith.constant 0 : index
    %c0_5 = arith.constant 0 : index
    %2 = vector.load %arg1[%c0_3, %c1, %c0_4, %c0_5] : memref<3x3x4x2xf32, #tpu.memory_space<vmem>>, vector<1x1x4x2xf32>
    %3 = vector.shape_cast %2 : vector<1x1x4x2xf32> to vector<4x2xf32>
    %c0_6 = arith.constant 0 : index
    %c2 = arith.constant 2 : index
    %c0_7 = arith.constant 0 : index
    %c0_8 = arith.constant 0 : index
    %4 = vector.load %arg1[%c0_6, %c2, %c0_7, %c0_8] : memref<3x3x4x2xf32, #tpu.memory_space<vmem>>, vector<1x1x4x2xf32>
    %5 = vector.shape_cast %4 : vector<1x1x4x2xf32> to vector<4x2xf32>
    %c1_9 = arith.constant 1 : index
    %c0_10 = arith.constant 0 : index
    %c0_11 = arith.constant 0 : index
    %c0_12 = arith.constant 0 : index
    %6 = vector.load %arg1[%c1_9, %c0_10, %c0_11, %c0_12] : memref<3x3x4x2xf32, #tpu.memory_space<vmem>>, vector<1x1x4x2xf32>
    %7 = vector.shape_cast %6 : vector<1x1x4x2xf32> to vector<4x2xf32>
    %c1_13 = arith.constant 1 : index
    %c1_14 = arith.constant 1 : index
    %c0_15 = arith.constant 0 : index
    %c0_16 = arith.constant 0 : index
    %8 = vector.load %arg1[%c1_13, %c1_14, %c0_15, %c0_16] : memref<3x3x4x2xf32, #tpu.memory_space<vmem>>, vector<1x1x4x2xf32>
    %9 = vector.shape_cast %8 : vector<1x1x4x2xf32> to vector<4x2xf32>
    %c1_17 = arith.constant 1 : index
    %c2_18 = arith.constant 2 : index
    %c0_19 = arith.constant 0 : index
    %c0_20 = arith.constant 0 : index
    %10 = vector.load %arg1[%c1_17, %c2_18, %c0_19, %c0_20] : memref<3x3x4x2xf32, #tpu.memory_space<vmem>>, vector<1x1x4x2xf32>
    %11 = vector.shape_cast %10 : vector<1x1x4x2xf32> to vector<4x2xf32>
    %c2_21 = arith.constant 2 : index
    %c0_22 = arith.constant 0 : index
    %c0_23 = arith.constant 0 : index
    %c0_24 = arith.constant 0 : index
    %12 = vector.load %arg1[%c2_21, %c0_22, %c0_23, %c0_24] : memref<3x3x4x2xf32, #tpu.memory_space<vmem>>, vector<1x1x4x2xf32>
    %13 = vector.shape_cast %12 : vector<1x1x4x2xf32> to vector<4x2xf32>
    %c2_25 = arith.constant 2 : index
    %c1_26 = arith.constant 1 : index
    %c0_27 = arith.constant 0 : index
    %c0_28 = arith.constant 0 : index
    %14 = vector.load %arg1[%c2_25, %c1_26, %c0_27, %c0_28] : memref<3x3x4x2xf32, #tpu.memory_space<vmem>>, vector<1x1x4x2xf32>
    %15 = vector.shape_cast %14 : vector<1x1x4x2xf32> to vector<4x2xf32>
    %c2_29 = arith.constant 2 : index
    %c2_30 = arith.constant 2 : index
    %c0_31 = arith.constant 0 : index
    %c0_32 = arith.constant 0 : index
    %16 = vector.load %arg1[%c2_29, %c2_30, %c0_31, %c0_32] : memref<3x3x4x2xf32, #tpu.memory_space<vmem>>, vector<1x1x4x2xf32>
    %17 = vector.shape_cast %16 : vector<1x1x4x2xf32> to vector<4x2xf32>
    %c0_33 = arith.constant 0 : index
    %c0_34 = arith.constant 0 : index
    %18 = vector.load %arg2[%c0_33, %c0_34] : memref<4x1xf32, #tpu.memory_space<vmem>>, vector<4x1xf32>
    %c0_i32 = arith.constant 0 : i32
    %c7_i32 = arith.constant 7 : i32
    %19 = arith.addi %c0_i32, %c7_i32 : i32
    %c1_i32 = arith.constant 1 : i32
    scf.for %arg7 = %c0_i32 to %19 step %c1_i32  : i32 {
      %cst = arith.constant 0.000000e+00 : f32
      %20 = vector.broadcast %cst : f32 to vector<4x7xf32>
      %c2_i32 = arith.constant 2 : i32
      %21 = arith.muli %c2_i32, %arg7 : i32
      %c0_i32_36 = arith.constant 0 : i32
      %22 = arith.addi %21, %c0_i32_36 : i32
      %c0_37 = arith.constant 0 : index
      %23 = arith.index_cast %22 : i32 to index
      %c0_38 = arith.constant 0 : index
      %c0_39 = arith.constant 0 : index
      %24 = vector.load %arg3[%c0_37, %23, %c0_38, %c0_39] : memref<1x15x2x7xf32, #tpu.memory_space<vmem>>, vector<1x1x2x7xf32>
      %25 = vector.shape_cast %24 : vector<1x1x2x7xf32> to vector<2x7xf32>
      %cst_40 = arith.constant dense<0.000000e+00> : vector<4x7xf32>
      %26 = tpu.matmul %1, %25, %cst_40 {dimension_numbers = #tpu.dot_dimension_numbers<[1], [0], [0], [1], [0, 0, 1, 1], [], []>} : vector<4x2xf32>, vector<2x7xf32>, vector<4x7xf32> -> vector<4x7xf32>
      %27 = arith.addf %20, %26 : vector<4x7xf32>
      %c0_41 = arith.constant 0 : index
      %28 = arith.index_cast %22 : i32 to index
      %c0_42 = arith.constant 0 : index
      %c0_43 = arith.constant 0 : index
      %29 = vector.load %arg4[%c0_41, %28, %c0_42, %c0_43] : memref<1x15x2x7xf32, #tpu.memory_space<vmem>>, vector<1x1x2x7xf32>
      %30 = vector.shape_cast %29 : vector<1x1x2x7xf32> to vector<2x7xf32>
      %cst_44 = arith.constant dense<0.000000e+00> : vector<4x7xf32>
      %31 = tpu.matmul %3, %30, %cst_44 {dimension_numbers = #tpu.dot_dimension_numbers<[1], [0], [0], [1], [0, 0, 1, 1], [], []>} : vector<4x2xf32>, vector<2x7xf32>, vector<4x7xf32> -> vector<4x7xf32>
      %32 = arith.addf %27, %31 : vector<4x7xf32>
      %c0_45 = arith.constant 0 : index
      %33 = arith.index_cast %22 : i32 to index
      %c0_46 = arith.constant 0 : index
      %c0_47 = arith.constant 0 : index
      %34 = vector.load %arg5[%c0_45, %33, %c0_46, %c0_47] : memref<1x15x2x7xf32, #tpu.memory_space<vmem>>, vector<1x1x2x7xf32>
      %35 = vector.shape_cast %34 : vector<1x1x2x7xf32> to vector<2x7xf32>
      %cst_48 = arith.constant dense<0.000000e+00> : vector<4x7xf32>
      %36 = tpu.matmul %5, %35, %cst_48 {dimension_numbers = #tpu.dot_dimension_numbers<[1], [0], [0], [1], [0, 0, 1, 1], [], []>} : vector<4x2xf32>, vector<2x7xf32>, vector<4x7xf32> -> vector<4x7xf32>
      %37 = arith.addf %32, %36 : vector<4x7xf32>
      %c2_i32_49 = arith.constant 2 : i32
      %38 = arith.muli %c2_i32_49, %arg7 : i32
      %c1_i32_50 = arith.constant 1 : i32
      %39 = arith.addi %38, %c1_i32_50 : i32
      %c0_51 = arith.constant 0 : index
      %40 = arith.index_cast %39 : i32 to index
      %c0_52 = arith.constant 0 : index
      %c0_53 = arith.constant 0 : index
      %41 = vector.load %arg3[%c0_51, %40, %c0_52, %c0_53] : memref<1x15x2x7xf32, #tpu.memory_space<vmem>>, vector<1x1x2x7xf32>
      %42 = vector.shape_cast %41 : vector<1x1x2x7xf32> to vector<2x7xf32>
      %cst_54 = arith.constant dense<0.000000e+00> : vector<4x7xf32>
      %43 = tpu.matmul %7, %42, %cst_54 {dimension_numbers = #tpu.dot_dimension_numbers<[1], [0], [0], [1], [0, 0, 1, 1], [], []>} : vector<4x2xf32>, vector<2x7xf32>, vector<4x7xf32> -> vector<4x7xf32>
      %44 = arith.addf %37, %43 : vector<4x7xf32>
      %c0_55 = arith.constant 0 : index
      %45 = arith.index_cast %39 : i32 to index
      %c0_56 = arith.constant 0 : index
      %c0_57 = arith.constant 0 : index
      %46 = vector.load %arg4[%c0_55, %45, %c0_56, %c0_57] : memref<1x15x2x7xf32, #tpu.memory_space<vmem>>, vector<1x1x2x7xf32>
      %47 = vector.shape_cast %46 : vector<1x1x2x7xf32> to vector<2x7xf32>
      %cst_58 = arith.constant dense<0.000000e+00> : vector<4x7xf32>
      %48 = tpu.matmul %9, %47, %cst_58 {dimension_numbers = #tpu.dot_dimension_numbers<[1], [0], [0], [1], [0, 0, 1, 1], [], []>} : vector<4x2xf32>, vector<2x7xf32>, vector<4x7xf32> -> vector<4x7xf32>
      %49 = arith.addf %44, %48 : vector<4x7xf32>
      %c0_59 = arith.constant 0 : index
      %50 = arith.index_cast %39 : i32 to index
      %c0_60 = arith.constant 0 : index
      %c0_61 = arith.constant 0 : index
      %51 = vector.load %arg5[%c0_59, %50, %c0_60, %c0_61] : memref<1x15x2x7xf32, #tpu.memory_space<vmem>>, vector<1x1x2x7xf32>
      %52 = vector.shape_cast %51 : vector<1x1x2x7xf32> to vector<2x7xf32>
      %cst_62 = arith.constant dense<0.000000e+00> : vector<4x7xf32>
      %53 = tpu.matmul %11, %52, %cst_62 {dimension_numbers = #tpu.dot_dimension_numbers<[1], [0], [0], [1], [0, 0, 1, 1], [], []>} : vector<4x2xf32>, vector<2x7xf32>, vector<4x7xf32> -> vector<4x7xf32>
      %54 = arith.addf %49, %53 : vector<4x7xf32>
      %c2_i32_63 = arith.constant 2 : i32
      %55 = arith.muli %c2_i32_63, %arg7 : i32
      %c2_i32_64 = arith.constant 2 : i32
      %56 = arith.addi %55, %c2_i32_64 : i32
      %c0_65 = arith.constant 0 : index
      %57 = arith.index_cast %56 : i32 to index
      %c0_66 = arith.constant 0 : index
      %c0_67 = arith.constant 0 : index
      %58 = vector.load %arg3[%c0_65, %57, %c0_66, %c0_67] : memref<1x15x2x7xf32, #tpu.memory_space<vmem>>, vector<1x1x2x7xf32>
      %59 = vector.shape_cast %58 : vector<1x1x2x7xf32> to vector<2x7xf32>
      %cst_68 = arith.constant dense<0.000000e+00> : vector<4x7xf32>
      %60 = tpu.matmul %13, %59, %cst_68 {dimension_numbers = #tpu.dot_dimension_numbers<[1], [0], [0], [1], [0, 0, 1, 1], [], []>} : vector<4x2xf32>, vector<2x7xf32>, vector<4x7xf32> -> vector<4x7xf32>
      %61 = arith.addf %54, %60 : vector<4x7xf32>
      %c0_69 = arith.constant 0 : index
      %62 = arith.index_cast %56 : i32 to index
      %c0_70 = arith.constant 0 : index
      %c0_71 = arith.constant 0 : index
      %63 = vector.load %arg4[%c0_69, %62, %c0_70, %c0_71] : memref<1x15x2x7xf32, #tpu.memory_space<vmem>>, vector<1x1x2x7xf32>
      %64 = vector.shape_cast %63 : vector<1x1x2x7xf32> to vector<2x7xf32>
      %cst_72 = arith.constant dense<0.000000e+00> : vector<4x7xf32>
      %65 = tpu.matmul %15, %64, %cst_72 {dimension_numbers = #tpu.dot_dimension_numbers<[1], [0], [0], [1], [0, 0, 1, 1], [], []>} : vector<4x2xf32>, vector<2x7xf32>, vector<4x7xf32> -> vector<4x7xf32>
      %66 = arith.addf %61, %65 : vector<4x7xf32>
      %c0_73 = arith.constant 0 : index
      %67 = arith.index_cast %56 : i32 to index
      %c0_74 = arith.constant 0 : index
      %c0_75 = arith.constant 0 : index
      %68 = vector.load %arg5[%c0_73, %67, %c0_74, %c0_75] : memref<1x15x2x7xf32, #tpu.memory_space<vmem>>, vector<1x1x2x7xf32>
      %69 = vector.shape_cast %68 : vector<1x1x2x7xf32> to vector<2x7xf32>
      %cst_76 = arith.constant dense<0.000000e+00> : vector<4x7xf32>
      %70 = tpu.matmul %17, %69, %cst_76 {dimension_numbers = #tpu.dot_dimension_numbers<[1], [0], [0], [1], [0, 0, 1, 1], [], []>} : vector<4x2xf32>, vector<2x7xf32>, vector<4x7xf32> -> vector<4x7xf32>
      %71 = arith.addf %66, %70 : vector<4x7xf32>
      %72 = vector.broadcast %18 : vector<4x1xf32> to vector<4x7xf32>
      %73 = arith.addf %71, %72 : vector<4x7xf32>
      %cst_77 = arith.constant 0.000000e+00 : f32
      %74 = vector.broadcast %cst_77 : f32 to vector<4x7xf32>
      %75 = arith.cmpf oge, %73, %74 : vector<4x7xf32>
      %cst_78 = arith.constant 2.000000e-01 : f32
      %76 = vector.broadcast %cst_78 : f32 to vector<4x7xf32>
      %77 = arith.mulf %76, %73 : vector<4x7xf32>
      %78 = arith.select %75, %73, %77 : vector<4x7xi1>, vector<4x7xf32>
      %c0_79 = arith.constant 0 : index
      %79 = arith.index_cast %arg7 : i32 to index
      %c0_80 = arith.constant 0 : index
      %c0_81 = arith.constant 0 : index
      %80 = vector.load %arg6[%c0_79, %79, %c0_80, %c0_81] : memref<1x7x4x7xf32, #tpu.memory_space<vmem>>, vector<1x1x4x7xf32>
      %81 = vector.shape_cast %80 : vector<1x1x4x7xf32> to vector<4x7xf32>
      %82 = vector.shape_cast %78 : vector<4x7xf32> to vector<1x1x4x7xf32>
      tpu.vector_store %arg6[%c0_79, %79, %c0_80, %c0_81], %82 {strides = array<i32>} : memref<1x7x4x7xf32, #tpu.memory_space<vmem>>, vector<1x1x4x7xf32>,
    }
    %c7_i32_35 = arith.constant 7 : i32
    return
  }
  func.func @transform_0(%arg0: i32) -> (i32, i32, i32, i32) {
    %c0_i32 = arith.constant 0 : i32
    %c0_i32_0 = arith.constant 0 : i32
    %c0_i32_1 = arith.constant 0 : i32
    %c0_i32_2 = arith.constant 0 : i32
    %c0_i32_3 = arith.constant 0 : i32
    return %c0_i32, %c0_i32_0, %c0_i32_1, %c0_i32_2 : i32, i32, i32, i32
  }
  func.func @transform_1(%arg0: i32) -> (i32, i32) {
    %c0_i32 = arith.constant 0 : i32
    %c0_i32_0 = arith.constant 0 : i32
    %c0_i32_1 = arith.constant 0 : i32
    return %c0_i32, %c0_i32_0 : i32, i32
  }
  func.func @transform_2(%arg0: i32) -> (i32, i32, i32, i32) {
    %c0_i32 = arith.constant 0 : i32
    %c0_i32_0 = arith.constant 0 : i32
    %c0_i32_1 = arith.constant 0 : i32
    %c0_i32_2 = arith.constant 0 : i32
    return %arg0, %c0_i32, %c0_i32_0, %c0_i32_1 : i32, i32, i32, i32
  }
  func.func @transform_3(%arg0: i32) -> (i32, i32, i32, i32) {
    %c0_i32 = arith.constant 0 : i32
    %c0_i32_0 = arith.constant 0 : i32
    %c0_i32_1 = arith.constant 0 : i32
    %c0_i32_2 = arith.constant 0 : i32
    return %arg0, %c0_i32, %c0_i32_0, %c0_i32_1 : i32, i32, i32, i32
  }
  func.func @transform_4(%arg0: i32) -> (i32, i32, i32, i32) {
    %c0_i32 = arith.constant 0 : i32
    %c0_i32_0 = arith.constant 0 : i32
    %c0_i32_1 = arith.constant 0 : i32
    %c0_i32_2 = arith.constant 0 : i32
    return %arg0, %c0_i32, %c0_i32_0, %c0_i32_1 : i32, i32, i32, i32
  }
  func.func @transform_5(%arg0: i32) -> (i32, i32, i32, i32) {
    %c0_i32 = arith.constant 0 : i32
    %c0_i32_0 = arith.constant 0 : i32
    %c0_i32_1 = arith.constant 0 : i32
    %c0_i32_2 = arith.constant 0 : i32
    return %arg0, %c0_i32, %c0_i32_0, %c0_i32_1 : i32, i32, i32, i32
  }
}

module attributes {stable_mosaic.version = 11 : i64} {
  func.func @_conv_kernel(%arg0: i32, %arg1: memref<3x3x8x4xf32, #tpu.memory_space<vmem>>, %arg2: memref<8x1xf32, #tpu.memory_space<vmem>>, %arg3: memref<1x7x4x3xf32, #tpu.memory_space<vmem>>, %arg4: memref<1x7x4x3xf32, #tpu.memory_space<vmem>>, %arg5: memref<1x7x4x3xf32, #tpu.memory_space<vmem>>, %arg6: memref<1x3x8x3xf32, #tpu.memory_space<vmem>>) attributes {dimension_semantics = [#tpu.dimension_semantics<parallel>], iteration_bounds = array<i64: 2>, scalar_prefetch = 0 : i64, scratch_operands = 0 : i64, tpu.core_type = #tpu.core_type<tc>, window_params = [{pipeline_mode = #tpu.pipeline_mode<synchronous>, transform_indices = @transform_0, window_bounds = array<i64: 3, 3, 8, 4>}, {pipeline_mode = #tpu.pipeline_mode<synchronous>, transform_indices = @transform_1, window_bounds = array<i64: 8, 1>}, {transform_indices = @transform_2, window_bounds = array<i64: 1, 7, 4, 3>}, {transform_indices = @transform_3, window_bounds = array<i64: 1, 7, 4, 3>}, {transform_indices = @transform_4, window_bounds = array<i64: 1, 7, 4, 3>}, {transform_indices = @transform_5, window_bounds = array<i64: 1, 3, 8, 3>}]} {
    %c0 = arith.constant 0 : index
    %c0_0 = arith.constant 0 : index
    %c0_1 = arith.constant 0 : index
    %c0_2 = arith.constant 0 : index
    %0 = vector.load %arg1[%c0, %c0_0, %c0_1, %c0_2] : memref<3x3x8x4xf32, #tpu.memory_space<vmem>>, vector<1x1x8x4xf32>
    %1 = vector.shape_cast %0 : vector<1x1x8x4xf32> to vector<8x4xf32>
    %c0_3 = arith.constant 0 : index
    %c1 = arith.constant 1 : index
    %c0_4 = arith.constant 0 : index
    %c0_5 = arith.constant 0 : index
    %2 = vector.load %arg1[%c0_3, %c1, %c0_4, %c0_5] : memref<3x3x8x4xf32, #tpu.memory_space<vmem>>, vector<1x1x8x4xf32>
    %3 = vector.shape_cast %2 : vector<1x1x8x4xf32> to vector<8x4xf32>
    %c0_6 = arith.constant 0 : index
    %c2 = arith.constant 2 : index
    %c0_7 = arith.constant 0 : index
    %c0_8 = arith.constant 0 : index
    %4 = vector.load %arg1[%c0_6, %c2, %c0_7, %c0_8] : memref<3x3x8x4xf32, #tpu.memory_space<vmem>>, vector<1x1x8x4xf32>
    %5 = vector.shape_cast %4 : vector<1x1x8x4xf32> to vector<8x4xf32>
    %c1_9 = arith.constant 1 : index
    %c0_10 = arith.constant 0 : index
    %c0_11 = arith.constant 0 : index
    %c0_12 = arith.constant 0 : index
    %6 = vector.load %arg1[%c1_9, %c0_10, %c0_11, %c0_12] : memref<3x3x8x4xf32, #tpu.memory_space<vmem>>, vector<1x1x8x4xf32>
    %7 = vector.shape_cast %6 : vector<1x1x8x4xf32> to vector<8x4xf32>
    %c1_13 = arith.constant 1 : index
    %c1_14 = arith.constant 1 : index
    %c0_15 = arith.constant 0 : index
    %c0_16 = arith.constant 0 : index
    %8 = vector.load %arg1[%c1_13, %c1_14, %c0_15, %c0_16] : memref<3x3x8x4xf32, #tpu.memory_space<vmem>>, vector<1x1x8x4xf32>
    %9 = vector.shape_cast %8 : vector<1x1x8x4xf32> to vector<8x4xf32>
    %c1_17 = arith.constant 1 : index
    %c2_18 = arith.constant 2 : index
    %c0_19 = arith.constant 0 : index
    %c0_20 = arith.constant 0 : index
    %10 = vector.load %arg1[%c1_17, %c2_18, %c0_19, %c0_20] : memref<3x3x8x4xf32, #tpu.memory_space<vmem>>, vector<1x1x8x4xf32>
    %11 = vector.shape_cast %10 : vector<1x1x8x4xf32> to vector<8x4xf32>
    %c2_21 = arith.constant 2 : index
    %c0_22 = arith.constant 0 : index
    %c0_23 = arith.constant 0 : index
    %c0_24 = arith.constant 0 : index
    %12 = vector.load %arg1[%c2_21, %c0_22, %c0_23, %c0_24] : memref<3x3x8x4xf32, #tpu.memory_space<vmem>>, vector<1x1x8x4xf32>
    %13 = vector.shape_cast %12 : vector<1x1x8x4xf32> to vector<8x4xf32>
    %c2_25 = arith.constant 2 : index
    %c1_26 = arith.constant 1 : index
    %c0_27 = arith.constant 0 : index
    %c0_28 = arith.constant 0 : index
    %14 = vector.load %arg1[%c2_25, %c1_26, %c0_27, %c0_28] : memref<3x3x8x4xf32, #tpu.memory_space<vmem>>, vector<1x1x8x4xf32>
    %15 = vector.shape_cast %14 : vector<1x1x8x4xf32> to vector<8x4xf32>
    %c2_29 = arith.constant 2 : index
    %c2_30 = arith.constant 2 : index
    %c0_31 = arith.constant 0 : index
    %c0_32 = arith.constant 0 : index
    %16 = vector.load %arg1[%c2_29, %c2_30, %c0_31, %c0_32] : memref<3x3x8x4xf32, #tpu.memory_space<vmem>>, vector<1x1x8x4xf32>
    %17 = vector.shape_cast %16 : vector<1x1x8x4xf32> to vector<8x4xf32>
    %c0_33 = arith.constant 0 : index
    %c0_34 = arith.constant 0 : index
    %18 = vector.load %arg2[%c0_33, %c0_34] : memref<8x1xf32, #tpu.memory_space<vmem>>, vector<8x1xf32>
    %c0_i32 = arith.constant 0 : i32
    %c3_i32 = arith.constant 3 : i32
    %19 = arith.addi %c0_i32, %c3_i32 : i32
    %c1_i32 = arith.constant 1 : i32
    scf.for %arg7 = %c0_i32 to %19 step %c1_i32  : i32 {
      %cst = arith.constant 0.000000e+00 : f32
      %20 = vector.broadcast %cst : f32 to vector<8x3xf32>
      %c2_i32 = arith.constant 2 : i32
      %21 = arith.muli %c2_i32, %arg7 : i32
      %c0_i32_36 = arith.constant 0 : i32
      %22 = arith.addi %21, %c0_i32_36 : i32
      %c0_37 = arith.constant 0 : index
      %23 = arith.index_cast %22 : i32 to index
      %c0_38 = arith.constant 0 : index
      %c0_39 = arith.constant 0 : index
      %24 = vector.load %arg3[%c0_37, %23, %c0_38, %c0_39] : memref<1x7x4x3xf32, #tpu.memory_space<vmem>>, vector<1x1x4x3xf32>
      %25 = vector.shape_cast %24 : vector<1x1x4x3xf32> to vector<4x3xf32>
      %cst_40 = arith.constant dense<0.000000e+00> : vector<8x3xf32>
      %26 = tpu.matmul %1, %25, %cst_40 {dimension_numbers = #tpu.dot_dimension_numbers<[1], [0], [0], [1], [0, 0, 1, 1], [], []>} : vector<8x4xf32>, vector<4x3xf32>, vector<8x3xf32> -> vector<8x3xf32>
      %27 = arith.addf %20, %26 : vector<8x3xf32>
      %c0_41 = arith.constant 0 : index
      %28 = arith.index_cast %22 : i32 to index
      %c0_42 = arith.constant 0 : index
      %c0_43 = arith.constant 0 : index
      %29 = vector.load %arg4[%c0_41, %28, %c0_42, %c0_43] : memref<1x7x4x3xf32, #tpu.memory_space<vmem>>, vector<1x1x4x3xf32>
      %30 = vector.shape_cast %29 : vector<1x1x4x3xf32> to vector<4x3xf32>
      %cst_44 = arith.constant dense<0.000000e+00> : vector<8x3xf32>
      %31 = tpu.matmul %3, %30, %cst_44 {dimension_numbers = #tpu.dot_dimension_numbers<[1], [0], [0], [1], [0, 0, 1, 1], [], []>} : vector<8x4xf32>, vector<4x3xf32>, vector<8x3xf32> -> vector<8x3xf32>
      %32 = arith.addf %27, %31 : vector<8x3xf32>
      %c0_45 = arith.constant 0 : index
      %33 = arith.index_cast %22 : i32 to index
      %c0_46 = arith.constant 0 : index
      %c0_47 = arith.constant 0 : index
      %34 = vector.load %arg5[%c0_45, %33, %c0_46, %c0_47] : memref<1x7x4x3xf32, #tpu.memory_space<vmem>>, vector<1x1x4x3xf32>
      %35 = vector.shape_cast %34 : vector<1x1x4x3xf32> to vector<4x3xf32>
      %cst_48 = arith.constant dense<0.000000e+00> : vector<8x3xf32>
      %36 = tpu.matmul %5, %35, %cst_48 {dimension_numbers = #tpu.dot_dimension_numbers<[1], [0], [0], [1], [0, 0, 1, 1], [], []>} : vector<8x4xf32>, vector<4x3xf32>, vector<8x3xf32> -> vector<8x3xf32>
      %37 = arith.addf %32, %36 : vector<8x3xf32>
      %c2_i32_49 = arith.constant 2 : i32
      %38 = arith.muli %c2_i32_49, %arg7 : i32
      %c1_i32_50 = arith.constant 1 : i32
      %39 = arith.addi %38, %c1_i32_50 : i32
      %c0_51 = arith.constant 0 : index
      %40 = arith.index_cast %39 : i32 to index
      %c0_52 = arith.constant 0 : index
      %c0_53 = arith.constant 0 : index
      %41 = vector.load %arg3[%c0_51, %40, %c0_52, %c0_53] : memref<1x7x4x3xf32, #tpu.memory_space<vmem>>, vector<1x1x4x3xf32>
      %42 = vector.shape_cast %41 : vector<1x1x4x3xf32> to vector<4x3xf32>
      %cst_54 = arith.constant dense<0.000000e+00> : vector<8x3xf32>
      %43 = tpu.matmul %7, %42, %cst_54 {dimension_numbers = #tpu.dot_dimension_numbers<[1], [0], [0], [1], [0, 0, 1, 1], [], []>} : vector<8x4xf32>, vector<4x3xf32>, vector<8x3xf32> -> vector<8x3xf32>
      %44 = arith.addf %37, %43 : vector<8x3xf32>
      %c0_55 = arith.constant 0 : index
      %45 = arith.index_cast %39 : i32 to index
      %c0_56 = arith.constant 0 : index
      %c0_57 = arith.constant 0 : index
      %46 = vector.load %arg4[%c0_55, %45, %c0_56, %c0_57] : memref<1x7x4x3xf32, #tpu.memory_space<vmem>>, vector<1x1x4x3xf32>
      %47 = vector.shape_cast %46 : vector<1x1x4x3xf32> to vector<4x3xf32>
      %cst_58 = arith.constant dense<0.000000e+00> : vector<8x3xf32>
      %48 = tpu.matmul %9, %47, %cst_58 {dimension_numbers = #tpu.dot_dimension_numbers<[1], [0], [0], [1], [0, 0, 1, 1], [], []>} : vector<8x4xf32>, vector<4x3xf32>, vector<8x3xf32> -> vector<8x3xf32>
      %49 = arith.addf %44, %48 : vector<8x3xf32>
      %c0_59 = arith.constant 0 : index
      %50 = arith.index_cast %39 : i32 to index
      %c0_60 = arith.constant 0 : index
      %c0_61 = arith.constant 0 : index
      %51 = vector.load %arg5[%c0_59, %50, %c0_60, %c0_61] : memref<1x7x4x3xf32, #tpu.memory_space<vmem>>, vector<1x1x4x3xf32>
      %52 = vector.shape_cast %51 : vector<1x1x4x3xf32> to vector<4x3xf32>
      %cst_62 = arith.constant dense<0.000000e+00> : vector<8x3xf32>
      %53 = tpu.matmul %11, %52, %cst_62 {dimension_numbers = #tpu.dot_dimension_numbers<[1], [0], [0], [1], [0, 0, 1, 1], [], []>} : vector<8x4xf32>, vector<4x3xf32>, vector<8x3xf32> -> vector<8x3xf32>
      %54 = arith.addf %49, %53 : vector<8x3xf32>
      %c2_i32_63 = arith.constant 2 : i32
      %55 = arith.muli %c2_i32_63, %arg7 : i32
      %c2_i32_64 = arith.constant 2 : i32
      %56 = arith.addi %55, %c2_i32_64 : i32
      %c0_65 = arith.constant 0 : index
      %57 = arith.index_cast %56 : i32 to index
      %c0_66 = arith.constant 0 : index
      %c0_67 = arith.constant 0 : index
      %58 = vector.load %arg3[%c0_65, %57, %c0_66, %c0_67] : memref<1x7x4x3xf32, #tpu.memory_space<vmem>>, vector<1x1x4x3xf32>
      %59 = vector.shape_cast %58 : vector<1x1x4x3xf32> to vector<4x3xf32>
      %cst_68 = arith.constant dense<0.000000e+00> : vector<8x3xf32>
      %60 = tpu.matmul %13, %59, %cst_68 {dimension_numbers = #tpu.dot_dimension_numbers<[1], [0], [0], [1], [0, 0, 1, 1], [], []>} : vector<8x4xf32>, vector<4x3xf32>, vector<8x3xf32> -> vector<8x3xf32>
      %61 = arith.addf %54, %60 : vector<8x3xf32>
      %c0_69 = arith.constant 0 : index
      %62 = arith.index_cast %56 : i32 to index
      %c0_70 = arith.constant 0 : index
      %c0_71 = arith.constant 0 : index
      %63 = vector.load %arg4[%c0_69, %62, %c0_70, %c0_71] : memref<1x7x4x3xf32, #tpu.memory_space<vmem>>, vector<1x1x4x3xf32>
      %64 = vector.shape_cast %63 : vector<1x1x4x3xf32> to vector<4x3xf32>
      %cst_72 = arith.constant dense<0.000000e+00> : vector<8x3xf32>
      %65 = tpu.matmul %15, %64, %cst_72 {dimension_numbers = #tpu.dot_dimension_numbers<[1], [0], [0], [1], [0, 0, 1, 1], [], []>} : vector<8x4xf32>, vector<4x3xf32>, vector<8x3xf32> -> vector<8x3xf32>
      %66 = arith.addf %61, %65 : vector<8x3xf32>
      %c0_73 = arith.constant 0 : index
      %67 = arith.index_cast %56 : i32 to index
      %c0_74 = arith.constant 0 : index
      %c0_75 = arith.constant 0 : index
      %68 = vector.load %arg5[%c0_73, %67, %c0_74, %c0_75] : memref<1x7x4x3xf32, #tpu.memory_space<vmem>>, vector<1x1x4x3xf32>
      %69 = vector.shape_cast %68 : vector<1x1x4x3xf32> to vector<4x3xf32>
      %cst_76 = arith.constant dense<0.000000e+00> : vector<8x3xf32>
      %70 = tpu.matmul %17, %69, %cst_76 {dimension_numbers = #tpu.dot_dimension_numbers<[1], [0], [0], [1], [0, 0, 1, 1], [], []>} : vector<8x4xf32>, vector<4x3xf32>, vector<8x3xf32> -> vector<8x3xf32>
      %71 = arith.addf %66, %70 : vector<8x3xf32>
      %72 = vector.broadcast %18 : vector<8x1xf32> to vector<8x3xf32>
      %73 = arith.addf %71, %72 : vector<8x3xf32>
      %cst_77 = arith.constant 0.000000e+00 : f32
      %74 = vector.broadcast %cst_77 : f32 to vector<8x3xf32>
      %75 = arith.cmpf oge, %73, %74 : vector<8x3xf32>
      %cst_78 = arith.constant 2.000000e-01 : f32
      %76 = vector.broadcast %cst_78 : f32 to vector<8x3xf32>
      %77 = arith.mulf %76, %73 : vector<8x3xf32>
      %78 = arith.select %75, %73, %77 : vector<8x3xi1>, vector<8x3xf32>
      %c0_79 = arith.constant 0 : index
      %79 = arith.index_cast %arg7 : i32 to index
      %c0_80 = arith.constant 0 : index
      %c0_81 = arith.constant 0 : index
      %80 = vector.load %arg6[%c0_79, %79, %c0_80, %c0_81] : memref<1x3x8x3xf32, #tpu.memory_space<vmem>>, vector<1x1x8x3xf32>
      %81 = vector.shape_cast %80 : vector<1x1x8x3xf32> to vector<8x3xf32>
      %82 = vector.shape_cast %78 : vector<8x3xf32> to vector<1x1x8x3xf32>
      tpu.vector_store %arg6[%c0_79, %79, %c0_80, %c0_81], %82 {strides = array<i32>} : memref<1x3x8x3xf32, #tpu.memory_space<vmem>>, vector<1x1x8x3xf32>,
    }
    %c3_i32_35 = arith.constant 3 : i32
    return
  }
  func.func @transform_0(%arg0: i32) -> (i32, i32, i32, i32) {
    %c0_i32 = arith.constant 0 : i32
    %c0_i32_0 = arith.constant 0 : i32
    %c0_i32_1 = arith.constant 0 : i32
    %c0_i32_2 = arith.constant 0 : i32
    %c0_i32_3 = arith.constant 0 : i32
    return %c0_i32, %c0_i32_0, %c0_i32_1, %c0_i32_2 : i32, i32, i32, i32
  }
  func.func @transform_1(%arg0: i32) -> (i32, i32) {
    %c0_i32 = arith.constant 0 : i32
    %c0_i32_0 = arith.constant 0 : i32
    %c0_i32_1 = arith.constant 0 : i32
    return %c0_i32, %c0_i32_0 : i32, i32
  }
  func.func @transform_2(%arg0: i32) -> (i32, i32, i32, i32) {
    %c0_i32 = arith.constant 0 : i32
    %c0_i32_0 = arith.constant 0 : i32
    %c0_i32_1 = arith.constant 0 : i32
    %c0_i32_2 = arith.constant 0 : i32
    return %arg0, %c0_i32, %c0_i32_0, %c0_i32_1 : i32, i32, i32, i32
  }
  func.func @transform_3(%arg0: i32) -> (i32, i32, i32, i32) {
    %c0_i32 = arith.constant 0 : i32
    %c0_i32_0 = arith.constant 0 : i32
    %c0_i32_1 = arith.constant 0 : i32
    %c0_i32_2 = arith.constant 0 : i32
    return %arg0, %c0_i32, %c0_i32_0, %c0_i32_1 : i32, i32, i32, i32
  }
  func.func @transform_4(%arg0: i32) -> (i32, i32, i32, i32) {
    %c0_i32 = arith.constant 0 : i32
    %c0_i32_0 = arith.constant 0 : i32
    %c0_i32_1 = arith.constant 0 : i32
    %c0_i32_2 = arith.constant 0 : i32
    return %arg0, %c0_i32, %c0_i32_0, %c0_i32_1 : i32, i32, i32, i32
  }
  func.func @transform_5(%arg0: i32) -> (i32, i32, i32, i32) {
    %c0_i32 = arith.constant 0 : i32
    %c0_i32_0 = arith.constant 0 : i32
    %c0_i32_1 = arith.constant 0 : i32
    %c0_i32_2 = arith.constant 0 : i32
    return %arg0, %c0_i32, %c0_i32_0, %c0_i32_1 : i32, i32, i32, i32
  }
}

module attributes {stable_mosaic.version = 11 : i64} {
  func.func @_fc_stack_kernel(%arg0: i32, %arg1: i32, %arg2: memref<2x72xf32, #tpu.memory_space<vmem>>, %arg3: memref<2x1xf32, #tpu.memory_space<vmem>>, %arg4: memref<72x32xf32, #tpu.memory_space<vmem>>, %arg5: memref<1x32xf32, #tpu.memory_space<vmem>>, %arg6: memref<1x32xf32, #tpu.memory_space<vmem>>, %arg7: memref<32x16xf32, #tpu.memory_space<vmem>>, %arg8: memref<1x16xf32, #tpu.memory_space<vmem>>, %arg9: memref<16x1xf32, #tpu.memory_space<vmem>>, %arg10: memref<1x1xf32, #tpu.memory_space<vmem>>, %arg11: memref<2x1xf32, #tpu.memory_space<vmem>>, %arg12: memref<2x32xf32, #tpu.memory_space<vmem>>) attributes {dimension_semantics = [#tpu.dimension_semantics<parallel>, #tpu.dimension_semantics<arbitrary>], iteration_bounds = array<i64: 1, 1>, scalar_prefetch = 0 : i64, scratch_operands = 1 : i64, tpu.core_type = #tpu.core_type<tc>, window_params = [{transform_indices = @transform_0, window_bounds = array<i64: 2, 72>}, {transform_indices = @transform_1, window_bounds = array<i64: 2, 1>}, {transform_indices = @transform_2, window_bounds = array<i64: 72, 32>}, {pipeline_mode = #tpu.pipeline_mode<synchronous>, transform_indices = @transform_3, window_bounds = array<i64: 1, 32>}, {pipeline_mode = #tpu.pipeline_mode<synchronous>, transform_indices = @transform_4, window_bounds = array<i64: 1, 32>}, {pipeline_mode = #tpu.pipeline_mode<synchronous>, transform_indices = @transform_5, window_bounds = array<i64: 32, 16>}, {pipeline_mode = #tpu.pipeline_mode<synchronous>, transform_indices = @transform_6, window_bounds = array<i64: 1, 16>}, {pipeline_mode = #tpu.pipeline_mode<synchronous>, transform_indices = @transform_7, window_bounds = array<i64: 16, 1>}, {pipeline_mode = #tpu.pipeline_mode<synchronous>, transform_indices = @transform_8, window_bounds = array<i64: 1, 1>}, {transform_indices = @transform_9, window_bounds = array<i64: 2, 1>}]} {
    %c0_i32 = arith.constant 0 : i32
    %0 = arith.cmpi eq, %arg1, %c0_i32 : i32
    %1 = arith.extui %0 : i1 to i32
    %c0_i32_0 = arith.constant 0 : i32
    %2 = arith.cmpi ne, %1, %c0_i32_0 : i32
    scf.if %2 {
      %cst_10 = arith.constant 0.000000e+00 : f32
      %12 = vector.broadcast %cst_10 : f32 to vector<2x32xf32>
      %c0_11 = arith.constant 0 : index
      %c0_12 = arith.constant 0 : index
      %13 = vector.load %arg12[%c0_11, %c0_12] : memref<2x32xf32, #tpu.memory_space<vmem>>, vector<2x32xf32>
      tpu.vector_store %arg12[%c0_11, %c0_12], %12 {strides = array<i32>} : memref<2x32xf32, #tpu.memory_space<vmem>>, vector<2x32xf32>,
    } else {
    }
    %c0 = arith.constant 0 : index
    %c0_1 = arith.constant 0 : index
    %3 = vector.load %arg12[%c0, %c0_1] : memref<2x32xf32, #tpu.memory_space<vmem>>, vector<2x32xf32>
    %c0_2 = arith.constant 0 : index
    %c0_3 = arith.constant 0 : index
    %4 = vector.load %arg2[%c0_2, %c0_3] : memref<2x72xf32, #tpu.memory_space<vmem>>, vector<2x72xf32>
    %c0_4 = arith.constant 0 : index
    %c0_5 = arith.constant 0 : index
    %5 = vector.load %arg4[%c0_4, %c0_5] : memref<72x32xf32, #tpu.memory_space<vmem>>, vector<72x32xf32>
    %cst = arith.constant dense<0.000000e+00> : vector<2x32xf32>
    %6 = tpu.matmul %4, %5, %cst {dimension_numbers = #tpu.dot_dimension_numbers<[1], [0], [0], [1], [0, 0, 1, 1], [], []>} : vector<2x72xf32>, vector<72x32xf32>, vector<2x32xf32> -> vector<2x32xf32>
    %7 = arith.addf %3, %6 : vector<2x32xf32>
    %c0_6 = arith.constant 0 : index
    %c0_7 = arith.constant 0 : index
    %8 = vector.load %arg12[%c0_6, %c0_7] : memref<2x32xf32, #tpu.memory_space<vmem>>, vector<2x32xf32>
    tpu.vector_store %arg12[%c0_6, %c0_7], %7 {strides = array<i32>} : memref<2x32xf32, #tpu.memory_space<vmem>>, vector<2x32xf32>,
    %c0_i32_8 = arith.constant 0 : i32
    %9 = arith.cmpi eq, %arg1, %c0_i32_8 : i32
    %10 = arith.extui %9 : i1 to i32
    %c0_i32_9 = arith.constant 0 : i32
    %11 = arith.cmpi ne, %10, %c0_i32_9 : i32
    scf.if %11 {
      %c0_10 = arith.constant 0 : index
      %c0_11 = arith.constant 0 : index
      %12 = vector.load %arg12[%c0_10, %c0_11] : memref<2x32xf32, #tpu.memory_space<vmem>>, vector<2x32xf32>
      %c0_12 = arith.constant 0 : index
      %c0_13 = arith.constant 0 : index
      %13 = vector.load %arg3[%c0_12, %c0_13] : memref<2x1xf32, #tpu.memory_space<vmem>>, vector<2x1xf32>
      %c0_14 = arith.constant 0 : index
      %c0_15 = arith.constant 0 : index
      %14 = vector.load %arg5[%c0_14, %c0_15] : memref<1x32xf32, #tpu.memory_space<vmem>>, vector<1x32xf32>
      %15 = vector.broadcast %13 : vector<2x1xf32> to vector<2x32xf32>
      %16 = vector.broadcast %14 : vector<1x32xf32> to vector<2x32xf32>
      %17 = arith.mulf %15, %16 : vector<2x32xf32>
      %18 = arith.addf %12, %17 : vector<2x32xf32>
      %c0_16 = arith.constant 0 : index
      %c0_17 = arith.constant 0 : index
      %19 = vector.load %arg6[%c0_16, %c0_17] : memref<1x32xf32, #tpu.memory_space<vmem>>, vector<1x32xf32>
      %20 = vector.broadcast %19 : vector<1x32xf32> to vector<2x32xf32>
      %21 = arith.addf %18, %20 : vector<2x32xf32>
      %cst_18 = arith.constant 0.000000e+00 : f32
      %22 = vector.broadcast %cst_18 : f32 to vector<2x32xf32>
      %23 = arith.cmpf oge, %21, %22 : vector<2x32xf32>
      %cst_19 = arith.constant 2.000000e-01 : f32
      %24 = vector.broadcast %cst_19 : f32 to vector<2x32xf32>
      %25 = arith.mulf %24, %21 : vector<2x32xf32>
      %26 = arith.select %23, %21, %25 : vector<2x32xi1>, vector<2x32xf32>
      %c0_20 = arith.constant 0 : index
      %c0_21 = arith.constant 0 : index
      %27 = vector.load %arg7[%c0_20, %c0_21] : memref<32x16xf32, #tpu.memory_space<vmem>>, vector<32x16xf32>
      %cst_22 = arith.constant dense<0.000000e+00> : vector<2x16xf32>
      %28 = tpu.matmul %26, %27, %cst_22 {dimension_numbers = #tpu.dot_dimension_numbers<[1], [0], [0], [1], [0, 0, 1, 1], [], []>} : vector<2x32xf32>, vector<32x16xf32>, vector<2x16xf32> -> vector<2x16xf32>
      %c0_23 = arith.constant 0 : index
      %c0_24 = arith.constant 0 : index
      %29 = vector.load %arg8[%c0_23, %c0_24] : memref<1x16xf32, #tpu.memory_space<vmem>>, vector<1x16xf32>
      %30 = vector.broadcast %29 : vector<1x16xf32> to vector<2x16xf32>
      %31 = arith.addf %28, %30 : vector<2x16xf32>
      %cst_25 = arith.constant 0.000000e+00 : f32
      %32 = vector.broadcast %cst_25 : f32 to vector<2x16xf32>
      %33 = arith.cmpf oge, %31, %32 : vector<2x16xf32>
      %cst_26 = arith.constant 2.000000e-01 : f32
      %34 = vector.broadcast %cst_26 : f32 to vector<2x16xf32>
      %35 = arith.mulf %34, %31 : vector<2x16xf32>
      %36 = arith.select %33, %31, %35 : vector<2x16xi1>, vector<2x16xf32>
      %c0_27 = arith.constant 0 : index
      %c0_28 = arith.constant 0 : index
      %37 = vector.load %arg9[%c0_27, %c0_28] : memref<16x1xf32, #tpu.memory_space<vmem>>, vector<16x1xf32>
      %cst_29 = arith.constant dense<0.000000e+00> : vector<2x1xf32>
      %38 = tpu.matmul %36, %37, %cst_29 {dimension_numbers = #tpu.dot_dimension_numbers<[1], [0], [0], [1], [0, 0, 1, 1], [], []>} : vector<2x16xf32>, vector<16x1xf32>, vector<2x1xf32> -> vector<2x1xf32>
      %c0_30 = arith.constant 0 : index
      %c0_31 = arith.constant 0 : index
      %39 = vector.load %arg10[%c0_30, %c0_31] : memref<1x1xf32, #tpu.memory_space<vmem>>, vector<1x1xf32>
      %40 = vector.broadcast %39 : vector<1x1xf32> to vector<2x1xf32>
      %41 = arith.addf %38, %40 : vector<2x1xf32>
      %c0_32 = arith.constant 0 : index
      %c0_33 = arith.constant 0 : index
      %42 = vector.load %arg11[%c0_32, %c0_33] : memref<2x1xf32, #tpu.memory_space<vmem>>, vector<2x1xf32>
      tpu.vector_store %arg11[%c0_32, %c0_33], %41 {strides = array<i32>} : memref<2x1xf32, #tpu.memory_space<vmem>>, vector<2x1xf32>,
    } else {
    }
    return
  }
  func.func @transform_0(%arg0: i32, %arg1: i32) -> (i32, i32) {
    %c0_i32 = arith.constant 0 : i32
    return %arg0, %arg1 : i32, i32
  }
  func.func @transform_1(%arg0: i32, %arg1: i32) -> (i32, i32) {
    %c0_i32 = arith.constant 0 : i32
    %c0_i32_0 = arith.constant 0 : i32
    return %arg0, %c0_i32 : i32, i32
  }
  func.func @transform_2(%arg0: i32, %arg1: i32) -> (i32, i32) {
    %c0_i32 = arith.constant 0 : i32
    %c0_i32_0 = arith.constant 0 : i32
    return %arg1, %c0_i32 : i32, i32
  }
  func.func @transform_3(%arg0: i32, %arg1: i32) -> (i32, i32) {
    %c0_i32 = arith.constant 0 : i32
    %c0_i32_0 = arith.constant 0 : i32
    %c0_i32_1 = arith.constant 0 : i32
    return %c0_i32, %c0_i32_0 : i32, i32
  }
  func.func @transform_4(%arg0: i32, %arg1: i32) -> (i32, i32) {
    %c0_i32 = arith.constant 0 : i32
    %c0_i32_0 = arith.constant 0 : i32
    %c0_i32_1 = arith.constant 0 : i32
    return %c0_i32, %c0_i32_0 : i32, i32
  }
  func.func @transform_5(%arg0: i32, %arg1: i32) -> (i32, i32) {
    %c0_i32 = arith.constant 0 : i32
    %c0_i32_0 = arith.constant 0 : i32
    %c0_i32_1 = arith.constant 0 : i32
    return %c0_i32, %c0_i32_0 : i32, i32
  }
  func.func @transform_6(%arg0: i32, %arg1: i32) -> (i32, i32) {
    %c0_i32 = arith.constant 0 : i32
    %c0_i32_0 = arith.constant 0 : i32
    %c0_i32_1 = arith.constant 0 : i32
    return %c0_i32, %c0_i32_0 : i32, i32
  }
  func.func @transform_7(%arg0: i32, %arg1: i32) -> (i32, i32) {
    %c0_i32 = arith.constant 0 : i32
    %c0_i32_0 = arith.constant 0 : i32
    %c0_i32_1 = arith.constant 0 : i32
    return %c0_i32, %c0_i32_0 : i32, i32
  }
  func.func @transform_8(%arg0: i32, %arg1: i32) -> (i32, i32) {
    %c0_i32 = arith.constant 0 : i32
    %c0_i32_0 = arith.constant 0 : i32
    %c0_i32_1 = arith.constant 0 : i32
    return %c0_i32, %c0_i32_0 : i32, i32
  }
  func.func @transform_9(%arg0: i32, %arg1: i32) -> (i32, i32) {
    %c0_i32 = arith.constant 0 : i32
    %c0_i32_0 = arith.constant 0 : i32
    return %arg0, %c0_i32 : i32, i32
  }
}

</mosaic_0001>

<llo_original>
// kernel: a_call__.5
$region0: #{a_call__.5}
  #allocation0 [shape = 'u32[]', space=smem, size = 0x4, offset = 0x4, fixed_abs, tag = 'smem constant byte address 0x4 - core index']
  #allocation1 [shape = 'u32[144,128]{1,0:T(1,128)}', space=vmem, size = 0x12000, scoped, tag = 'internal scratch']
  #allocation2 [shape = 'f32[2,32]{1,0:T(2,128)}', space=vmem, size = 0x400, scoped, tag = 'scratch operand']
  #allocation3 [shape = 'f32[1,1]{1,0:T(1,128)S(1)}', space=vmem, size = 0x200, scoped, tag = 'scoped memory for a_call__.5']
  %s0 = inlined_call_operand.vmem [shape: f32[2,72], index: 0, kind: input, shape index: {}]
  %s1 = inlined_call_operand.vmem [shape: f32[2,1], index: 1, kind: input, shape index: {}]
  %s2 = inlined_call_operand.vmem [shape: f32[72,32], index: 2, kind: input, shape index: {}]
  %s3 = inlined_call_operand.vmem [shape: f32[1,32], index: 3, kind: input, shape index: {}]
  %s4 = inlined_call_operand.vmem [shape: f32[1,32], index: 4, kind: input, shape index: {}]
  %s5 = inlined_call_operand.vmem [shape: f32[32,16], index: 5, kind: input, shape index: {}]
  %s6 = inlined_call_operand.vmem [shape: f32[1,16], index: 6, kind: input, shape index: {}]
  %s7 = inlined_call_operand.vmem [shape: f32[16,1], index: 7, kind: input, shape index: {}]
  %s8 = inlined_call_operand.<no memory space> [shape: f32[1,1], index: 8, kind: input, shape index: {}]
  %s9 = inlined_call_operand.vmem [shape: f32[2,1], index: 9, kind: output, shape index: {}]
  %s10 = sld [smem:[#allocation0]]
  $region54: #{a_call__.5} parent=0
    _
  %s12 = ssub.s32 1, %s10
  %s13 = scalar_select 0, %s12, %s10
  %v14 = vstv %s8
  %15 = vst [vmem:[#allocation3] sm:$0x1] %v14
  // Predicated region
  $region2: #{a_call__.5} parent=0 // pred_check
    _
  $region3: #{a_call__.5} parent=0 // pred_check_branch
    %17 = sbr.rel (0) target = $region5
  $region4: #{a_call__.5} parent=0 // pred_region
    _
  $region5: #{a_call__.5} parent=0 // pred_fallthru
    _
  // Predicated region
  $region6: #{a_call__.5} parent=0 // pred_check
    _
  $region7: #{a_call__.5} parent=0 // pred_check_branch
    %19 = sbr.rel (0) target = $region9
  $region8: #{a_call__.5} parent=0 // pred_region
    _
  $region9: #{a_call__.5} parent=0 // pred_fallthru
    _
  // Predicated region
  $region10: #{a_call__.5} parent=0 // pred_check
    _
  $region11: #{a_call__.5} parent=0 // pred_check_branch
    %21 = sbr.rel (0) target = $region13
  $region12: #{a_call__.5} parent=0 // pred_region
    _
  $region13: #{a_call__.5} parent=0 // pred_fallthru
    _
  // Predicated region
  $region14: #{a_call__.5} parent=0 // pred_check
    _
  $region15: #{a_call__.5} parent=0 // pred_check_branch
    %23 = sbr.rel (0) target = $region17
  $region16: #{a_call__.5} parent=0 // pred_region
    _
  $region17: #{a_call__.5} parent=0 // pred_fallthru
    _
  // Predicated region
  $region18: #{a_call__.5} parent=0 // pred_check
    _
  $region19: #{a_call__.5} parent=0 // pred_check_branch
    %25 = sbr.rel (0) target = $region21
  $region20: #{a_call__.5} parent=0 // pred_region
    _
  $region21: #{a_call__.5} parent=0 // pred_fallthru
    _
  // Predicated region
  $region22: #{a_call__.5} parent=0 // pred_check
    _
  $region23: #{a_call__.5} parent=0 // pred_check_branch
    %27 = sbr.rel (0) target = $region25
  $region24: #{a_call__.5} parent=0 // pred_region
    _
  $region25: #{a_call__.5} parent=0 // pred_fallthru
    _
  // Predicated region
  $region26: #{a_call__.5} parent=0 // pred_check
    _
  $region27: #{a_call__.5} parent=0 // pred_check_branch
    %29 = sbr.rel (0) target = $region29
  $region28: #{a_call__.5} parent=0 // pred_region
    _
  $region29: #{a_call__.5} parent=0 // pred_fallthru
    _
  // Predicated region
  $region30: #{a_call__.5} parent=0 // pred_check
    _
  $region31: #{a_call__.5} parent=0 // pred_check_branch
    %31 = sbr.rel (0) target = $region33
  $region32: #{a_call__.5} parent=0 // pred_region
    _
  $region33: #{a_call__.5} parent=0 // pred_fallthru
    _
  // Predicated region
  $region34: #{a_call__.5} parent=0 // pred_check
    _
  $region35: #{a_call__.5} parent=0 // pred_check_branch
    %33 = sbr.rel (0) target = $region37
  $region36: #{a_call__.5} parent=0 // pred_region
    _
  $region37: #{a_call__.5} parent=0 // pred_fallthru
    _
  %p34 = scmp.eq.s32.totalorder 0, 0
  // Predicated region
  $region38: #{a_call__.5} parent=0 // pred_check
    %p35 = pneg %p34
  $region39: #{a_call__.5} parent=0 // pred_check_branch
    %37 = sbr.rel (%p35) target = $region41
  $region40: #{a_call__.5} parent=0 // pred_region
    %vm38 = vcmask 254976
    %39 = vst.msk [vmem:[#allocation2] sm:$0x3] %vm38, 0.0
  $region41: #{a_call__.5} parent=0 // pred_fallthru
    _
  %v40 = vld [vmem:[#allocation2] sm:$0x3]
  %v41 = vld [vmem:[%s0] sm:$0x3]
  %v42 = vld [vmem:[%s2] sm:$0xff]
  %v43 = vld [vmem:[%s2 + $0x8] sm:$0xff]
  %v44 = vld [vmem:[%s2 + $0x10] sm:$0xff]
  %v45 = vld [vmem:[%s2 + $0x18] sm:$0xff]
  %v46 = vld [vmem:[%s2 + $0x20] sm:$0xff]
  %v47 = vld [vmem:[%s2 + $0x28] sm:$0xff]
  %v48 = vld [vmem:[%s2 + $0x30] sm:$0xff]
  %v49 = vld [vmem:[%s2 + $0x38] sm:$0xff]
  %v50 = vld [vmem:[%s2 + $0x40] sm:$0xff]
  %vm51 = vcmask 588800
  %v53 = vsel %vm51, %v41, 0
  %55 = vmatprep.subr.mxu0 0.0
  %56 = vmatpush1.msra.mxu0 0.0
  %57 = vmatprep.subr.mxu0 0.0
  %58 = vmatpush1.msra.mxu0 0.0
  %59 = vmatprep.subr.mxu0 0.0
  %60 = vmatpush1.msra.mxu0 0.0
  %61 = vmatprep.subr.mxu0 0.0
  %62 = vmatpush1.msra.mxu0 0.0
  %63 = vmatprep.subr.mxu0 0.0
  %64 = vmatpush1.msra.mxu0 0.0
  %65 = vmatprep.subr.mxu0 0.0
  %66 = vmatpush1.msra.mxu0 0.0
  %67 = vmatprep.subr.mxu0 0.0
  %68 = vmatpush1.msra.mxu0 0.0
  %69 = vmatprep.subr.mxu0 0.0
  %70 = vmatpush1.msra.mxu0 %v50
  %71 = vmatprep.subr.mxu0 0.0
  %72 = vmatpush1.msra.mxu0 %v49
  %73 = vmatprep.subr.mxu0 0.0
  %74 = vmatpush1.msra.mxu0 %v48
  %75 = vmatprep.subr.mxu0 0.0
  %76 = vmatpush1.msra.mxu0 %v47
  %77 = vmatprep.subr.mxu0 0.0
  %78 = vmatpush1.msra.mxu0 %v46
  %79 = vmatprep.subr.mxu0 0.0
  %80 = vmatpush1.msra.mxu0 %v45
  %81 = vmatprep.subr.mxu0 0.0
  %82 = vmatpush1.msra.mxu0 %v44
  %83 = vmatprep.subr.mxu0 0.0
  %84 = vmatpush1.msra.mxu0 %v43
  %85 = vmatprep.subr.mxu0 0.0
  %86 = vmatpush1.msra.mxu0 %v42
  %87 = vmatprep.subr.mxu0 0.0
  %88 = vmatpush2.msra.mxu0 0.0
  %89 = vmatprep.subr.mxu0 0.0
  %90 = vmatpush2.msra.mxu0 0.0
  %91 = vmatprep.subr.mxu0 0.0
  %92 = vmatpush2.msra.mxu0 0.0
  %93 = vmatprep.subr.mxu0 0.0
  %94 = vmatpush2.msra.mxu0 0.0
  %95 = vmatprep.subr.mxu0 0.0
  %96 = vmatpush2.msra.mxu0 0.0
  %97 = vmatprep.subr.mxu0 0.0
  %98 = vmatpush2.msra.mxu0 0.0
  %99 = vmatprep.subr.mxu0 0.0
  %100 = vmatpush2.msra.mxu0 0.0
  %101 = vmatprep.subr.mxu0 0.0
  %102 = vmatpush2.msra.mxu0 0.0
  %103 = vmatprep.subr.mxu0 0.0
  %104 = vmatpush2.msra.mxu0 0.0
  %105 = vmatprep.subr.mxu0 0.0
  %106 = vmatpush2.msra.mxu0 0.0
  %107 = vmatprep.subr.mxu0 0.0
  %108 = vmatpush2.msra.mxu0 0.0
  %109 = vmatprep.subr.mxu0 0.0
  %110 = vmatpush2.msra.mxu0 0.0
  %111 = vmatprep.subr.mxu0 0.0
  %112 = vmatpush2.msra.mxu0 0.0
  %113 = vmatprep.subr.mxu0 0.0
  %114 = vmatpush2.msra.mxu0 0.0
  %115 = vmatprep.subr.mxu0 0.0
  %116 = vmatpush2.msra.mxu0 0.0
  %117 = vmatprep.subr.mxu0 0.0
  %118 = vmatpush2.msra.mxu0 0.0
  %119 = vmatprep.mubr.f32.mxu0 0.0
  %120 = vmatmul.mubr.f32.gmra.mxu0 %v53
  %v121 = vpop.f32.mrf.mxu0
  %v122 = vadd.f32 0.0, %v121
  %v123 = vpop.f32.mrf.mxu0
  %124 = vdwg.mxu0
  %v125 = vadd.f32 %v40, %v122
  %vm126 = vcmask 254976
  %127 = vst.msk [vmem:[#allocation2] sm:$0x3] %vm126, %v125
  // Predicated region
  $region42: #{a_call__.5} parent=0 // pred_check
    %p128 = pneg %p34
  $region43: #{a_call__.5} parent=0 // pred_check_branch
    %130 = sbr.rel (%p128) target = $region45
  $region44: #{a_call__.5} parent=0 // pred_region
    %v131 = vld [vmem:[#allocation2] sm:$0x3]
    %v132 = vld [vmem:[%s1] sm:$0x3]
    %v133 = vld [vmem:[%s3] sm:$0x1]
    %135 = vset.pattern.permute.xlu0 0
    %136 = vperm.xlu0 %135, %v132
    %v137 = vpop.permute.xlu0 %136
    %v140 = vlaneseq
    %v141 = vshrl.u32 %v140, 7
    %v142 = vsub.s32 0, %v141
    %v143 = vrot.slane %v133, %v142
    %v145 = vmul.f32 %v137, %v143
    %v146 = vadd.f32 %v131, %v145
    %v147 = vld [vmem:[%s4] sm:$0x1]
    %v149 = vlaneseq
    %v150 = vshrl.u32 %v149, 7
    %v151 = vsub.s32 0, %v150
    %v152 = vrot.slane %v147, %v151
    %v154 = vadd.f32 %v146, %v152
    %vm155 = vcmp.ge.f32.partialorder %v154, 0.0
    %v156 = vmul.f32 %v154, 0.2
    %v157 = vsel %vm155, %v154, %v156
    %v158 = vld [vmem:[%s5] sm:$0xff]
    %v159 = vld [vmem:[%s5 + $0x8] sm:$0xff]
    %v160 = vld [vmem:[%s5 + $0x10] sm:$0xff]
    %v161 = vld [vmem:[%s5 + $0x18] sm:$0xff]
    %v162 = vld [vmem:[%s6] sm:$0x1]
    %v164 = vlaneseq
    %v165 = vshrl.u32 %v164, 7
    %v166 = vsub.s32 0, %v165
    %v167 = vrot.slane %v162, %v166
    %vm169 = vcmask 261120
    %v171 = vsel %vm169, %v157, 0
    %173 = vmatprep.subr.mxu0 0.0
    %174 = vmatpush1.msra.mxu0 0.0
    %175 = vmatprep.subr.mxu0 0.0
    %176 = vmatpush1.msra.mxu0 0.0
    %177 = vmatprep.subr.mxu0 0.0
    %178 = vmatpush1.msra.mxu0 0.0
    %179 = vmatprep.subr.mxu0 0.0
    %180 = vmatpush1.msra.mxu0 0.0
    %181 = vmatprep.subr.mxu0 0.0
    %182 = vmatpush1.msra.mxu0 0.0
    %183 = vmatprep.subr.mxu0 0.0
    %184 = vmatpush1.msra.mxu0 0.0
    %185 = vmatprep.subr.mxu0 0.0
    %186 = vmatpush1.msra.mxu0 0.0
    %187 = vmatprep.subr.mxu0 0.0
    %188 = vmatpush1.msra.mxu0 0.0
    %189 = vmatprep.subr.mxu0 0.0
    %190 = vmatpush1.msra.mxu0 0.0
    %191 = vmatprep.subr.mxu0 0.0
    %192 = vmatpush1.msra.mxu0 0.0
    %193 = vmatprep.subr.mxu0 0.0
    %194 = vmatpush1.msra.mxu0 0.0
    %195 = vmatprep.subr.mxu0 0.0
    %196 = vmatpush1.msra.mxu0 0.0
    %197 = vmatprep.subr.mxu0 0.0
    %198 = vmatpush1.msra.mxu0 %v161
    %199 = vmatprep.subr.mxu0 0.0
    %200 = vmatpush1.msra.mxu0 %v160
    %201 = vmatprep.subr.mxu0 0.0
    %202 = vmatpush1.msra.mxu0 %v159
    %203 = vmatprep.subr.mxu0 0.0
    %204 = vmatpush1.msra.mxu0 %v158
    %205 = vmatprep.subr.mxu0 0.0
    %206 = vmatpush2.msra.mxu0 0.0
    %207 = vmatprep.subr.mxu0 0.0
    %208 = vmatpush2.msra.mxu0 0.0
    %209 = vmatprep.subr.mxu0 0.0
    %210 = vmatpush2.msra.mxu0 0.0
    %211 = vmatprep.subr.mxu0 0.0
    %212 = vmatpush2.msra.mxu0 0.0
    %213 = vmatprep.subr.mxu0 0.0
    %214 = vmatpush2.msra.mxu0 0.0
    %215 = vmatprep.subr.mxu0 0.0
    %216 = vmatpush2.msra.mxu0 0.0
    %217 = vmatprep.subr.mxu0 0.0
    %218 = vmatpush2.msra.mxu0 0.0
    %219 = vmatprep.subr.mxu0 0.0
    %220 = vmatpush2.msra.mxu0 0.0
    %221 = vmatprep.subr.mxu0 0.0
    %222 = vmatpush2.msra.mxu0 0.0
    %223 = vmatprep.subr.mxu0 0.0
    %224 = vmatpush2.msra.mxu0 0.0
    %225 = vmatprep.subr.mxu0 0.0
    %226 = vmatpush2.msra.mxu0 0.0
    %227 = vmatprep.subr.mxu0 0.0
    %228 = vmatpush2.msra.mxu0 0.0
    %229 = vmatprep.subr.mxu0 0.0
    %230 = vmatpush2.msra.mxu0 0.0
    %231 = vmatprep.subr.mxu0 0.0
    %232 = vmatpush2.msra.mxu0 0.0
    %233 = vmatprep.subr.mxu0 0.0
    %234 = vmatpush2.msra.mxu0 0.0
    %235 = vmatprep.subr.mxu0 0.0
    %236 = vmatpush2.msra.mxu0 0.0
    %237 = vmatprep.mubr.f32.mxu0 0.0
    %238 = vmatmul.mubr.f32.gmra.mxu0 %v171
    %v239 = vpop.f32.mrf.mxu0
    %v240 = vadd.f32 %v167, %v239
    %v241 = vpop.f32.mrf.mxu0
    %242 = vdwg.mxu0
    %vm243 = vcmp.ge.f32.partialorder %v240, 0.0
    %v244 = vmul.f32 %v240, 0.2
    %v245 = vsel %vm243, %v240, %v244
    %v246 = vld [vmem:[%s7] sm:$0xff]
    %v247 = vld [vmem:[%s7 + $0x8] sm:$0xff]
    %v248 = vld [vmem:[#allocation3] sm:$0x1]
    %v250 = vlaneseq
    %v251 = vshrl.u32 %v250, 7
    %v252 = vsub.s32 0, %v251
    %v253 = vrot.slane %v248, %v252
    %vm255 = vcmask 130048
    %v257 = vsel %vm255, %v245, 0
    %259 = vmatprep.subr.mxu0 0.0
    %260 = vmatpush1.msra.mxu0 0.0
    %261 = vmatprep.subr.mxu0 0.0
    %262 = vmatpush1.msra.mxu0 0.0
    %263 = vmatprep.subr.mxu0 0.0
    %264 = vmatpush1.msra.mxu0 0.0
    %265 = vmatprep.subr.mxu0 0.0
    %266 = vmatpush1.msra.mxu0 0.0
    %267 = vmatprep.subr.mxu0 0.0
    %268 = vmatpush1.msra.mxu0 0.0
    %269 = vmatprep.subr.mxu0 0.0
    %270 = vmatpush1.msra.mxu0 0.0
    %271 = vmatprep.subr.mxu0 0.0
    %272 = vmatpush1.msra.mxu0 0.0
    %273 = vmatprep.subr.mxu0 0.0
    %274 = vmatpush1.msra.mxu0 0.0
    %275 = vmatprep.subr.mxu0 0.0
    %276 = vmatpush1.msra.mxu0 0.0
    %277 = vmatprep.subr.mxu0 0.0
    %278 = vmatpush1.msra.mxu0 0.0
    %279 = vmatprep.subr.mxu0 0.0
    %280 = vmatpush1.msra.mxu0 0.0
    %281 = vmatprep.subr.mxu0 0.0
    %282 = vmatpush1.msra.mxu0 0.0
    %283 = vmatprep.subr.mxu0 0.0
    %284 = vmatpush1.msra.mxu0 0.0
    %285 = vmatprep.subr.mxu0 0.0
    %286 = vmatpush1.msra.mxu0 0.0
    %287 = vmatprep.subr.mxu0 0.0
    %288 = vmatpush1.msra.mxu0 %v247
    %289 = vmatprep.subr.mxu0 0.0
    %290 = vmatpush1.msra.mxu0 %v246
    %291 = vmatprep.subr.mxu0 0.0
    %292 = vmatpush2.msra.mxu0 0.0
    %293 = vmatprep.subr.mxu0 0.0
    %294 = vmatpush2.msra.mxu0 0.0
    %295 = vmatprep.subr.mxu0 0.0
    %296 = vmatpush2.msra.mxu0 0.0
    %297 = vmatprep.subr.mxu0 0.0
    %298 = vmatpush2.msra.mxu0 0.0
    %299 = vmatprep.subr.mxu0 0.0
    %300 = vmatpush2.msra.mxu0 0.0
    %301 = vmatprep.subr.mxu0 0.0
    %302 = vmatpush2.msra.mxu0 0.0
    %303 = vmatprep.subr.mxu0 0.0
    %304 = vmatpush2.msra.mxu0 0.0
    %305 = vmatprep.subr.mxu0 0.0
    %306 = vmatpush2.msra.mxu0 0.0
    %307 = vmatprep.subr.mxu0 0.0
    %308 = vmatpush2.msra.mxu0 0.0
    %309 = vmatprep.subr.mxu0 0.0
    %310 = vmatpush2.msra.mxu0 0.0
    %311 = vmatprep.subr.mxu0 0.0
    %312 = vmatpush2.msra.mxu0 0.0
    %313 = vmatprep.subr.mxu0 0.0
    %314 = vmatpush2.msra.mxu0 0.0
    %315 = vmatprep.subr.mxu0 0.0
    %316 = vmatpush2.msra.mxu0 0.0
    %317 = vmatprep.subr.mxu0 0.0
    %318 = vmatpush2.msra.mxu0 0.0
    %319 = vmatprep.subr.mxu0 0.0
    %320 = vmatpush2.msra.mxu0 0.0
    %321 = vmatprep.subr.mxu0 0.0
    %322 = vmatpush2.msra.mxu0 0.0
    %323 = vmatprep.mubr.f32.mxu0 0.0
    %324 = vmatmul.mubr.f32.gmra.mxu0 %v257
    %v325 = vpop.f32.mrf.mxu0
    %v326 = vadd.f32 %v253, %v325
    %v327 = vpop.f32.mrf.mxu0
    %328 = vdwg.mxu0
    %vm329 = vcmask 1024
    %330 = vst.msk [vmem:[%s9] sm:$0x3] %vm329, %v326
  $region45: #{a_call__.5} parent=0 // pred_fallthru
    _
  // Predicated region
  $region46: #{a_call__.5} parent=0 // pred_check
    _
  $region47: #{a_call__.5} parent=0 // pred_check_branch
    %332 = sbr.rel (0) target = $region49
  $region48: #{a_call__.5} parent=0 // pred_region
    _
  $region49: #{a_call__.5} parent=0 // pred_fallthru
    _
  // Predicated region
  $region50: #{a_call__.5} parent=0 // pred_check
    _
  $region51: #{a_call__.5} parent=0 // pred_check_branch
    %334 = sbr.rel (0) target = $region53
  $region52: #{a_call__.5} parent=0 // pred_region
    _
  $region53: #{a_call__.5} parent=0 // pred_fallthru
    _

// kernel: a_call__.3
$region0: #{a_call__.3}
  #allocation0 [shape = 'u32[]', space=smem, size = 0x4, offset = 0x4, fixed_abs, tag = 'smem constant byte address 0x4 - core index']
  #allocation1 [shape = 'u32[144,128]{1,0:T(1,128)}', space=vmem, size = 0x12000, scoped, tag = 'internal scratch']
  %s0 = inlined_call_operand.vmem [shape: f32[3,3,4,2], index: 0, kind: input, shape index: {}]
  %s1 = inlined_call_operand.vmem [shape: f32[4,1], index: 1, kind: input, shape index: {}]
  %s2 = inlined_call_operand.vmem [shape: f32[2,15,2,7], index: 2, kind: input, shape index: {}]
  %s3 = inlined_call_operand.vmem [shape: f32[2,15,2,7], index: 3, kind: input, shape index: {}]
  %s4 = inlined_call_operand.vmem [shape: f32[2,15,2,7], index: 4, kind: input, shape index: {}]
  %s5 = inlined_call_operand.vmem [shape: f32[2,7,4,7], index: 5, kind: output, shape index: {}]
  %s6 = sld [smem:[#allocation0]]
  $region60: #{a_call__.3} parent=0
    _
  %s8 = ssub.s32 1, %s6
  %s9 = scalar_select 0, %s8, %s6
  loop: start=0, step=1, limit=4
  $region2: #{a_call__.3} parent=0 // loop_pre_header
    _
  $region3: #{a_call__.3} parent=0 // loop_header
    %s11 = sphi 0, %s15
    %p12 = scmp.ge.s32.totalorder %s11, 4
    %s19 = sphi 0, %s19
    %s21 = sphi 0, %s19
    %s22 = sphi 0, %s21
    %s36 = sphi 0, %s22
    %s40 = sphi 0, %s40
    %s42 = sphi 0, %s40
    %s43 = sphi 0, %s42
    %s57 = sphi 0, %s43
    %s63 = sphi 0, %s65
    %s66 = sphi 0, %s63
    %s67 = sphi 0, %s66
    %s83 = sphi 0, %s67
    %s89 = sphi 0, %s91
    %s92 = sphi 0, %s89
    %s93 = sphi 0, %s92
    %s109 = sphi 0, %s93
    %s115 = sphi 0, %s117
    %s118 = sphi 0, %s115
    %s119 = sphi 0, %s118
    %s135 = sphi 0, %s119
    %s141 = sphi 0, %s143
    %s144 = sphi 0, %s141
    %s145 = sphi 0, %s144
    %s161 = sphi 0, %s145
  $region4: #{a_call__.3} parent=0 // loop_header_branch
    %14 = sbr.rel (%p12) target = $region8
  $region5: #{a_call__.3} parent=0 // loop_body
    %s16 = ssub.s32 %s11, 1
    %s17 = ssub.s32 %s11, 2
    %s18 = sadd.s32 %s11, 1
    %s20 = sadd.s32 %s19, 1
    %p23 = scmp.eq.s32.totalorder %s11, 1
    %p24 = scmp.ne.s32.totalorder %s19, %s21
    %p25 = scmp.eq.s32.totalorder %s11, 0
    %p26 = por %p24, %p25
    %p27 = scmp.ne.s32.totalorder %s19, %s21
    %p28 = scmp.eq.s32.totalorder %s16, 1
    %p29 = por %p27, %p28
    %p30 = scmp.ne.s32.totalorder %s21, %s22
    %p31 = scmp.eq.s32.totalorder %s16, 0
    %p32 = por %p30, %p31
    %p33 = scmp.ne.s32.totalorder %s21, %s22
    %p34 = scmp.eq.s32.totalorder %s17, 1
    %p35 = por %p33, %p34
    %p37 = scmp.ne.s32.totalorder %s22, %s36
    %p38 = scmp.eq.s32.totalorder %s17, 0
    %p39 = por %p37, %p38
    %s41 = sadd.s32 %s40, 1
    %p44 = scmp.eq.s32.totalorder %s11, 1
    %p45 = scmp.ne.s32.totalorder %s40, %s42
    %p46 = scmp.eq.s32.totalorder %s11, 0
    %p47 = por %p45, %p46
    %p48 = scmp.ne.s32.totalorder %s40, %s42
    %p49 = scmp.eq.s32.totalorder %s16, 1
    %p50 = por %p48, %p49
    %p51 = scmp.ne.s32.totalorder %s42, %s43
    %p52 = scmp.eq.s32.totalorder %s16, 0
    %p53 = por %p51, %p52
    %p54 = scmp.ne.s32.totalorder %s42, %s43
    %p55 = scmp.eq.s32.totalorder %s17, 1
    %p56 = por %p54, %p55
    %p58 = scmp.ne.s32.totalorder %s43, %s57
    %p59 = scmp.eq.s32.totalorder %s17, 0
    %p60 = por %p58, %p59
    %s61 = ssub.s32 %s11, %s18
    %p62 = scmp.eq.s32.totalorder %s61, 0
    %s64 = sadd.s32 %s63, 1
    %s65 = scalar_select %p62, %s63, %s64
    %p68 = pneg %p62
    %p69 = scmp.eq.s32.totalorder %s11, 1
    %p70 = por %p68, %p69
    %p71 = scmp.ne.s32.totalorder %s63, %s66
    %p72 = scmp.eq.s32.totalorder %s11, 0
    %p73 = por %p71, %p72
    %p74 = scmp.ne.s32.totalorder %s63, %s66
    %p75 = scmp.eq.s32.totalorder %s16, 1
    %p76 = por %p74, %p75
    %p77 = scmp.ne.s32.totalorder %s66, %s67
    %p78 = scmp.eq.s32.totalorder %s16, 0
    %p79 = por %p77, %p78
    %p80 = scmp.ne.s32.totalorder %s66, %s67
    %p81 = scmp.eq.s32.totalorder %s17, 1
    %p82 = por %p80, %p81
    %p84 = scmp.ne.s32.totalorder %s67, %s83
    %p85 = scmp.eq.s32.totalorder %s17, 0
    %p86 = por %p84, %p85
    %s87 = ssub.s32 %s11, %s18
    %p88 = scmp.eq.s32.totalorder %s87, 0
    %s90 = sadd.s32 %s89, 1
    %s91 = scalar_select %p88, %s89, %s90
    %p94 = pneg %p88
    %p95 = scmp.eq.s32.totalorder %s11, 1
    %p96 = por %p94, %p95
    %p97 = scmp.ne.s32.totalorder %s89, %s92
    %p98 = scmp.eq.s32.totalorder %s11, 0
    %p99 = por %p97, %p98
    %p100 = scmp.ne.s32.totalorder %s89, %s92
    %p101 = scmp.eq.s32.totalorder %s16, 1
    %p102 = por %p100, %p101
    %p103 = scmp.ne.s32.totalorder %s92, %s93
    %p104 = scmp.eq.s32.totalorder %s16, 0
    %p105 = por %p103, %p104
    %p106 = scmp.ne.s32.totalorder %s92, %s93
    %p107 = scmp.eq.s32.totalorder %s17, 1
    %p108 = por %p106, %p107
    %p110 = scmp.ne.s32.totalorder %s93, %s109
    %p111 = scmp.eq.s32.totalorder %s17, 0
    %p112 = por %p110, %p111
    %s113 = ssub.s32 %s11, %s18
    %p114 = scmp.eq.s32.totalorder %s113, 0
    %s116 = sadd.s32 %s115, 1
    %s117 = scalar_select %p114, %s115, %s116
    %p120 = pneg %p114
    %p121 = scmp.eq.s32.totalorder %s11, 1
    %p122 = por %p120, %p121
    %p123 = scmp.ne.s32.totalorder %s115, %s118
    %p124 = scmp.eq.s32.totalorder %s11, 0
    %p125 = por %p123, %p124
    %p126 = scmp.ne.s32.totalorder %s115, %s118
    %p127 = scmp.eq.s32.totalorder %s16, 1
    %p128 = por %p126, %p127
    %p129 = scmp.ne.s32.totalorder %s118, %s119
    %p130 = scmp.eq.s32.totalorder %s16, 0
    %p131 = por %p129, %p130
    %p132 = scmp.ne.s32.totalorder %s118, %s119
    %p133 = scmp.eq.s32.totalorder %s17, 1
    %p134 = por %p132, %p133
    %p136 = scmp.ne.s32.totalorder %s119, %s135
    %p137 = scmp.eq.s32.totalorder %s17, 0
    %p138 = por %p136, %p137
    %s139 = ssub.s32 %s11, %s18
    %p140 = scmp.eq.s32.totalorder %s139, 0
    %s142 = sadd.s32 %s141, 1
    %s143 = scalar_select %p140, %s141, %s142
    %p146 = pneg %p140
    %p147 = scmp.eq.s32.totalorder %s11, 1
    %p148 = por %p146, %p147
    %p149 = scmp.ne.s32.totalorder %s141, %s144
    %p150 = scmp.eq.s32.totalorder %s11, 0
    %p151 = por %p149, %p150
    %p152 = scmp.ne.s32.totalorder %s141, %s144
    %p153 = scmp.eq.s32.totalorder %s16, 1
    %p154 = por %p152, %p153
    %p155 = scmp.ne.s32.totalorder %s144, %s145
    %p156 = scmp.eq.s32.totalorder %s16, 0
    %p157 = por %p155, %p156
    %p158 = scmp.ne.s32.totalorder %s144, %s145
    %p159 = scmp.eq.s32.totalorder %s17, 1
    %p160 = por %p158, %p159
    %p162 = scmp.ne.s32.totalorder %s145, %s161
    %p163 = scmp.eq.s32.totalorder %s17, 0
    %p164 = por %p162, %p163
    %p165 = scmp.le.s32.totalorder 1, %s11
    %p166 = scmp.lt.s32.totalorder %s11, 3
    %p167 = pnand %p165, %p166
    %p168 = pneg %p167
    // Predicated region
    $region9: #{a_call__.3} parent=5 // pred_check
      _
    $region10: #{a_call__.3} parent=5 // pred_check_branch
      %170 = sbr.rel (%p167) target = $region12
    $region11: #{a_call__.3} parent=5 // pred_region
      %s171 = ssub.s32 %s11, 1
      // Predicated region
      $region13: #{a_call__.3} parent=11 // pred_check
        %p172 = pneg %p32
      $region14: #{a_call__.3} parent=11 // pred_check_branch
        %174 = sbr.rel (%p172) target = $region16
      $region15: #{a_call__.3} parent=11 // pred_region
        _
      $region16: #{a_call__.3} parent=11 // pred_fallthru
        _
      // Predicated region
      $region17: #{a_call__.3} parent=11 // pred_check
        %p175 = pneg %p53
      $region18: #{a_call__.3} parent=11 // pred_check_branch
        %177 = sbr.rel (%p175) target = $region20
      $region19: #{a_call__.3} parent=11 // pred_region
        _
      $region20: #{a_call__.3} parent=11 // pred_fallthru
        _
    $region12: #{a_call__.3} parent=5 // pred_fallthru
      _
    %p178 = scmp.lt.s32.totalorder %s11, 2
    // Predicated region
    $region21: #{a_call__.3} parent=5 // pred_check
      %p179 = pneg %p178
    $region22: #{a_call__.3} parent=5 // pred_check_branch
      %181 = sbr.rel (%p179) target = $region24
    $region23: #{a_call__.3} parent=5 // pred_region
      // Predicated region
      $region25: #{a_call__.3} parent=23 // pred_check
        %p182 = pneg %p73
      $region26: #{a_call__.3} parent=23 // pred_check_branch
        %184 = sbr.rel (%p182) target = $region28
      $region27: #{a_call__.3} parent=23 // pred_region
        %p185 = scmp.lt.s32.totalorder %s11, 1
        %s186 = scalar_select %p185, %s11, 1
        %s187 = smul.addr %s186, 15
        %s188 = smul.addr %s187, 2
        %s189 = scalar_lea.vmem %s2, %s188
      $region28: #{a_call__.3} parent=23 // pred_fallthru
        _
      // Predicated region
      $region29: #{a_call__.3} parent=23 // pred_check
        %p190 = pneg %p99
      $region30: #{a_call__.3} parent=23 // pred_check_branch
        %192 = sbr.rel (%p190) target = $region32
      $region31: #{a_call__.3} parent=23 // pred_region
        %p193 = scmp.lt.s32.totalorder %s11, 1
        %s194 = scalar_select %p193, %s11, 1
        %s195 = smul.addr %s194, 15
        %s196 = smul.addr %s195, 2
        %s197 = scalar_lea.vmem %s3, %s196
      $region32: #{a_call__.3} parent=23 // pred_fallthru
        _
      // Predicated region
      $region33: #{a_call__.3} parent=23 // pred_check
        %p198 = pneg %p125
      $region34: #{a_call__.3} parent=23 // pred_check_branch
        %200 = sbr.rel (%p198) target = $region36
      $region35: #{a_call__.3} parent=23 // pred_region
        %p201 = scmp.lt.s32.totalorder %s11, 1
        %s202 = scalar_select %p201, %s11, 1
        %s203 = smul.addr %s202, 15
        %s204 = smul.addr %s203, 2
        %s205 = scalar_lea.vmem %s4, %s204
      $region36: #{a_call__.3} parent=23 // pred_fallthru
        _
    $region24: #{a_call__.3} parent=5 // pred_fallthru
      _
    %p206 = scmp.le.s32.totalorder 1, %s11
    %p207 = scmp.lt.s32.totalorder %s11, 3
    %p208 = pnand %p206, %p207
    %p209 = pneg %p208
    // Predicated region
    $region37: #{a_call__.3} parent=5 // pred_check
      _
    $region38: #{a_call__.3} parent=5 // pred_check_branch
      %211 = sbr.rel (%p208) target = $region40
    $region39: #{a_call__.3} parent=5 // pred_region
      %s212 = ssub.s32 %s11, 1
      %p213 = pneg %p32
      %p214 = pneg %p29
      %p215 = pneg %p53
      %p216 = pneg %p50
      %p217 = scmp.lt.s32.totalorder %s16, 1
      %s218 = scalar_select %p217, %s16, 1
      %s219 = smul.addr %s218, 15
      %s220 = smul.addr %s219, 2
      %s221 = scalar_lea.vmem %s2, %s220
      %p222 = pneg %p79
      %p223 = pneg %p76
      %p224 = scmp.lt.s32.totalorder %s16, 1
      %s225 = scalar_select %p224, %s16, 1
      %s226 = smul.addr %s225, 15
      %s227 = smul.addr %s226, 2
      %s228 = scalar_lea.vmem %s3, %s227
      %p229 = pneg %p105
      %p230 = pneg %p102
      %p231 = scmp.lt.s32.totalorder %s16, 1
      %s232 = scalar_select %p231, %s16, 1
      %s233 = smul.addr %s232, 15
      %s234 = smul.addr %s233, 2
      %s235 = scalar_lea.vmem %s4, %s234
      %p236 = pneg %p131
      %p237 = pneg %p128
      %p238 = pneg %p157
      %p239 = pneg %p154
      %p240 = scmp.lt.s32.totalorder %s16, 1
      %s241 = scalar_select %p240, %s16, 1
      %s242 = smul.addr %s241, 7
      %s243 = smul.addr %s242, 4
      %s244 = scalar_lea.vmem %s5, %s243
      %p245 = scmp.lt.s32.totalorder %s16, 1
      %s246 = scalar_select %p245, %s16, 1
      %s247 = smul.addr %s246, 15
      %s248 = smul.addr %s247, 2
      %s249 = scalar_lea.vmem %s2, %s248
      %p250 = scmp.lt.s32.totalorder %s16, 1
      %s251 = scalar_select %p250, %s16, 1
      %s252 = smul.addr %s251, 15
      %s253 = smul.addr %s252, 2
      %s254 = scalar_lea.vmem %s3, %s253
      %p255 = scmp.lt.s32.totalorder %s16, 1
      %s256 = scalar_select %p255, %s16, 1
      %s257 = smul.addr %s256, 15
      %s258 = smul.addr %s257, 2
      %s259 = scalar_lea.vmem %s4, %s258
      %p260 = scmp.lt.s32.totalorder %s16, 1
      %s261 = scalar_select %p260, %s16, 1
      %s262 = smul.addr %s261, 7
      %s263 = smul.addr %s262, 4
      %s264 = scalar_lea.vmem %s5, %s263
      %v265 = vld [vmem:[%s0] sm:$0xf]
      %s266 = scalar_lea.vmem %s0, 4
      %v267 = vld [vmem:[%s266] sm:$0xf]
      %s268 = scalar_lea.vmem %s0, 8
      %v269 = vld [vmem:[%s268] sm:$0xf]
      %s270 = scalar_lea.vmem %s0, 12
      %v271 = vld [vmem:[%s270] sm:$0xf]
      %s272 = scalar_lea.vmem %s0, 16
      %v273 = vld [vmem:[%s272] sm:$0xf]
      %s274 = scalar_lea.vmem %s0, 20
      %v275 = vld [vmem:[%s274] sm:$0xf]
      %s276 = scalar_lea.vmem %s0, 24
      %v277 = vld [vmem:[%s276] sm:$0xf]
      %s278 = scalar_lea.vmem %s0, 28
      %v279 = vld [vmem:[%s278] sm:$0xf]
      %s280 = scalar_lea.vmem %s0, 32
      %v281 = vld [vmem:[%s280] sm:$0xf]
      %v282 = vld [vmem:[%s1] sm:$0xf]
      loop: start=0, step=1, limit=7
      $region41: #{a_call__.3} parent=39 // loop_pre_header
        _
      $region42: #{a_call__.3} parent=39 // loop_header
        %s284 = sphi 0, %s288
        %p285 = scmp.ge.s32.totalorder %s284, 7
      $region43: #{a_call__.3} parent=39 // loop_header_branch
        %287 = sbr.rel (%p285) target = $region47
      $region44: #{a_call__.3} parent=39 // loop_body
        %s289 = smul.u32 %s284, 2
        %s290 = smul.u32 %s289, 2
        %s291 = scalar_lea.vmem %s249, %s290
        %v292 = vld [vmem:[%s291] sm:$0x3]
        %s293 = scalar_lea.vmem %s254, %s290
        %v294 = vld [vmem:[%s293] sm:$0x3]
        %vm295 = vcmask 15360
        %v297 = vsel %vm295, %v267, 0
        %vm299 = vcmask 1041408
        %v301 = vsel %vm299, %v294, 0
        %303 = vmatprep.subr.mxu0 0.0
        %304 = vmatpush1.msra.mxu0 0.0
        %305 = vmatprep.subr.mxu0 0.0
        %306 = vmatpush1.msra.mxu0 0.0
        %307 = vmatprep.subr.mxu0 0.0
        %308 = vmatpush1.msra.mxu0 0.0
        %309 = vmatprep.subr.mxu0 0.0
        %310 = vmatpush1.msra.mxu0 0.0
        %311 = vmatprep.subr.mxu0 0.0
        %312 = vmatpush1.msra.mxu0 0.0
        %313 = vmatprep.subr.mxu0 0.0
        %314 = vmatpush1.msra.mxu0 0.0
        %315 = vmatprep.subr.mxu0 0.0
        %316 = vmatpush1.msra.mxu0 0.0
        %317 = vmatprep.subr.mxu0 0.0
        %318 = vmatpush1.msra.mxu0 0.0
        %319 = vmatprep.subr.mxu0 0.0
        %320 = vmatpush1.msra.mxu0 0.0
        %321 = vmatprep.subr.mxu0 0.0
        %322 = vmatpush1.msra.mxu0 0.0
        %323 = vmatprep.subr.mxu0 0.0
        %324 = vmatpush1.msra.mxu0 0.0
        %325 = vmatprep.subr.mxu0 0.0
        %326 = vmatpush1.msra.mxu0 0.0
        %327 = vmatprep.subr.mxu0 0.0
        %328 = vmatpush1.msra.mxu0 0.0
        %329 = vmatprep.subr.mxu0 0.0
        %330 = vmatpush1.msra.mxu0 0.0
        %331 = vmatprep.subr.mxu0 0.0
        %332 = vmatpush1.msra.mxu0 0.0
        %333 = vmatprep.subr.mxu0 0.0
        %334 = vmatpush1.msra.mxu0 %v301
        %335 = vmatprep.subr.mxu0 0.0
        %336 = vmatpush2.msra.mxu0 0.0
        %337 = vmatprep.subr.mxu0 0.0
        %338 = vmatpush2.msra.mxu0 0.0
        %339 = vmatprep.subr.mxu0 0.0
        %340 = vmatpush2.msra.mxu0 0.0
        %341 = vmatprep.subr.mxu0 0.0
        %342 = vmatpush2.msra.mxu0 0.0
        %343 = vmatprep.subr.mxu0 0.0
        %344 = vmatpush2.msra.mxu0 0.0
        %345 = vmatprep.subr.mxu0 0.0
        %346 = vmatpush2.msra.mxu0 0.0
        %347 = vmatprep.subr.mxu0 0.0
        %348 = vmatpush2.msra.mxu0 0.0
        %349 = vmatprep.subr.mxu0 0.0
        %350 = vmatpush2.msra.mxu0 0.0
        %351 = vmatprep.subr.mxu0 0.0
        %352 = vmatpush2.msra.mxu0 0.0
        %353 = vmatprep.subr.mxu0 0.0
        %354 = vmatpush2.msra.mxu0 0.0
        %355 = vmatprep.subr.mxu0 0.0
        %356 = vmatpush2.msra.mxu0 0.0
        %357 = vmatprep.subr.mxu0 0.0
        %358 = vmatpush2.msra.mxu0 0.0
        %359 = vmatprep.subr.mxu0 0.0
        %360 = vmatpush2.msra.mxu0 0.0
        %361 = vmatprep.subr.mxu0 0.0
        %362 = vmatpush2.msra.mxu0 0.0
        %363 = vmatprep.subr.mxu0 0.0
        %364 = vmatpush2.msra.mxu0 0.0
        %365 = vmatprep.subr.mxu0 0.0
        %366 = vmatpush2.msra.mxu0 0.0
        %367 = vmatprep.mubr.f32.mxu0 0.0
        %368 = vmatmul.mubr.f32.gmra.mxu0 %v297
        %v369 = vpop.f32.mrf.mxu0
        %v370 = vadd.f32 0.0, %v369
        %v371 = vpop.f32.mrf.mxu0
        %372 = vdwg.mxu0
        %v374 = vsel %vm295, %v265, 0
        %v377 = vsel %vm299, %v292, 0
        %379 = vmatprep.subr.mxu0 0.0
        %380 = vmatpush1.msra.mxu0 0.0
        %381 = vmatprep.subr.mxu0 0.0
        %382 = vmatpush1.msra.mxu0 0.0
        %383 = vmatprep.subr.mxu0 0.0
        %384 = vmatpush1.msra.mxu0 0.0
        %385 = vmatprep.subr.mxu0 0.0
        %386 = vmatpush1.msra.mxu0 0.0
        %387 = vmatprep.subr.mxu0 0.0
        %388 = vmatpush1.msra.mxu0 0.0
        %389 = vmatprep.subr.mxu0 0.0
        %390 = vmatpush1.msra.mxu0 0.0
        %391 = vmatprep.subr.mxu0 0.0
        %392 = vmatpush1.msra.mxu0 0.0
        %393 = vmatprep.subr.mxu0 0.0
        %394 = vmatpush1.msra.mxu0 0.0
        %395 = vmatprep.subr.mxu0 0.0
        %396 = vmatpush1.msra.mxu0 0.0
        %397 = vmatprep.subr.mxu0 0.0
        %398 = vmatpush1.msra.mxu0 0.0
        %399 = vmatprep.subr.mxu0 0.0
        %400 = vmatpush1.msra.mxu0 0.0
        %401 = vmatprep.subr.mxu0 0.0
        %402 = vmatpush1.msra.mxu0 0.0
        %403 = vmatprep.subr.mxu0 0.0
        %404 = vmatpush1.msra.mxu0 0.0
        %405 = vmatprep.subr.mxu0 0.0
        %406 = vmatpush1.msra.mxu0 0.0
        %407 = vmatprep.subr.mxu0 0.0
        %408 = vmatpush1.msra.mxu0 0.0
        %409 = vmatprep.subr.mxu0 0.0
        %410 = vmatpush1.msra.mxu0 %v377
        %411 = vmatprep.subr.mxu0 0.0
        %412 = vmatpush2.msra.mxu0 0.0
        %413 = vmatprep.subr.mxu0 0.0
        %414 = vmatpush2.msra.mxu0 0.0
        %415 = vmatprep.subr.mxu0 0.0
        %416 = vmatpush2.msra.mxu0 0.0
        %417 = vmatprep.subr.mxu0 0.0
        %418 = vmatpush2.msra.mxu0 0.0
        %419 = vmatprep.subr.mxu0 0.0
        %420 = vmatpush2.msra.mxu0 0.0
        %421 = vmatprep.subr.mxu0 0.0
        %422 = vmatpush2.msra.mxu0 0.0
        %423 = vmatprep.subr.mxu0 0.0
        %424 = vmatpush2.msra.mxu0 0.0
        %425 = vmatprep.subr.mxu0 0.0
        %426 = vmatpush2.msra.mxu0 0.0
        %427 = vmatprep.subr.mxu0 0.0
        %428 = vmatpush2.msra.mxu0 0.0
        %429 = vmatprep.subr.mxu0 0.0
        %430 = vmatpush2.msra.mxu0 0.0
        %431 = vmatprep.subr.mxu0 0.0
        %432 = vmatpush2.msra.mxu0 0.0
        %433 = vmatprep.subr.mxu0 0.0
        %434 = vmatpush2.msra.mxu0 0.0
        %435 = vmatprep.subr.mxu0 0.0
        %436 = vmatpush2.msra.mxu0 0.0
        %437 = vmatprep.subr.mxu0 0.0
        %438 = vmatpush2.msra.mxu0 0.0
        %439 = vmatprep.subr.mxu0 0.0
        %440 = vmatpush2.msra.mxu0 0.0
        %441 = vmatprep.subr.mxu0 0.0
        %442 = vmatpush2.msra.mxu0 0.0
        %443 = vmatprep.mubr.f32.mxu0 0.0
        %444 = vmatmul.mubr.f32.gmra.mxu0 %v374
        %v445 = vpop.f32.mrf.mxu0
        %v446 = vadd.f32 %v370, %v445
        %v447 = vpop.f32.mrf.mxu0
        %448 = vdwg.mxu0
        %s449 = scalar_lea.vmem %s259, %s290
        %v450 = vld [vmem:[%s449] sm:$0x3]
        %v452 = vsel %vm295, %v269, 0
        %v455 = vsel %vm299, %v450, 0
        %457 = vmatprep.subr.mxu0 0.0
        %458 = vmatpush1.msra.mxu0 0.0
        %459 = vmatprep.subr.mxu0 0.0
        %460 = vmatpush1.msra.mxu0 0.0
        %461 = vmatprep.subr.mxu0 0.0
        %462 = vmatpush1.msra.mxu0 0.0
        %463 = vmatprep.subr.mxu0 0.0
        %464 = vmatpush1.msra.mxu0 0.0
        %465 = vmatprep.subr.mxu0 0.0
        %466 = vmatpush1.msra.mxu0 0.0
        %467 = vmatprep.subr.mxu0 0.0
        %468 = vmatpush1.msra.mxu0 0.0
        %469 = vmatprep.subr.mxu0 0.0
        %470 = vmatpush1.msra.mxu0 0.0
        %471 = vmatprep.subr.mxu0 0.0
        %472 = vmatpush1.msra.mxu0 0.0
        %473 = vmatprep.subr.mxu0 0.0
        %474 = vmatpush1.msra.mxu0 0.0
        %475 = vmatprep.subr.mxu0 0.0
        %476 = vmatpush1.msra.mxu0 0.0
        %477 = vmatprep.subr.mxu0 0.0
        %478 = vmatpush1.msra.mxu0 0.0
        %479 = vmatprep.subr.mxu0 0.0
        %480 = vmatpush1.msra.mxu0 0.0
        %481 = vmatprep.subr.mxu0 0.0
        %482 = vmatpush1.msra.mxu0 0.0
        %483 = vmatprep.subr.mxu0 0.0
        %484 = vmatpush1.msra.mxu0 0.0
        %485 = vmatprep.subr.mxu0 0.0
        %486 = vmatpush1.msra.mxu0 0.0
        %487 = vmatprep.subr.mxu0 0.0
        %488 = vmatpush1.msra.mxu0 %v455
        %489 = vmatprep.subr.mxu0 0.0
        %490 = vmatpush2.msra.mxu0 0.0
        %491 = vmatprep.subr.mxu0 0.0
        %492 = vmatpush2.msra.mxu0 0.0
        %493 = vmatprep.subr.mxu0 0.0
        %494 = vmatpush2.msra.mxu0 0.0
        %495 = vmatprep.subr.mxu0 0.0
        %496 = vmatpush2.msra.mxu0 0.0
        %497 = vmatprep.subr.mxu0 0.0
        %498 = vmatpush2.msra.mxu0 0.0
        %499 = vmatprep.subr.mxu0 0.0
        %500 = vmatpush2.msra.mxu0 0.0
        %501 = vmatprep.subr.mxu0 0.0
        %502 = vmatpush2.msra.mxu0 0.0
        %503 = vmatprep.subr.mxu0 0.0
        %504 = vmatpush2.msra.mxu0 0.0
        %505 = vmatprep.subr.mxu0 0.0
        %506 = vmatpush2.msra.mxu0 0.0
        %507 = vmatprep.subr.mxu0 0.0
        %508 = vmatpush2.msra.mxu0 0.0
        %509 = vmatprep.subr.mxu0 0.0
        %510 = vmatpush2.msra.mxu0 0.0
        %511 = vmatprep.subr.mxu0 0.0
        %512 = vmatpush2.msra.mxu0 0.0
        %513 = vmatprep.subr.mxu0 0.0
        %514 = vmatpush2.msra.mxu0 0.0
        %515 = vmatprep.subr.mxu0 0.0
        %516 = vmatpush2.msra.mxu0 0.0
        %517 = vmatprep.subr.mxu0 0.0
        %518 = vmatpush2.msra.mxu0 0.0
        %519 = vmatprep.subr.mxu0 0.0
        %520 = vmatpush2.msra.mxu0 0.0
        %521 = vmatprep.mubr.f32.mxu0 0.0
        %522 = vmatmul.mubr.f32.gmra.mxu0 %v452
        %v523 = vpop.f32.mrf.mxu0
        %v524 = vadd.f32 0.0, %v523
        %v525 = vpop.f32.mrf.mxu0
        %526 = vdwg.mxu0
        %v527 = vadd.f32 %v446, %v524
        %s528 = sadd.s32 %s289, 1
        %s529 = smul.u32 %s528, 2
        %s530 = scalar_lea.vmem %s249, %s529
        %v531 = vld [vmem:[%s530] sm:$0x3]
        %v533 = vsel %vm295, %v271, 0
        %v536 = vsel %vm299, %v531, 0
        %538 = vmatprep.subr.mxu0 0.0
        %539 = vmatpush1.msra.mxu0 0.0
        %540 = vmatprep.subr.mxu0 0.0
        %541 = vmatpush1.msra.mxu0 0.0
        %542 = vmatprep.subr.mxu0 0.0
        %543 = vmatpush1.msra.mxu0 0.0
        %544 = vmatprep.subr.mxu0 0.0
        %545 = vmatpush1.msra.mxu0 0.0
        %546 = vmatprep.subr.mxu0 0.0
        %547 = vmatpush1.msra.mxu0 0.0
        %548 = vmatprep.subr.mxu0 0.0
        %549 = vmatpush1.msra.mxu0 0.0
        %550 = vmatprep.subr.mxu0 0.0
        %551 = vmatpush1.msra.mxu0 0.0
        %552 = vmatprep.subr.mxu0 0.0
        %553 = vmatpush1.msra.mxu0 0.0
        %554 = vmatprep.subr.mxu0 0.0
        %555 = vmatpush1.msra.mxu0 0.0
        %556 = vmatprep.subr.mxu0 0.0
        %557 = vmatpush1.msra.mxu0 0.0
        %558 = vmatprep.subr.mxu0 0.0
        %559 = vmatpush1.msra.mxu0 0.0
        %560 = vmatprep.subr.mxu0 0.0
        %561 = vmatpush1.msra.mxu0 0.0
        %562 = vmatprep.subr.mxu0 0.0
        %563 = vmatpush1.msra.mxu0 0.0
        %564 = vmatprep.subr.mxu0 0.0
        %565 = vmatpush1.msra.mxu0 0.0
        %566 = vmatprep.subr.mxu0 0.0
        %567 = vmatpush1.msra.mxu0 0.0
        %568 = vmatprep.subr.mxu0 0.0
        %569 = vmatpush1.msra.mxu0 %v536
        %570 = vmatprep.subr.mxu0 0.0
        %571 = vmatpush2.msra.mxu0 0.0
        %572 = vmatprep.subr.mxu0 0.0
        %573 = vmatpush2.msra.mxu0 0.0
        %574 = vmatprep.subr.mxu0 0.0
        %575 = vmatpush2.msra.mxu0 0.0
        %576 = vmatprep.subr.mxu0 0.0
        %577 = vmatpush2.msra.mxu0 0.0
        %578 = vmatprep.subr.mxu0 0.0
        %579 = vmatpush2.msra.mxu0 0.0
        %580 = vmatprep.subr.mxu0 0.0
        %581 = vmatpush2.msra.mxu0 0.0
        %582 = vmatprep.subr.mxu0 0.0
        %583 = vmatpush2.msra.mxu0 0.0
        %584 = vmatprep.subr.mxu0 0.0
        %585 = vmatpush2.msra.mxu0 0.0
        %586 = vmatprep.subr.mxu0 0.0
        %587 = vmatpush2.msra.mxu0 0.0
        %588 = vmatprep.subr.mxu0 0.0
        %589 = vmatpush2.msra.mxu0 0.0
        %590 = vmatprep.subr.mxu0 0.0
        %591 = vmatpush2.msra.mxu0 0.0
        %592 = vmatprep.subr.mxu0 0.0
        %593 = vmatpush2.msra.mxu0 0.0
        %594 = vmatprep.subr.mxu0 0.0
        %595 = vmatpush2.msra.mxu0 0.0
        %596 = vmatprep.subr.mxu0 0.0
        %597 = vmatpush2.msra.mxu0 0.0
        %598 = vmatprep.subr.mxu0 0.0
        %599 = vmatpush2.msra.mxu0 0.0
        %600 = vmatprep.subr.mxu0 0.0
        %601 = vmatpush2.msra.mxu0 0.0
        %602 = vmatprep.mubr.f32.mxu0 0.0
        %603 = vmatmul.mubr.f32.gmra.mxu0 %v533
        %v604 = vpop.f32.mrf.mxu0
        %v605 = vadd.f32 0.0, %v604
        %v606 = vpop.f32.mrf.mxu0
        %607 = vdwg.mxu0
        %v608 = vadd.f32 %v527, %v605
        %s609 = scalar_lea.vmem %s254, %s529
        %v610 = vld [vmem:[%s609] sm:$0x3]
        %v612 = vsel %vm295, %v273, 0
        %v615 = vsel %vm299, %v610, 0
        %617 = vmatprep.subr.mxu0 0.0
        %618 = vmatpush1.msra.mxu0 0.0
        %619 = vmatprep.subr.mxu0 0.0
        %620 = vmatpush1.msra.mxu0 0.0
        %621 = vmatprep.subr.mxu0 0.0
        %622 = vmatpush1.msra.mxu0 0.0
        %623 = vmatprep.subr.mxu0 0.0
        %624 = vmatpush1.msra.mxu0 0.0
        %625 = vmatprep.subr.mxu0 0.0
        %626 = vmatpush1.msra.mxu0 0.0
        %627 = vmatprep.subr.mxu0 0.0
        %628 = vmatpush1.msra.mxu0 0.0
        %629 = vmatprep.subr.mxu0 0.0
        %630 = vmatpush1.msra.mxu0 0.0
        %631 = vmatprep.subr.mxu0 0.0
        %632 = vmatpush1.msra.mxu0 0.0
        %633 = vmatprep.subr.mxu0 0.0
        %634 = vmatpush1.msra.mxu0 0.0
        %635 = vmatprep.subr.mxu0 0.0
        %636 = vmatpush1.msra.mxu0 0.0
        %637 = vmatprep.subr.mxu0 0.0
        %638 = vmatpush1.msra.mxu0 0.0
        %639 = vmatprep.subr.mxu0 0.0
        %640 = vmatpush1.msra.mxu0 0.0
        %641 = vmatprep.subr.mxu0 0.0
        %642 = vmatpush1.msra.mxu0 0.0
        %643 = vmatprep.subr.mxu0 0.0
        %644 = vmatpush1.msra.mxu0 0.0
        %645 = vmatprep.subr.mxu0 0.0
        %646 = vmatpush1.msra.mxu0 0.0
        %647 = vmatprep.subr.mxu0 0.0
        %648 = vmatpush1.msra.mxu0 %v615
        %649 = vmatprep.subr.mxu0 0.0
        %650 = vmatpush2.msra.mxu0 0.0
        %651 = vmatprep.subr.mxu0 0.0
        %652 = vmatpush2.msra.mxu0 0.0
        %653 = vmatprep.subr.mxu0 0.0
        %654 = vmatpush2.msra.mxu0 0.0
        %655 = vmatprep.subr.mxu0 0.0
        %656 = vmatpush2.msra.mxu0 0.0
        %657 = vmatprep.subr.mxu0 0.0
        %658 = vmatpush2.msra.mxu0 0.0
        %659 = vmatprep.subr.mxu0 0.0
        %660 = vmatpush2.msra.mxu0 0.0
        %661 = vmatprep.subr.mxu0 0.0
        %662 = vmatpush2.msra.mxu0 0.0
        %663 = vmatprep.subr.mxu0 0.0
        %664 = vmatpush2.msra.mxu0 0.0
        %665 = vmatprep.subr.mxu0 0.0
        %666 = vmatpush2.msra.mxu0 0.0
        %667 = vmatprep.subr.mxu0 0.0
        %668 = vmatpush2.msra.mxu0 0.0
        %669 = vmatprep.subr.mxu0 0.0
        %670 = vmatpush2.msra.mxu0 0.0
        %671 = vmatprep.subr.mxu0 0.0
        %672 = vmatpush2.msra.mxu0 0.0
        %673 = vmatprep.subr.mxu0 0.0
        %674 = vmatpush2.msra.mxu0 0.0
        %675 = vmatprep.subr.mxu0 0.0
        %676 = vmatpush2.msra.mxu0 0.0
        %677 = vmatprep.subr.mxu0 0.0
        %678 = vmatpush2.msra.mxu0 0.0
        %679 = vmatprep.subr.mxu0 0.0
        %680 = vmatpush2.msra.mxu0 0.0
        %681 = vmatprep.mubr.f32.mxu0 0.0
        %682 = vmatmul.mubr.f32.gmra.mxu0 %v612
        %v683 = vpop.f32.mrf.mxu0
        %v684 = vadd.f32 0.0, %v683
        %v685 = vpop.f32.mrf.mxu0
        %686 = vdwg.mxu0
        %v687 = vadd.f32 %v608, %v684
        %s688 = scalar_lea.vmem %s259, %s529
        %v689 = vld [vmem:[%s688] sm:$0x3]
        %v691 = vsel %vm295, %v275, 0
        %v694 = vsel %vm299, %v689, 0
        %696 = vmatprep.subr.mxu0 0.0
        %697 = vmatpush1.msra.mxu0 0.0
        %698 = vmatprep.subr.mxu0 0.0
        %699 = vmatpush1.msra.mxu0 0.0
        %700 = vmatprep.subr.mxu0 0.0
        %701 = vmatpush1.msra.mxu0 0.0
        %702 = vmatprep.subr.mxu0 0.0
        %703 = vmatpush1.msra.mxu0 0.0
        %704 = vmatprep.subr.mxu0 0.0
        %705 = vmatpush1.msra.mxu0 0.0
        %706 = vmatprep.subr.mxu0 0.0
        %707 = vmatpush1.msra.mxu0 0.0
        %708 = vmatprep.subr.mxu0 0.0
        %709 = vmatpush1.msra.mxu0 0.0
        %710 = vmatprep.subr.mxu0 0.0
        %711 = vmatpush1.msra.mxu0 0.0
        %712 = vmatprep.subr.mxu0 0.0
        %713 = vmatpush1.msra.mxu0 0.0
        %714 = vmatprep.subr.mxu0 0.0
        %715 = vmatpush1.msra.mxu0 0.0
        %716 = vmatprep.subr.mxu0 0.0
        %717 = vmatpush1.msra.mxu0 0.0
        %718 = vmatprep.subr.mxu0 0.0
        %719 = vmatpush1.msra.mxu0 0.0
        %720 = vmatprep.subr.mxu0 0.0
        %721 = vmatpush1.msra.mxu0 0.0
        %722 = vmatprep.subr.mxu0 0.0
        %723 = vmatpush1.msra.mxu0 0.0
        %724 = vmatprep.subr.mxu0 0.0
        %725 = vmatpush1.msra.mxu0 0.0
        %726 = vmatprep.subr.mxu0 0.0
        %727 = vmatpush1.msra.mxu0 %v694
        %728 = vmatprep.subr.mxu0 0.0
        %729 = vmatpush2.msra.mxu0 0.0
        %730 = vmatprep.subr.mxu0 0.0
        %731 = vmatpush2.msra.mxu0 0.0
        %732 = vmatprep.subr.mxu0 0.0
        %733 = vmatpush2.msra.mxu0 0.0
        %734 = vmatprep.subr.mxu0 0.0
        %735 = vmatpush2.msra.mxu0 0.0
        %736 = vmatprep.subr.mxu0 0.0
        %737 = vmatpush2.msra.mxu0 0.0
        %738 = vmatprep.subr.mxu0 0.0
        %739 = vmatpush2.msra.mxu0 0.0
        %740 = vmatprep.subr.mxu0 0.0
        %741 = vmatpush2.msra.mxu0 0.0
        %742 = vmatprep.subr.mxu0 0.0
        %743 = vmatpush2.msra.mxu0 0.0
        %744 = vmatprep.subr.mxu0 0.0
        %745 = vmatpush2.msra.mxu0 0.0
        %746 = vmatprep.subr.mxu0 0.0
        %747 = vmatpush2.msra.mxu0 0.0
        %748 = vmatprep.subr.mxu0 0.0
        %749 = vmatpush2.msra.mxu0 0.0
        %750 = vmatprep.subr.mxu0 0.0
        %751 = vmatpush2.msra.mxu0 0.0
        %752 = vmatprep.subr.mxu0 0.0
        %753 = vmatpush2.msra.mxu0 0.0
        %754 = vmatprep.subr.mxu0 0.0
        %755 = vmatpush2.msra.mxu0 0.0
        %756 = vmatprep.subr.mxu0 0.0
        %757 = vmatpush2.msra.mxu0 0.0
        %758 = vmatprep.subr.mxu0 0.0
        %759 = vmatpush2.msra.mxu0 0.0
        %760 = vmatprep.mubr.f32.mxu0 0.0
        %761 = vmatmul.mubr.f32.gmra.mxu0 %v691
        %v762 = vpop.f32.mrf.mxu0
        %v763 = vadd.f32 0.0, %v762
        %v764 = vpop.f32.mrf.mxu0
        %765 = vdwg.mxu0
        %v766 = vadd.f32 %v687, %v763
        %s767 = sadd.s32 %s289, 2
        %s768 = smul.u32 %s767, 2
        %s769 = scalar_lea.vmem %s249, %s768
        %v770 = vld [vmem:[%s769] sm:$0x3]
        %v772 = vsel %vm295, %v277, 0
        %v775 = vsel %vm299, %v770, 0
        %777 = vmatprep.subr.mxu0 0.0
        %778 = vmatpush1.msra.mxu0 0.0
        %779 = vmatprep.subr.mxu0 0.0
        %780 = vmatpush1.msra.mxu0 0.0
        %781 = vmatprep.subr.mxu0 0.0
        %782 = vmatpush1.msra.mxu0 0.0
        %783 = vmatprep.subr.mxu0 0.0
        %784 = vmatpush1.msra.mxu0 0.0
        %785 = vmatprep.subr.mxu0 0.0
        %786 = vmatpush1.msra.mxu0 0.0
        %787 = vmatprep.subr.mxu0 0.0
        %788 = vmatpush1.msra.mxu0 0.0
        %789 = vmatprep.subr.mxu0 0.0
        %790 = vmatpush1.msra.mxu0 0.0
        %791 = vmatprep.subr.mxu0 0.0
        %792 = vmatpush1.msra.mxu0 0.0
        %793 = vmatprep.subr.mxu0 0.0
        %794 = vmatpush1.msra.mxu0 0.0
        %795 = vmatprep.subr.mxu0 0.0
        %796 = vmatpush1.msra.mxu0 0.0
        %797 = vmatprep.subr.mxu0 0.0
        %798 = vmatpush1.msra.mxu0 0.0
        %799 = vmatprep.subr.mxu0 0.0
        %800 = vmatpush1.msra.mxu0 0.0
        %801 = vmatprep.subr.mxu0 0.0
        %802 = vmatpush1.msra.mxu0 0.0
        %803 = vmatprep.subr.mxu0 0.0
        %804 = vmatpush1.msra.mxu0 0.0
        %805 = vmatprep.subr.mxu0 0.0
        %806 = vmatpush1.msra.mxu0 0.0
        %807 = vmatprep.subr.mxu0 0.0
        %808 = vmatpush1.msra.mxu0 %v775
        %809 = vmatprep.subr.mxu0 0.0
        %810 = vmatpush2.msra.mxu0 0.0
        %811 = vmatprep.subr.mxu0 0.0
        %812 = vmatpush2.msra.mxu0 0.0
        %813 = vmatprep.subr.mxu0 0.0
        %814 = vmatpush2.msra.mxu0 0.0
        %815 = vmatprep.subr.mxu0 0.0
        %816 = vmatpush2.msra.mxu0 0.0
        %817 = vmatprep.subr.mxu0 0.0
        %818 = vmatpush2.msra.mxu0 0.0
        %819 = vmatprep.subr.mxu0 0.0
        %820 = vmatpush2.msra.mxu0 0.0
        %821 = vmatprep.subr.mxu0 0.0
        %822 = vmatpush2.msra.mxu0 0.0
        %823 = vmatprep.subr.mxu0 0.0
        %824 = vmatpush2.msra.mxu0 0.0
        %825 = vmatprep.subr.mxu0 0.0
        %826 = vmatpush2.msra.mxu0 0.0
        %827 = vmatprep.subr.mxu0 0.0
        %828 = vmatpush2.msra.mxu0 0.0
        %829 = vmatprep.subr.mxu0 0.0
        %830 = vmatpush2.msra.mxu0 0.0
        %831 = vmatprep.subr.mxu0 0.0
        %832 = vmatpush2.msra.mxu0 0.0
        %833 = vmatprep.subr.mxu0 0.0
        %834 = vmatpush2.msra.mxu0 0.0
        %835 = vmatprep.subr.mxu0 0.0
        %836 = vmatpush2.msra.mxu0 0.0
        %837 = vmatprep.subr.mxu0 0.0
        %838 = vmatpush2.msra.mxu0 0.0
        %839 = vmatprep.subr.mxu0 0.0
        %840 = vmatpush2.msra.mxu0 0.0
        %841 = vmatprep.mubr.f32.mxu0 0.0
        %842 = vmatmul.mubr.f32.gmra.mxu0 %v772
        %v843 = vpop.f32.mrf.mxu0
        %v844 = vadd.f32 0.0, %v843
        %v845 = vpop.f32.mrf.mxu0
        %846 = vdwg.mxu0
        %v847 = vadd.f32 %v766, %v844
        %s848 = scalar_lea.vmem %s254, %s768
        %v849 = vld [vmem:[%s848] sm:$0x3]
        %v851 = vsel %vm295, %v279, 0
        %v854 = vsel %vm299, %v849, 0
        %856 = vmatprep.subr.mxu0 0.0
        %857 = vmatpush1.msra.mxu0 0.0
        %858 = vmatprep.subr.mxu0 0.0
        %859 = vmatpush1.msra.mxu0 0.0
        %860 = vmatprep.subr.mxu0 0.0
        %861 = vmatpush1.msra.mxu0 0.0
        %862 = vmatprep.subr.mxu0 0.0
        %863 = vmatpush1.msra.mxu0 0.0
        %864 = vmatprep.subr.mxu0 0.0
        %865 = vmatpush1.msra.mxu0 0.0
        %866 = vmatprep.subr.mxu0 0.0
        %867 = vmatpush1.msra.mxu0 0.0
        %868 = vmatprep.subr.mxu0 0.0
        %869 = vmatpush1.msra.mxu0 0.0
        %870 = vmatprep.subr.mxu0 0.0
        %871 = vmatpush1.msra.mxu0 0.0
        %872 = vmatprep.subr.mxu0 0.0
        %873 = vmatpush1.msra.mxu0 0.0
        %874 = vmatprep.subr.mxu0 0.0
        %875 = vmatpush1.msra.mxu0 0.0
        %876 = vmatprep.subr.mxu0 0.0
        %877 = vmatpush1.msra.mxu0 0.0
        %878 = vmatprep.subr.mxu0 0.0
        %879 = vmatpush1.msra.mxu0 0.0
        %880 = vmatprep.subr.mxu0 0.0
        %881 = vmatpush1.msra.mxu0 0.0
        %882 = vmatprep.subr.mxu0 0.0
        %883 = vmatpush1.msra.mxu0 0.0
        %884 = vmatprep.subr.mxu0 0.0
        %885 = vmatpush1.msra.mxu0 0.0
        %886 = vmatprep.subr.mxu0 0.0
        %887 = vmatpush1.msra.mxu0 %v854
        %888 = vmatprep.subr.mxu0 0.0
        %889 = vmatpush2.msra.mxu0 0.0
        %890 = vmatprep.subr.mxu0 0.0
        %891 = vmatpush2.msra.mxu0 0.0
        %892 = vmatprep.subr.mxu0 0.0
        %893 = vmatpush2.msra.mxu0 0.0
        %894 = vmatprep.subr.mxu0 0.0
        %895 = vmatpush2.msra.mxu0 0.0
        %896 = vmatprep.subr.mxu0 0.0
        %897 = vmatpush2.msra.mxu0 0.0
        %898 = vmatprep.subr.mxu0 0.0
        %899 = vmatpush2.msra.mxu0 0.0
        %900 = vmatprep.subr.mxu0 0.0
        %901 = vmatpush2.msra.mxu0 0.0
        %902 = vmatprep.subr.mxu0 0.0
        %903 = vmatpush2.msra.mxu0 0.0
        %904 = vmatprep.subr.mxu0 0.0
        %905 = vmatpush2.msra.mxu0 0.0
        %906 = vmatprep.subr.mxu0 0.0
        %907 = vmatpush2.msra.mxu0 0.0
        %908 = vmatprep.subr.mxu0 0.0
        %909 = vmatpush2.msra.mxu0 0.0
        %910 = vmatprep.subr.mxu0 0.0
        %911 = vmatpush2.msra.mxu0 0.0
        %912 = vmatprep.subr.mxu0 0.0
        %913 = vmatpush2.msra.mxu0 0.0
        %914 = vmatprep.subr.mxu0 0.0
        %915 = vmatpush2.msra.mxu0 0.0
        %916 = vmatprep.subr.mxu0 0.0
        %917 = vmatpush2.msra.mxu0 0.0
        %918 = vmatprep.subr.mxu0 0.0
        %919 = vmatpush2.msra.mxu0 0.0
        %920 = vmatprep.mubr.f32.mxu0 0.0
        %921 = vmatmul.mubr.f32.gmra.mxu0 %v851
        %v922 = vpop.f32.mrf.mxu0
        %v923 = vadd.f32 0.0, %v922
        %v924 = vpop.f32.mrf.mxu0
        %925 = vdwg.mxu0
        %v926 = vadd.f32 %v847, %v923
        %s927 = scalar_lea.vmem %s259, %s768
        %v928 = vld [vmem:[%s927] sm:$0x3]
        %v930 = vsel %vm295, %v281, 0
        %v933 = vsel %vm299, %v928, 0
        %935 = vmatprep.subr.mxu0 0.0
        %936 = vmatpush1.msra.mxu0 0.0
        %937 = vmatprep.subr.mxu0 0.0
        %938 = vmatpush1.msra.mxu0 0.0
        %939 = vmatprep.subr.mxu0 0.0
        %940 = vmatpush1.msra.mxu0 0.0
        %941 = vmatprep.subr.mxu0 0.0
        %942 = vmatpush1.msra.mxu0 0.0
        %943 = vmatprep.subr.mxu0 0.0
        %944 = vmatpush1.msra.mxu0 0.0
        %945 = vmatprep.subr.mxu0 0.0
        %946 = vmatpush1.msra.mxu0 0.0
        %947 = vmatprep.subr.mxu0 0.0
        %948 = vmatpush1.msra.mxu0 0.0
        %949 = vmatprep.subr.mxu0 0.0
        %950 = vmatpush1.msra.mxu0 0.0
        %951 = vmatprep.subr.mxu0 0.0
        %952 = vmatpush1.msra.mxu0 0.0
        %953 = vmatprep.subr.mxu0 0.0
        %954 = vmatpush1.msra.mxu0 0.0
        %955 = vmatprep.subr.mxu0 0.0
        %956 = vmatpush1.msra.mxu0 0.0
        %957 = vmatprep.subr.mxu0 0.0
        %958 = vmatpush1.msra.mxu0 0.0
        %959 = vmatprep.subr.mxu0 0.0
        %960 = vmatpush1.msra.mxu0 0.0
        %961 = vmatprep.subr.mxu0 0.0
        %962 = vmatpush1.msra.mxu0 0.0
        %963 = vmatprep.subr.mxu0 0.0
        %964 = vmatpush1.msra.mxu0 0.0
        %965 = vmatprep.subr.mxu0 0.0
        %966 = vmatpush1.msra.mxu0 %v933
        %967 = vmatprep.subr.mxu0 0.0
        %968 = vmatpush2.msra.mxu0 0.0
        %969 = vmatprep.subr.mxu0 0.0
        %970 = vmatpush2.msra.mxu0 0.0
        %971 = vmatprep.subr.mxu0 0.0
        %972 = vmatpush2.msra.mxu0 0.0
        %973 = vmatprep.subr.mxu0 0.0
        %974 = vmatpush2.msra.mxu0 0.0
        %975 = vmatprep.subr.mxu0 0.0
        %976 = vmatpush2.msra.mxu0 0.0
        %977 = vmatprep.subr.mxu0 0.0
        %978 = vmatpush2.msra.mxu0 0.0
        %979 = vmatprep.subr.mxu0 0.0
        %980 = vmatpush2.msra.mxu0 0.0
        %981 = vmatprep.subr.mxu0 0.0
        %982 = vmatpush2.msra.mxu0 0.0
        %983 = vmatprep.subr.mxu0 0.0
        %984 = vmatpush2.msra.mxu0 0.0
        %985 = vmatprep.subr.mxu0 0.0
        %986 = vmatpush2.msra.mxu0 0.0
        %987 = vmatprep.subr.mxu0 0.0
        %988 = vmatpush2.msra.mxu0 0.0
        %989 = vmatprep.subr.mxu0 0.0
        %990 = vmatpush2.msra.mxu0 0.0
        %991 = vmatprep.subr.mxu0 0.0
        %992 = vmatpush2.msra.mxu0 0.0
        %993 = vmatprep.subr.mxu0 0.0
        %994 = vmatpush2.msra.mxu0 0.0
        %995 = vmatprep.subr.mxu0 0.0
        %996 = vmatpush2.msra.mxu0 0.0
        %997 = vmatprep.subr.mxu0 0.0
        %998 = vmatpush2.msra.mxu0 0.0
        %999 = vmatprep.mubr.f32.mxu0 0.0
        %1000 = vmatmul.mubr.f32.gmra.mxu0 %v930
        %v1001 = vpop.f32.mrf.mxu0
        %v1002 = vadd.f32 0.0, %v1001
        %v1003 = vpop.f32.mrf.mxu0
        %1004 = vdwg.mxu0
        %v1005 = vadd.f32 %v926, %v1002
        %1007 = vset.pattern.permute.xlu0 0
        %1008 = vperm.xlu0 %1007, %v282
        %v1009 = vpop.permute.xlu0 %1008
        %v1011 = vadd.f32 %v1005, %v1009
        %vm1012 = vcmp.ge.f32.partialorder %v1011, 0.0
        %v1013 = vmul.f32 %v1011, 0.2
        %v1014 = vsel %vm1012, %v1011, %v1013
        %s1015 = smul.u32 %s284, 4
        %s1016 = scalar_lea.vmem %s264, %s1015
        %vm1017 = vcmask 52224
        %1018 = vst.msk [vmem:[%s1016] sm:$0xf] %vm1017, %v1014
      $region45: #{a_call__.3} parent=39 // loop_footer
        %s288 = sadd.s32 1, %s284
      $region46: #{a_call__.3} parent=39 // loop_footer_branch
        %283 = sbr.rel target = $region42
      $region47: #{a_call__.3} parent=39 // loop_exit
        _
      %p1019 = scmp.lt.s32.totalorder %s16, 1
      %s1020 = scalar_select %p1019, %s16, 1
      %s1021 = smul.addr %s1020, 7
      %s1022 = smul.addr %s1021, 4
      %s1023 = scalar_lea.vmem %s5, %s1022
      // Predicated region
      $region48: #{a_call__.3} parent=39 // pred_check
        %p1024 = pneg %p154
      $region49: #{a_call__.3} parent=39 // pred_check_branch
        %1026 = sbr.rel (%p1024) target = $region51
      $region50: #{a_call__.3} parent=39 // pred_region
        _
      $region51: #{a_call__.3} parent=39 // pred_fallthru
        _
    $region40: #{a_call__.3} parent=5 // pred_fallthru
      _
    %p1027 = scmp.le.s32.totalorder 2, %s11
    // Predicated region
    $region52: #{a_call__.3} parent=5 // pred_check
      %p1028 = pneg %p1027
    $region53: #{a_call__.3} parent=5 // pred_check_branch
      %1030 = sbr.rel (%p1028) target = $region55
    $region54: #{a_call__.3} parent=5 // pred_region
      %s1031 = ssub.s32 %s11, 2
      // Predicated region
      $region56: #{a_call__.3} parent=54 // pred_check
        %p1032 = pneg %p160
      $region57: #{a_call__.3} parent=54 // pred_check_branch
        %1034 = sbr.rel (%p1032) target = $region59
      $region58: #{a_call__.3} parent=54 // pred_region
        %p1035 = scmp.lt.s32.totalorder %s17, 1
        %s1036 = scalar_select %p1035, %s17, 1
        %s1037 = smul.addr %s1036, 7
        %s1038 = smul.addr %s1037, 4
        %s1039 = scalar_lea.vmem %s5, %s1038
      $region59: #{a_call__.3} parent=54 // pred_fallthru
        _
    $region55: #{a_call__.3} parent=5 // pred_fallthru
      _
  $region6: #{a_call__.3} parent=0 // loop_footer
    %s15 = sadd.s32 1, %s11
  $region7: #{a_call__.3} parent=0 // loop_footer_branch
    %10 = sbr.rel target = $region3
  $region8: #{a_call__.3} parent=0 // loop_exit
    _

// kernel: a_call__.4
$region0: #{a_call__.4}
  #allocation0 [shape = 'u32[]', space=smem, size = 0x4, offset = 0x4, fixed_abs, tag = 'smem constant byte address 0x4 - core index']
  #allocation1 [shape = 'u32[144,128]{1,0:T(1,128)}', space=vmem, size = 0x12000, scoped, tag = 'internal scratch']
  %s0 = inlined_call_operand.vmem [shape: f32[3,3,8,4], index: 0, kind: input, shape index: {}]
  %s1 = inlined_call_operand.vmem [shape: f32[8,1], index: 1, kind: input, shape index: {}]
  %s2 = inlined_call_operand.vmem [shape: f32[2,7,4,3], index: 2, kind: input, shape index: {}]
  %s3 = inlined_call_operand.vmem [shape: f32[2,7,4,3], index: 3, kind: input, shape index: {}]
  %s4 = inlined_call_operand.vmem [shape: f32[2,7,4,3], index: 4, kind: input, shape index: {}]
  %s5 = inlined_call_operand.vmem [shape: f32[2,3,8,3], index: 5, kind: output, shape index: {}]
  %s6 = sld [smem:[#allocation0]]
  $region60: #{a_call__.4} parent=0
    _
  %s8 = ssub.s32 1, %s6
  %s9 = scalar_select 0, %s8, %s6
  loop: start=0, step=1, limit=4
  $region2: #{a_call__.4} parent=0 // loop_pre_header
    _
  $region3: #{a_call__.4} parent=0 // loop_header
    %s11 = sphi 0, %s15
    %p12 = scmp.ge.s32.totalorder %s11, 4
    %s19 = sphi 0, %s19
    %s21 = sphi 0, %s19
    %s22 = sphi 0, %s21
    %s36 = sphi 0, %s22
    %s40 = sphi 0, %s40
    %s42 = sphi 0, %s40
    %s43 = sphi 0, %s42
    %s57 = sphi 0, %s43
    %s63 = sphi 0, %s65
    %s66 = sphi 0, %s63
    %s67 = sphi 0, %s66
    %s83 = sphi 0, %s67
    %s89 = sphi 0, %s91
    %s92 = sphi 0, %s89
    %s93 = sphi 0, %s92
    %s109 = sphi 0, %s93
    %s115 = sphi 0, %s117
    %s118 = sphi 0, %s115
    %s119 = sphi 0, %s118
    %s135 = sphi 0, %s119
    %s141 = sphi 0, %s143
    %s144 = sphi 0, %s141
    %s145 = sphi 0, %s144
    %s161 = sphi 0, %s145
  $region4: #{a_call__.4} parent=0 // loop_header_branch
    %14 = sbr.rel (%p12) target = $region8
  $region5: #{a_call__.4} parent=0 // loop_body
    %s16 = ssub.s32 %s11, 1
    %s17 = ssub.s32 %s11, 2
    %s18 = sadd.s32 %s11, 1
    %s20 = sadd.s32 %s19, 1
    %p23 = scmp.eq.s32.totalorder %s11, 1
    %p24 = scmp.ne.s32.totalorder %s19, %s21
    %p25 = scmp.eq.s32.totalorder %s11, 0
    %p26 = por %p24, %p25
    %p27 = scmp.ne.s32.totalorder %s19, %s21
    %p28 = scmp.eq.s32.totalorder %s16, 1
    %p29 = por %p27, %p28
    %p30 = scmp.ne.s32.totalorder %s21, %s22
    %p31 = scmp.eq.s32.totalorder %s16, 0
    %p32 = por %p30, %p31
    %p33 = scmp.ne.s32.totalorder %s21, %s22
    %p34 = scmp.eq.s32.totalorder %s17, 1
    %p35 = por %p33, %p34
    %p37 = scmp.ne.s32.totalorder %s22, %s36
    %p38 = scmp.eq.s32.totalorder %s17, 0
    %p39 = por %p37, %p38
    %s41 = sadd.s32 %s40, 1
    %p44 = scmp.eq.s32.totalorder %s11, 1
    %p45 = scmp.ne.s32.totalorder %s40, %s42
    %p46 = scmp.eq.s32.totalorder %s11, 0
    %p47 = por %p45, %p46
    %p48 = scmp.ne.s32.totalorder %s40, %s42
    %p49 = scmp.eq.s32.totalorder %s16, 1
    %p50 = por %p48, %p49
    %p51 = scmp.ne.s32.totalorder %s42, %s43
    %p52 = scmp.eq.s32.totalorder %s16, 0
    %p53 = por %p51, %p52
    %p54 = scmp.ne.s32.totalorder %s42, %s43
    %p55 = scmp.eq.s32.totalorder %s17, 1
    %p56 = por %p54, %p55
    %p58 = scmp.ne.s32.totalorder %s43, %s57
    %p59 = scmp.eq.s32.totalorder %s17, 0
    %p60 = por %p58, %p59
    %s61 = ssub.s32 %s11, %s18
    %p62 = scmp.eq.s32.totalorder %s61, 0
    %s64 = sadd.s32 %s63, 1
    %s65 = scalar_select %p62, %s63, %s64
    %p68 = pneg %p62
    %p69 = scmp.eq.s32.totalorder %s11, 1
    %p70 = por %p68, %p69
    %p71 = scmp.ne.s32.totalorder %s63, %s66
    %p72 = scmp.eq.s32.totalorder %s11, 0
    %p73 = por %p71, %p72
    %p74 = scmp.ne.s32.totalorder %s63, %s66
    %p75 = scmp.eq.s32.totalorder %s16, 1
    %p76 = por %p74, %p75
    %p77 = scmp.ne.s32.totalorder %s66, %s67
    %p78 = scmp.eq.s32.totalorder %s16, 0
    %p79 = por %p77, %p78
    %p80 = scmp.ne.s32.totalorder %s66, %s67
    %p81 = scmp.eq.s32.totalorder %s17, 1
    %p82 = por %p80, %p81
    %p84 = scmp.ne.s32.totalorder %s67, %s83
    %p85 = scmp.eq.s32.totalorder %s17, 0
    %p86 = por %p84, %p85
    %s87 = ssub.s32 %s11, %s18
    %p88 = scmp.eq.s32.totalorder %s87, 0
    %s90 = sadd.s32 %s89, 1
    %s91 = scalar_select %p88, %s89, %s90
    %p94 = pneg %p88
    %p95 = scmp.eq.s32.totalorder %s11, 1
    %p96 = por %p94, %p95
    %p97 = scmp.ne.s32.totalorder %s89, %s92
    %p98 = scmp.eq.s32.totalorder %s11, 0
    %p99 = por %p97, %p98
    %p100 = scmp.ne.s32.totalorder %s89, %s92
    %p101 = scmp.eq.s32.totalorder %s16, 1
    %p102 = por %p100, %p101
    %p103 = scmp.ne.s32.totalorder %s92, %s93
    %p104 = scmp.eq.s32.totalorder %s16, 0
    %p105 = por %p103, %p104
    %p106 = scmp.ne.s32.totalorder %s92, %s93
    %p107 = scmp.eq.s32.totalorder %s17, 1
    %p108 = por %p106, %p107
    %p110 = scmp.ne.s32.totalorder %s93, %s109
    %p111 = scmp.eq.s32.totalorder %s17, 0
    %p112 = por %p110, %p111
    %s113 = ssub.s32 %s11, %s18
    %p114 = scmp.eq.s32.totalorder %s113, 0
    %s116 = sadd.s32 %s115, 1
    %s117 = scalar_select %p114, %s115, %s116
    %p120 = pneg %p114
    %p121 = scmp.eq.s32.totalorder %s11, 1
    %p122 = por %p120, %p121
    %p123 = scmp.ne.s32.totalorder %s115, %s118
    %p124 = scmp.eq.s32.totalorder %s11, 0
    %p125 = por %p123, %p124
    %p126 = scmp.ne.s32.totalorder %s115, %s118
    %p127 = scmp.eq.s32.totalorder %s16, 1
    %p128 = por %p126, %p127
    %p129 = scmp.ne.s32.totalorder %s118, %s119
    %p130 = scmp.eq.s32.totalorder %s16, 0
    %p131 = por %p129, %p130
    %p132 = scmp.ne.s32.totalorder %s118, %s119
    %p133 = scmp.eq.s32.totalorder %s17, 1
    %p134 = por %p132, %p133
    %p136 = scmp.ne.s32.totalorder %s119, %s135
    %p137 = scmp.eq.s32.totalorder %s17, 0
    %p138 = por %p136, %p137
    %s139 = ssub.s32 %s11, %s18
    %p140 = scmp.eq.s32.totalorder %s139, 0
    %s142 = sadd.s32 %s141, 1
    %s143 = scalar_select %p140, %s141, %s142
    %p146 = pneg %p140
    %p147 = scmp.eq.s32.totalorder %s11, 1
    %p148 = por %p146, %p147
    %p149 = scmp.ne.s32.totalorder %s141, %s144
    %p150 = scmp.eq.s32.totalorder %s11, 0
    %p151 = por %p149, %p150
    %p152 = scmp.ne.s32.totalorder %s141, %s144
    %p153 = scmp.eq.s32.totalorder %s16, 1
    %p154 = por %p152, %p153
    %p155 = scmp.ne.s32.totalorder %s144, %s145
    %p156 = scmp.eq.s32.totalorder %s16, 0
    %p157 = por %p155, %p156
    %p158 = scmp.ne.s32.totalorder %s144, %s145
    %p159 = scmp.eq.s32.totalorder %s17, 1
    %p160 = por %p158, %p159
    %p162 = scmp.ne.s32.totalorder %s145, %s161
    %p163 = scmp.eq.s32.totalorder %s17, 0
    %p164 = por %p162, %p163
    %p165 = scmp.le.s32.totalorder 1, %s11
    %p166 = scmp.lt.s32.totalorder %s11, 3
    %p167 = pnand %p165, %p166
    %p168 = pneg %p167
    // Predicated region
    $region9: #{a_call__.4} parent=5 // pred_check
      _
    $region10: #{a_call__.4} parent=5 // pred_check_branch
      %170 = sbr.rel (%p167) target = $region12
    $region11: #{a_call__.4} parent=5 // pred_region
      %s171 = ssub.s32 %s11, 1
      // Predicated region
      $region13: #{a_call__.4} parent=11 // pred_check
        %p172 = pneg %p32
      $region14: #{a_call__.4} parent=11 // pred_check_branch
        %174 = sbr.rel (%p172) target = $region16
      $region15: #{a_call__.4} parent=11 // pred_region
        _
      $region16: #{a_call__.4} parent=11 // pred_fallthru
        _
      // Predicated region
      $region17: #{a_call__.4} parent=11 // pred_check
        %p175 = pneg %p53
      $region18: #{a_call__.4} parent=11 // pred_check_branch
        %177 = sbr.rel (%p175) target = $region20
      $region19: #{a_call__.4} parent=11 // pred_region
        _
      $region20: #{a_call__.4} parent=11 // pred_fallthru
        _
    $region12: #{a_call__.4} parent=5 // pred_fallthru
      _
    %p178 = scmp.lt.s32.totalorder %s11, 2
    // Predicated region
    $region21: #{a_call__.4} parent=5 // pred_check
      %p179 = pneg %p178
    $region22: #{a_call__.4} parent=5 // pred_check_branch
      %181 = sbr.rel (%p179) target = $region24
    $region23: #{a_call__.4} parent=5 // pred_region
      // Predicated region
      $region25: #{a_call__.4} parent=23 // pred_check
        %p182 = pneg %p73
      $region26: #{a_call__.4} parent=23 // pred_check_branch
        %184 = sbr.rel (%p182) target = $region28
      $region27: #{a_call__.4} parent=23 // pred_region
        %p185 = scmp.lt.s32.totalorder %s11, 1
        %s186 = scalar_select %p185, %s11, 1
        %s187 = smul.addr %s186, 7
        %s188 = smul.addr %s187, 4
        %s189 = scalar_lea.vmem %s2, %s188
      $region28: #{a_call__.4} parent=23 // pred_fallthru
        _
      // Predicated region
      $region29: #{a_call__.4} parent=23 // pred_check
        %p190 = pneg %p99
      $region30: #{a_call__.4} parent=23 // pred_check_branch
        %192 = sbr.rel (%p190) target = $region32
      $region31: #{a_call__.4} parent=23 // pred_region
        %p193 = scmp.lt.s32.totalorder %s11, 1
        %s194 = scalar_select %p193, %s11, 1
        %s195 = smul.addr %s194, 7
        %s196 = smul.addr %s195, 4
        %s197 = scalar_lea.vmem %s3, %s196
      $region32: #{a_call__.4} parent=23 // pred_fallthru
        _
      // Predicated region
      $region33: #{a_call__.4} parent=23 // pred_check
        %p198 = pneg %p125
      $region34: #{a_call__.4} parent=23 // pred_check_branch
        %200 = sbr.rel (%p198) target = $region36
      $region35: #{a_call__.4} parent=23 // pred_region
        %p201 = scmp.lt.s32.totalorder %s11, 1
        %s202 = scalar_select %p201, %s11, 1
        %s203 = smul.addr %s202, 7
        %s204 = smul.addr %s203, 4
        %s205 = scalar_lea.vmem %s4, %s204
      $region36: #{a_call__.4} parent=23 // pred_fallthru
        _
    $region24: #{a_call__.4} parent=5 // pred_fallthru
      _
    %p206 = scmp.le.s32.totalorder 1, %s11
    %p207 = scmp.lt.s32.totalorder %s11, 3
    %p208 = pnand %p206, %p207
    %p209 = pneg %p208
    // Predicated region
    $region37: #{a_call__.4} parent=5 // pred_check
      _
    $region38: #{a_call__.4} parent=5 // pred_check_branch
      %211 = sbr.rel (%p208) target = $region40
    $region39: #{a_call__.4} parent=5 // pred_region
      %s212 = ssub.s32 %s11, 1
      %p213 = pneg %p32
      %p214 = pneg %p29
      %p215 = pneg %p53
      %p216 = pneg %p50
      %p217 = scmp.lt.s32.totalorder %s16, 1
      %s218 = scalar_select %p217, %s16, 1
      %s219 = smul.addr %s218, 7
      %s220 = smul.addr %s219, 4
      %s221 = scalar_lea.vmem %s2, %s220
      %p222 = pneg %p79
      %p223 = pneg %p76
      %p224 = scmp.lt.s32.totalorder %s16, 1
      %s225 = scalar_select %p224, %s16, 1
      %s226 = smul.addr %s225, 7
      %s227 = smul.addr %s226, 4
      %s228 = scalar_lea.vmem %s3, %s227
      %p229 = pneg %p105
      %p230 = pneg %p102
      %p231 = scmp.lt.s32.totalorder %s16, 1
      %s232 = scalar_select %p231, %s16, 1
      %s233 = smul.addr %s232, 7
      %s234 = smul.addr %s233, 4
      %s235 = scalar_lea.vmem %s4, %s234
      %p236 = pneg %p131
      %p237 = pneg %p128
      %p238 = pneg %p157
      %p239 = pneg %p154
      %p240 = scmp.lt.s32.totalorder %s16, 1
      %s241 = scalar_select %p240, %s16, 1
      %s242 = smul.addr %s241, 3
      %s243 = smul.addr %s242, 8
      %s244 = scalar_lea.vmem %s5, %s243
      %p245 = scmp.lt.s32.totalorder %s16, 1
      %s246 = scalar_select %p245, %s16, 1
      %s247 = smul.addr %s246, 7
      %s248 = smul.addr %s247, 4
      %s249 = scalar_lea.vmem %s2, %s248
      %p250 = scmp.lt.s32.totalorder %s16, 1
      %s251 = scalar_select %p250, %s16, 1
      %s252 = smul.addr %s251, 7
      %s253 = smul.addr %s252, 4
      %s254 = scalar_lea.vmem %s3, %s253
      %p255 = scmp.lt.s32.totalorder %s16, 1
      %s256 = scalar_select %p255, %s16, 1
      %s257 = smul.addr %s256, 7
      %s258 = smul.addr %s257, 4
      %s259 = scalar_lea.vmem %s4, %s258
      %p260 = scmp.lt.s32.totalorder %s16, 1
      %s261 = scalar_select %p260, %s16, 1
      %s262 = smul.addr %s261, 3
      %s263 = smul.addr %s262, 8
      %s264 = scalar_lea.vmem %s5, %s263
      %v265 = vld [vmem:[%s0] sm:$0xff]
      %s266 = scalar_lea.vmem %s0, 8
      %v267 = vld [vmem:[%s266] sm:$0xff]
      %s268 = scalar_lea.vmem %s0, 16
      %v269 = vld [vmem:[%s268] sm:$0xff]
      %s270 = scalar_lea.vmem %s0, 24
      %v271 = vld [vmem:[%s270] sm:$0xff]
      %s272 = scalar_lea.vmem %s0, 32
      %v273 = vld [vmem:[%s272] sm:$0xff]
      %s274 = scalar_lea.vmem %s0, 40
      %v275 = vld [vmem:[%s274] sm:$0xff]
      %s276 = scalar_lea.vmem %s0, 48
      %v277 = vld [vmem:[%s276] sm:$0xff]
      %s278 = scalar_lea.vmem %s0, 56
      %v279 = vld [vmem:[%s278] sm:$0xff]
      %s280 = scalar_lea.vmem %s0, 64
      %v281 = vld [vmem:[%s280] sm:$0xff]
      %v282 = vld [vmem:[%s1] sm:$0xff]
      loop: start=0, step=1, limit=3
      $region41: #{a_call__.4} parent=39 // loop_pre_header
        _
      $region42: #{a_call__.4} parent=39 // loop_header
        %s284 = sphi 0, %s288
        %p285 = scmp.ge.s32.totalorder %s284, 3
      $region43: #{a_call__.4} parent=39 // loop_header_branch
        %287 = sbr.rel (%p285) target = $region47
      $region44: #{a_call__.4} parent=39 // loop_body
        %s289 = smul.u32 %s284, 2
        %s290 = smul.u32 %s289, 4
        %s291 = scalar_lea.vmem %s249, %s290
        %v292 = vld [vmem:[%s291] sm:$0xf]
        %s293 = scalar_lea.vmem %s254, %s290
        %v294 = vld [vmem:[%s293] sm:$0xf]
        %vm295 = vcmask 31744
        %v297 = vsel %vm295, %v267, 0
        %vm299 = vcmask 1043456
        %v301 = vsel %vm299, %v294, 0
        %303 = vmatprep.subr.mxu0 0.0
        %304 = vmatpush1.msra.mxu0 0.0
        %305 = vmatprep.subr.mxu0 0.0
        %306 = vmatpush1.msra.mxu0 0.0
        %307 = vmatprep.subr.mxu0 0.0
        %308 = vmatpush1.msra.mxu0 0.0
        %309 = vmatprep.subr.mxu0 0.0
        %310 = vmatpush1.msra.mxu0 0.0
        %311 = vmatprep.subr.mxu0 0.0
        %312 = vmatpush1.msra.mxu0 0.0
        %313 = vmatprep.subr.mxu0 0.0
        %314 = vmatpush1.msra.mxu0 0.0
        %315 = vmatprep.subr.mxu0 0.0
        %316 = vmatpush1.msra.mxu0 0.0
        %317 = vmatprep.subr.mxu0 0.0
        %318 = vmatpush1.msra.mxu0 0.0
        %319 = vmatprep.subr.mxu0 0.0
        %320 = vmatpush1.msra.mxu0 0.0
        %321 = vmatprep.subr.mxu0 0.0
        %322 = vmatpush1.msra.mxu0 0.0
        %323 = vmatprep.subr.mxu0 0.0
        %324 = vmatpush1.msra.mxu0 0.0
        %325 = vmatprep.subr.mxu0 0.0
        %326 = vmatpush1.msra.mxu0 0.0
        %327 = vmatprep.subr.mxu0 0.0
        %328 = vmatpush1.msra.mxu0 0.0
        %329 = vmatprep.subr.mxu0 0.0
        %330 = vmatpush1.msra.mxu0 0.0
        %331 = vmatprep.subr.mxu0 0.0
        %332 = vmatpush1.msra.mxu0 0.0
        %333 = vmatprep.subr.mxu0 0.0
        %334 = vmatpush1.msra.mxu0 %v301
        %335 = vmatprep.subr.mxu0 0.0
        %336 = vmatpush2.msra.mxu0 0.0
        %337 = vmatprep.subr.mxu0 0.0
        %338 = vmatpush2.msra.mxu0 0.0
        %339 = vmatprep.subr.mxu0 0.0
        %340 = vmatpush2.msra.mxu0 0.0
        %341 = vmatprep.subr.mxu0 0.0
        %342 = vmatpush2.msra.mxu0 0.0
        %343 = vmatprep.subr.mxu0 0.0
        %344 = vmatpush2.msra.mxu0 0.0
        %345 = vmatprep.subr.mxu0 0.0
        %346 = vmatpush2.msra.mxu0 0.0
        %347 = vmatprep.subr.mxu0 0.0
        %348 = vmatpush2.msra.mxu0 0.0
        %349 = vmatprep.subr.mxu0 0.0
        %350 = vmatpush2.msra.mxu0 0.0
        %351 = vmatprep.subr.mxu0 0.0
        %352 = vmatpush2.msra.mxu0 0.0
        %353 = vmatprep.subr.mxu0 0.0
        %354 = vmatpush2.msra.mxu0 0.0
        %355 = vmatprep.subr.mxu0 0.0
        %356 = vmatpush2.msra.mxu0 0.0
        %357 = vmatprep.subr.mxu0 0.0
        %358 = vmatpush2.msra.mxu0 0.0
        %359 = vmatprep.subr.mxu0 0.0
        %360 = vmatpush2.msra.mxu0 0.0
        %361 = vmatprep.subr.mxu0 0.0
        %362 = vmatpush2.msra.mxu0 0.0
        %363 = vmatprep.subr.mxu0 0.0
        %364 = vmatpush2.msra.mxu0 0.0
        %365 = vmatprep.subr.mxu0 0.0
        %366 = vmatpush2.msra.mxu0 0.0
        %367 = vmatprep.mubr.f32.mxu0 0.0
        %368 = vmatmul.mubr.f32.gmra.mxu0 %v297
        %v369 = vpop.f32.mrf.mxu0
        %v370 = vadd.f32 0.0, %v369
        %v371 = vpop.f32.mrf.mxu0
        %372 = vdwg.mxu0
        %v374 = vsel %vm295, %v265, 0
        %v377 = vsel %vm299, %v292, 0
        %379 = vmatprep.subr.mxu0 0.0
        %380 = vmatpush1.msra.mxu0 0.0
        %381 = vmatprep.subr.mxu0 0.0
        %382 = vmatpush1.msra.mxu0 0.0
        %383 = vmatprep.subr.mxu0 0.0
        %384 = vmatpush1.msra.mxu0 0.0
        %385 = vmatprep.subr.mxu0 0.0
        %386 = vmatpush1.msra.mxu0 0.0
        %387 = vmatprep.subr.mxu0 0.0
        %388 = vmatpush1.msra.mxu0 0.0
        %389 = vmatprep.subr.mxu0 0.0
        %390 = vmatpush1.msra.mxu0 0.0
        %391 = vmatprep.subr.mxu0 0.0
        %392 = vmatpush1.msra.mxu0 0.0
        %393 = vmatprep.subr.mxu0 0.0
        %394 = vmatpush1.msra.mxu0 0.0
        %395 = vmatprep.subr.mxu0 0.0
        %396 = vmatpush1.msra.mxu0 0.0
        %397 = vmatprep.subr.mxu0 0.0
        %398 = vmatpush1.msra.mxu0 0.0
        %399 = vmatprep.subr.mxu0 0.0
        %400 = vmatpush1.msra.mxu0 0.0
        %401 = vmatprep.subr.mxu0 0.0
        %402 = vmatpush1.msra.mxu0 0.0
        %403 = vmatprep.subr.mxu0 0.0
        %404 = vmatpush1.msra.mxu0 0.0
        %405 = vmatprep.subr.mxu0 0.0
        %406 = vmatpush1.msra.mxu0 0.0
        %407 = vmatprep.subr.mxu0 0.0
        %408 = vmatpush1.msra.mxu0 0.0
        %409 = vmatprep.subr.mxu0 0.0
        %410 = vmatpush1.msra.mxu0 %v377
        %411 = vmatprep.subr.mxu0 0.0
        %412 = vmatpush2.msra.mxu0 0.0
        %413 = vmatprep.subr.mxu0 0.0
        %414 = vmatpush2.msra.mxu0 0.0
        %415 = vmatprep.subr.mxu0 0.0
        %416 = vmatpush2.msra.mxu0 0.0
        %417 = vmatprep.subr.mxu0 0.0
        %418 = vmatpush2.msra.mxu0 0.0
        %419 = vmatprep.subr.mxu0 0.0
        %420 = vmatpush2.msra.mxu0 0.0
        %421 = vmatprep.subr.mxu0 0.0
        %422 = vmatpush2.msra.mxu0 0.0
        %423 = vmatprep.subr.mxu0 0.0
        %424 = vmatpush2.msra.mxu0 0.0
        %425 = vmatprep.subr.mxu0 0.0
        %426 = vmatpush2.msra.mxu0 0.0
        %427 = vmatprep.subr.mxu0 0.0
        %428 = vmatpush2.msra.mxu0 0.0
        %429 = vmatprep.subr.mxu0 0.0
        %430 = vmatpush2.msra.mxu0 0.0
        %431 = vmatprep.subr.mxu0 0.0
        %432 = vmatpush2.msra.mxu0 0.0
        %433 = vmatprep.subr.mxu0 0.0
        %434 = vmatpush2.msra.mxu0 0.0
        %435 = vmatprep.subr.mxu0 0.0
        %436 = vmatpush2.msra.mxu0 0.0
        %437 = vmatprep.subr.mxu0 0.0
        %438 = vmatpush2.msra.mxu0 0.0
        %439 = vmatprep.subr.mxu0 0.0
        %440 = vmatpush2.msra.mxu0 0.0
        %441 = vmatprep.subr.mxu0 0.0
        %442 = vmatpush2.msra.mxu0 0.0
        %443 = vmatprep.mubr.f32.mxu0 0.0
        %444 = vmatmul.mubr.f32.gmra.mxu0 %v374
        %v445 = vpop.f32.mrf.mxu0
        %v446 = vadd.f32 %v370, %v445
        %v447 = vpop.f32.mrf.mxu0
        %448 = vdwg.mxu0
        %s449 = scalar_lea.vmem %s259, %s290
        %v450 = vld [vmem:[%s449] sm:$0xf]
        %v452 = vsel %vm295, %v269, 0
        %v455 = vsel %vm299, %v450, 0
        %457 = vmatprep.subr.mxu0 0.0
        %458 = vmatpush1.msra.mxu0 0.0
        %459 = vmatprep.subr.mxu0 0.0
        %460 = vmatpush1.msra.mxu0 0.0
        %461 = vmatprep.subr.mxu0 0.0
        %462 = vmatpush1.msra.mxu0 0.0
        %463 = vmatprep.subr.mxu0 0.0
        %464 = vmatpush1.msra.mxu0 0.0
        %465 = vmatprep.subr.mxu0 0.0
        %466 = vmatpush1.msra.mxu0 0.0
        %467 = vmatprep.subr.mxu0 0.0
        %468 = vmatpush1.msra.mxu0 0.0
        %469 = vmatprep.subr.mxu0 0.0
        %470 = vmatpush1.msra.mxu0 0.0
        %471 = vmatprep.subr.mxu0 0.0
        %472 = vmatpush1.msra.mxu0 0.0
        %473 = vmatprep.subr.mxu0 0.0
        %474 = vmatpush1.msra.mxu0 0.0
        %475 = vmatprep.subr.mxu0 0.0
        %476 = vmatpush1.msra.mxu0 0.0
        %477 = vmatprep.subr.mxu0 0.0
        %478 = vmatpush1.msra.mxu0 0.0
        %479 = vmatprep.subr.mxu0 0.0
        %480 = vmatpush1.msra.mxu0 0.0
        %481 = vmatprep.subr.mxu0 0.0
        %482 = vmatpush1.msra.mxu0 0.0
        %483 = vmatprep.subr.mxu0 0.0
        %484 = vmatpush1.msra.mxu0 0.0
        %485 = vmatprep.subr.mxu0 0.0
        %486 = vmatpush1.msra.mxu0 0.0
        %487 = vmatprep.subr.mxu0 0.0
        %488 = vmatpush1.msra.mxu0 %v455
        %489 = vmatprep.subr.mxu0 0.0
        %490 = vmatpush2.msra.mxu0 0.0
        %491 = vmatprep.subr.mxu0 0.0
        %492 = vmatpush2.msra.mxu0 0.0
        %493 = vmatprep.subr.mxu0 0.0
        %494 = vmatpush2.msra.mxu0 0.0
        %495 = vmatprep.subr.mxu0 0.0
        %496 = vmatpush2.msra.mxu0 0.0
        %497 = vmatprep.subr.mxu0 0.0
        %498 = vmatpush2.msra.mxu0 0.0
        %499 = vmatprep.subr.mxu0 0.0
        %500 = vmatpush2.msra.mxu0 0.0
        %501 = vmatprep.subr.mxu0 0.0
        %502 = vmatpush2.msra.mxu0 0.0
        %503 = vmatprep.subr.mxu0 0.0
        %504 = vmatpush2.msra.mxu0 0.0
        %505 = vmatprep.subr.mxu0 0.0
        %506 = vmatpush2.msra.mxu0 0.0
        %507 = vmatprep.subr.mxu0 0.0
        %508 = vmatpush2.msra.mxu0 0.0
        %509 = vmatprep.subr.mxu0 0.0
        %510 = vmatpush2.msra.mxu0 0.0
        %511 = vmatprep.subr.mxu0 0.0
        %512 = vmatpush2.msra.mxu0 0.0
        %513 = vmatprep.subr.mxu0 0.0
        %514 = vmatpush2.msra.mxu0 0.0
        %515 = vmatprep.subr.mxu0 0.0
        %516 = vmatpush2.msra.mxu0 0.0
        %517 = vmatprep.subr.mxu0 0.0
        %518 = vmatpush2.msra.mxu0 0.0
        %519 = vmatprep.subr.mxu0 0.0
        %520 = vmatpush2.msra.mxu0 0.0
        %521 = vmatprep.mubr.f32.mxu0 0.0
        %522 = vmatmul.mubr.f32.gmra.mxu0 %v452
        %v523 = vpop.f32.mrf.mxu0
        %v524 = vadd.f32 0.0, %v523
        %v525 = vpop.f32.mrf.mxu0
        %526 = vdwg.mxu0
        %v527 = vadd.f32 %v446, %v524
        %s528 = sadd.s32 %s289, 1
        %s529 = smul.u32 %s528, 4
        %s530 = scalar_lea.vmem %s249, %s529
        %v531 = vld [vmem:[%s530] sm:$0xf]
        %v533 = vsel %vm295, %v271, 0
        %v536 = vsel %vm299, %v531, 0
        %538 = vmatprep.subr.mxu0 0.0
        %539 = vmatpush1.msra.mxu0 0.0
        %540 = vmatprep.subr.mxu0 0.0
        %541 = vmatpush1.msra.mxu0 0.0
        %542 = vmatprep.subr.mxu0 0.0
        %543 = vmatpush1.msra.mxu0 0.0
        %544 = vmatprep.subr.mxu0 0.0
        %545 = vmatpush1.msra.mxu0 0.0
        %546 = vmatprep.subr.mxu0 0.0
        %547 = vmatpush1.msra.mxu0 0.0
        %548 = vmatprep.subr.mxu0 0.0
        %549 = vmatpush1.msra.mxu0 0.0
        %550 = vmatprep.subr.mxu0 0.0
        %551 = vmatpush1.msra.mxu0 0.0
        %552 = vmatprep.subr.mxu0 0.0
        %553 = vmatpush1.msra.mxu0 0.0
        %554 = vmatprep.subr.mxu0 0.0
        %555 = vmatpush1.msra.mxu0 0.0
        %556 = vmatprep.subr.mxu0 0.0
        %557 = vmatpush1.msra.mxu0 0.0
        %558 = vmatprep.subr.mxu0 0.0
        %559 = vmatpush1.msra.mxu0 0.0
        %560 = vmatprep.subr.mxu0 0.0
        %561 = vmatpush1.msra.mxu0 0.0
        %562 = vmatprep.subr.mxu0 0.0
        %563 = vmatpush1.msra.mxu0 0.0
        %564 = vmatprep.subr.mxu0 0.0
        %565 = vmatpush1.msra.mxu0 0.0
        %566 = vmatprep.subr.mxu0 0.0
        %567 = vmatpush1.msra.mxu0 0.0
        %568 = vmatprep.subr.mxu0 0.0
        %569 = vmatpush1.msra.mxu0 %v536
        %570 = vmatprep.subr.mxu0 0.0
        %571 = vmatpush2.msra.mxu0 0.0
        %572 = vmatprep.subr.mxu0 0.0
        %573 = vmatpush2.msra.mxu0 0.0
        %574 = vmatprep.subr.mxu0 0.0
        %575 = vmatpush2.msra.mxu0 0.0
        %576 = vmatprep.subr.mxu0 0.0
        %577 = vmatpush2.msra.mxu0 0.0
        %578 = vmatprep.subr.mxu0 0.0
        %579 = vmatpush2.msra.mxu0 0.0
        %580 = vmatprep.subr.mxu0 0.0
        %581 = vmatpush2.msra.mxu0 0.0
        %582 = vmatprep.subr.mxu0 0.0
        %583 = vmatpush2.msra.mxu0 0.0
        %584 = vmatprep.subr.mxu0 0.0
        %585 = vmatpush2.msra.mxu0 0.0
        %586 = vmatprep.subr.mxu0 0.0
        %587 = vmatpush2.msra.mxu0 0.0
        %588 = vmatprep.subr.mxu0 0.0
        %589 = vmatpush2.msra.mxu0 0.0
        %590 = vmatprep.subr.mxu0 0.0
        %591 = vmatpush2.msra.mxu0 0.0
        %592 = vmatprep.subr.mxu0 0.0
        %593 = vmatpush2.msra.mxu0 0.0
        %594 = vmatprep.subr.mxu0 0.0
        %595 = vmatpush2.msra.mxu0 0.0
        %596 = vmatprep.subr.mxu0 0.0
        %597 = vmatpush2.msra.mxu0 0.0
        %598 = vmatprep.subr.mxu0 0.0
        %599 = vmatpush2.msra.mxu0 0.0
        %600 = vmatprep.subr.mxu0 0.0
        %601 = vmatpush2.msra.mxu0 0.0
        %602 = vmatprep.mubr.f32.mxu0 0.0
        %603 = vmatmul.mubr.f32.gmra.mxu0 %v533
        %v604 = vpop.f32.mrf.mxu0
        %v605 = vadd.f32 0.0, %v604
        %v606 = vpop.f32.mrf.mxu0
        %607 = vdwg.mxu0
        %v608 = vadd.f32 %v527, %v605
        %s609 = scalar_lea.vmem %s254, %s529
        %v610 = vld [vmem:[%s609] sm:$0xf]
        %v612 = vsel %vm295, %v273, 0
        %v615 = vsel %vm299, %v610, 0
        %617 = vmatprep.subr.mxu0 0.0
        %618 = vmatpush1.msra.mxu0 0.0
        %619 = vmatprep.subr.mxu0 0.0
        %620 = vmatpush1.msra.mxu0 0.0
        %621 = vmatprep.subr.mxu0 0.0
        %622 = vmatpush1.msra.mxu0 0.0
        %623 = vmatprep.subr.mxu0 0.0
        %624 = vmatpush1.msra.mxu0 0.0
        %625 = vmatprep.subr.mxu0 0.0
        %626 = vmatpush1.msra.mxu0 0.0
        %627 = vmatprep.subr.mxu0 0.0
        %628 = vmatpush1.msra.mxu0 0.0
        %629 = vmatprep.subr.mxu0 0.0
        %630 = vmatpush1.msra.mxu0 0.0
        %631 = vmatprep.subr.mxu0 0.0
        %632 = vmatpush1.msra.mxu0 0.0
        %633 = vmatprep.subr.mxu0 0.0
        %634 = vmatpush1.msra.mxu0 0.0
        %635 = vmatprep.subr.mxu0 0.0
        %636 = vmatpush1.msra.mxu0 0.0
        %637 = vmatprep.subr.mxu0 0.0
        %638 = vmatpush1.msra.mxu0 0.0
        %639 = vmatprep.subr.mxu0 0.0
        %640 = vmatpush1.msra.mxu0 0.0
        %641 = vmatprep.subr.mxu0 0.0
        %642 = vmatpush1.msra.mxu0 0.0
        %643 = vmatprep.subr.mxu0 0.0
        %644 = vmatpush1.msra.mxu0 0.0
        %645 = vmatprep.subr.mxu0 0.0
        %646 = vmatpush1.msra.mxu0 0.0
        %647 = vmatprep.subr.mxu0 0.0
        %648 = vmatpush1.msra.mxu0 %v615
        %649 = vmatprep.subr.mxu0 0.0
        %650 = vmatpush2.msra.mxu0 0.0
        %651 = vmatprep.subr.mxu0 0.0
        %652 = vmatpush2.msra.mxu0 0.0
        %653 = vmatprep.subr.mxu0 0.0
        %654 = vmatpush2.msra.mxu0 0.0
        %655 = vmatprep.subr.mxu0 0.0
        %656 = vmatpush2.msra.mxu0 0.0
        %657 = vmatprep.subr.mxu0 0.0
        %658 = vmatpush2.msra.mxu0 0.0
        %659 = vmatprep.subr.mxu0 0.0
        %660 = vmatpush2.msra.mxu0 0.0
        %661 = vmatprep.subr.mxu0 0.0
        %662 = vmatpush2.msra.mxu0 0.0
        %663 = vmatprep.subr.mxu0 0.0
        %664 = vmatpush2.msra.mxu0 0.0
        %665 = vmatprep.subr.mxu0 0.0
        %666 = vmatpush2.msra.mxu0 0.0
        %667 = vmatprep.subr.mxu0 0.0
        %668 = vmatpush2.msra.mxu0 0.0
        %669 = vmatprep.subr.mxu0 0.0
        %670 = vmatpush2.msra.mxu0 0.0
        %671 = vmatprep.subr.mxu0 0.0
        %672 = vmatpush2.msra.mxu0 0.0
        %673 = vmatprep.subr.mxu0 0.0
        %674 = vmatpush2.msra.mxu0 0.0
        %675 = vmatprep.subr.mxu0 0.0
        %676 = vmatpush2.msra.mxu0 0.0
        %677 = vmatprep.subr.mxu0 0.0
        %678 = vmatpush2.msra.mxu0 0.0
        %679 = vmatprep.subr.mxu0 0.0
        %680 = vmatpush2.msra.mxu0 0.0
        %681 = vmatprep.mubr.f32.mxu0 0.0
        %682 = vmatmul.mubr.f32.gmra.mxu0 %v612
        %v683 = vpop.f32.mrf.mxu0
        %v684 = vadd.f32 0.0, %v683
        %v685 = vpop.f32.mrf.mxu0
        %686 = vdwg.mxu0
        %v687 = vadd.f32 %v608, %v684
        %s688 = scalar_lea.vmem %s259, %s529
        %v689 = vld [vmem:[%s688] sm:$0xf]
        %v691 = vsel %vm295, %v275, 0
        %v694 = vsel %vm299, %v689, 0
        %696 = vmatprep.subr.mxu0 0.0
        %697 = vmatpush1.msra.mxu0 0.0
        %698 = vmatprep.subr.mxu0 0.0
        %699 = vmatpush1.msra.mxu0 0.0
        %700 = vmatprep.subr.mxu0 0.0
        %701 = vmatpush1.msra.mxu0 0.0
        %702 = vmatprep.subr.mxu0 0.0
        %703 = vmatpush1.msra.mxu0 0.0
        %704 = vmatprep.subr.mxu0 0.0
        %705 = vmatpush1.msra.mxu0 0.0
        %706 = vmatprep.subr.mxu0 0.0
        %707 = vmatpush1.msra.mxu0 0.0
        %708 = vmatprep.subr.mxu0 0.0
        %709 = vmatpush1.msra.mxu0 0.0
        %710 = vmatprep.subr.mxu0 0.0
        %711 = vmatpush1.msra.mxu0 0.0
        %712 = vmatprep.subr.mxu0 0.0
        %713 = vmatpush1.msra.mxu0 0.0
        %714 = vmatprep.subr.mxu0 0.0
        %715 = vmatpush1.msra.mxu0 0.0
        %716 = vmatprep.subr.mxu0 0.0
        %717 = vmatpush1.msra.mxu0 0.0
        %718 = vmatprep.subr.mxu0 0.0
        %719 = vmatpush1.msra.mxu0 0.0
        %720 = vmatprep.subr.mxu0 0.0
        %721 = vmatpush1.msra.mxu0 0.0
        %722 = vmatprep.subr.mxu0 0.0
        %723 = vmatpush1.msra.mxu0 0.0
        %724 = vmatprep.subr.mxu0 0.0
        %725 = vmatpush1.msra.mxu0 0.0
        %726 = vmatprep.subr.mxu0 0.0
        %727 = vmatpush1.msra.mxu0 %v694
        %728 = vmatprep.subr.mxu0 0.0
        %729 = vmatpush2.msra.mxu0 0.0
        %730 = vmatprep.subr.mxu0 0.0
        %731 = vmatpush2.msra.mxu0 0.0
        %732 = vmatprep.subr.mxu0 0.0
        %733 = vmatpush2.msra.mxu0 0.0
        %734 = vmatprep.subr.mxu0 0.0
        %735 = vmatpush2.msra.mxu0 0.0
        %736 = vmatprep.subr.mxu0 0.0
        %737 = vmatpush2.msra.mxu0 0.0
        %738 = vmatprep.subr.mxu0 0.0
        %739 = vmatpush2.msra.mxu0 0.0
        %740 = vmatprep.subr.mxu0 0.0
        %741 = vmatpush2.msra.mxu0 0.0
        %742 = vmatprep.subr.mxu0 0.0
        %743 = vmatpush2.msra.mxu0 0.0
        %744 = vmatprep.subr.mxu0 0.0
        %745 = vmatpush2.msra.mxu0 0.0
        %746 = vmatprep.subr.mxu0 0.0
        %747 = vmatpush2.msra.mxu0 0.0
        %748 = vmatprep.subr.mxu0 0.0
        %749 = vmatpush2.msra.mxu0 0.0
        %750 = vmatprep.subr.mxu0 0.0
        %751 = vmatpush2.msra.mxu0 0.0
        %752 = vmatprep.subr.mxu0 0.0
        %753 = vmatpush2.msra.mxu0 0.0
        %754 = vmatprep.subr.mxu0 0.0
        %755 = vmatpush2.msra.mxu0 0.0
        %756 = vmatprep.subr.mxu0 0.0
        %757 = vmatpush2.msra.mxu0 0.0
        %758 = vmatprep.subr.mxu0 0.0
        %759 = vmatpush2.msra.mxu0 0.0
        %760 = vmatprep.mubr.f32.mxu0 0.0
        %761 = vmatmul.mubr.f32.gmra.mxu0 %v691
        %v762 = vpop.f32.mrf.mxu0
        %v763 = vadd.f32 0.0, %v762
        %v764 = vpop.f32.mrf.mxu0
        %765 = vdwg.mxu0
        %v766 = vadd.f32 %v687, %v763
        %s767 = sadd.s32 %s289, 2
        %s768 = smul.u32 %s767, 4
        %s769 = scalar_lea.vmem %s249, %s768
        %v770 = vld [vmem:[%s769] sm:$0xf]
        %v772 = vsel %vm295, %v277, 0
        %v775 = vsel %vm299, %v770, 0
        %777 = vmatprep.subr.mxu0 0.0
        %778 = vmatpush1.msra.mxu0 0.0
        %779 = vmatprep.subr.mxu0 0.0
        %780 = vmatpush1.msra.mxu0 0.0
        %781 = vmatprep.subr.mxu0 0.0
        %782 = vmatpush1.msra.mxu0 0.0
        %783 = vmatprep.subr.mxu0 0.0
        %784 = vmatpush1.msra.mxu0 0.0
        %785 = vmatprep.subr.mxu0 0.0
        %786 = vmatpush1.msra.mxu0 0.0
        %787 = vmatprep.subr.mxu0 0.0
        %788 = vmatpush1.msra.mxu0 0.0
        %789 = vmatprep.subr.mxu0 0.0
        %790 = vmatpush1.msra.mxu0 0.0
        %791 = vmatprep.subr.mxu0 0.0
        %792 = vmatpush1.msra.mxu0 0.0
        %793 = vmatprep.subr.mxu0 0.0
        %794 = vmatpush1.msra.mxu0 0.0
        %795 = vmatprep.subr.mxu0 0.0
        %796 = vmatpush1.msra.mxu0 0.0
        %797 = vmatprep.subr.mxu0 0.0
        %798 = vmatpush1.msra.mxu0 0.0
        %799 = vmatprep.subr.mxu0 0.0
        %800 = vmatpush1.msra.mxu0 0.0
        %801 = vmatprep.subr.mxu0 0.0
        %802 = vmatpush1.msra.mxu0 0.0
        %803 = vmatprep.subr.mxu0 0.0
        %804 = vmatpush1.msra.mxu0 0.0
        %805 = vmatprep.subr.mxu0 0.0
        %806 = vmatpush1.msra.mxu0 0.0
        %807 = vmatprep.subr.mxu0 0.0
        %808 = vmatpush1.msra.mxu0 %v775
        %809 = vmatprep.subr.mxu0 0.0
        %810 = vmatpush2.msra.mxu0 0.0
        %811 = vmatprep.subr.mxu0 0.0
        %812 = vmatpush2.msra.mxu0 0.0
        %813 = vmatprep.subr.mxu0 0.0
        %814 = vmatpush2.msra.mxu0 0.0
        %815 = vmatprep.subr.mxu0 0.0
        %816 = vmatpush2.msra.mxu0 0.0
        %817 = vmatprep.subr.mxu0 0.0
        %818 = vmatpush2.msra.mxu0 0.0
        %819 = vmatprep.subr.mxu0 0.0
        %820 = vmatpush2.msra.mxu0 0.0
        %821 = vmatprep.subr.mxu0 0.0
        %822 = vmatpush2.msra.mxu0 0.0
        %823 = vmatprep.subr.mxu0 0.0
        %824 = vmatpush2.msra.mxu0 0.0
        %825 = vmatprep.subr.mxu0 0.0
        %826 = vmatpush2.msra.mxu0 0.0
        %827 = vmatprep.subr.mxu0 0.0
        %828 = vmatpush2.msra.mxu0 0.0
        %829 = vmatprep.subr.mxu0 0.0
        %830 = vmatpush2.msra.mxu0 0.0
        %831 = vmatprep.subr.mxu0 0.0
        %832 = vmatpush2.msra.mxu0 0.0
        %833 = vmatprep.subr.mxu0 0.0
        %834 = vmatpush2.msra.mxu0 0.0
        %835 = vmatprep.subr.mxu0 0.0
        %836 = vmatpush2.msra.mxu0 0.0
        %837 = vmatprep.subr.mxu0 0.0
        %838 = vmatpush2.msra.mxu0 0.0
        %839 = vmatprep.subr.mxu0 0.0
        %840 = vmatpush2.msra.mxu0 0.0
        %841 = vmatprep.mubr.f32.mxu0 0.0
        %842 = vmatmul.mubr.f32.gmra.mxu0 %v772
        %v843 = vpop.f32.mrf.mxu0
        %v844 = vadd.f32 0.0, %v843
        %v845 = vpop.f32.mrf.mxu0
        %846 = vdwg.mxu0
        %v847 = vadd.f32 %v766, %v844
        %s848 = scalar_lea.vmem %s254, %s768
        %v849 = vld [vmem:[%s848] sm:$0xf]
        %v851 = vsel %vm295, %v279, 0
        %v854 = vsel %vm299, %v849, 0
        %856 = vmatprep.subr.mxu0 0.0
        %857 = vmatpush1.msra.mxu0 0.0
        %858 = vmatprep.subr.mxu0 0.0
        %859 = vmatpush1.msra.mxu0 0.0
        %860 = vmatprep.subr.mxu0 0.0
        %861 = vmatpush1.msra.mxu0 0.0
        %862 = vmatprep.subr.mxu0 0.0
        %863 = vmatpush1.msra.mxu0 0.0
        %864 = vmatprep.subr.mxu0 0.0
        %865 = vmatpush1.msra.mxu0 0.0
        %866 = vmatprep.subr.mxu0 0.0
        %867 = vmatpush1.msra.mxu0 0.0
        %868 = vmatprep.subr.mxu0 0.0
        %869 = vmatpush1.msra.mxu0 0.0
        %870 = vmatprep.subr.mxu0 0.0
        %871 = vmatpush1.msra.mxu0 0.0
        %872 = vmatprep.subr.mxu0 0.0
        %873 = vmatpush1.msra.mxu0 0.0
        %874 = vmatprep.subr.mxu0 0.0
        %875 = vmatpush1.msra.mxu0 0.0
        %876 = vmatprep.subr.mxu0 0.0
        %877 = vmatpush1.msra.mxu0 0.0
        %878 = vmatprep.subr.mxu0 0.0
        %879 = vmatpush1.msra.mxu0 0.0
        %880 = vmatprep.subr.mxu0 0.0
        %881 = vmatpush1.msra.mxu0 0.0
        %882 = vmatprep.subr.mxu0 0.0
        %883 = vmatpush1.msra.mxu0 0.0
        %884 = vmatprep.subr.mxu0 0.0
        %885 = vmatpush1.msra.mxu0 0.0
        %886 = vmatprep.subr.mxu0 0.0
        %887 = vmatpush1.msra.mxu0 %v854
        %888 = vmatprep.subr.mxu0 0.0
        %889 = vmatpush2.msra.mxu0 0.0
        %890 = vmatprep.subr.mxu0 0.0
        %891 = vmatpush2.msra.mxu0 0.0
        %892 = vmatprep.subr.mxu0 0.0
        %893 = vmatpush2.msra.mxu0 0.0
        %894 = vmatprep.subr.mxu0 0.0
        %895 = vmatpush2.msra.mxu0 0.0
        %896 = vmatprep.subr.mxu0 0.0
        %897 = vmatpush2.msra.mxu0 0.0
        %898 = vmatprep.subr.mxu0 0.0
        %899 = vmatpush2.msra.mxu0 0.0
        %900 = vmatprep.subr.mxu0 0.0
        %901 = vmatpush2.msra.mxu0 0.0
        %902 = vmatprep.subr.mxu0 0.0
        %903 = vmatpush2.msra.mxu0 0.0
        %904 = vmatprep.subr.mxu0 0.0
        %905 = vmatpush2.msra.mxu0 0.0
        %906 = vmatprep.subr.mxu0 0.0
        %907 = vmatpush2.msra.mxu0 0.0
        %908 = vmatprep.subr.mxu0 0.0
        %909 = vmatpush2.msra.mxu0 0.0
        %910 = vmatprep.subr.mxu0 0.0
        %911 = vmatpush2.msra.mxu0 0.0
        %912 = vmatprep.subr.mxu0 0.0
        %913 = vmatpush2.msra.mxu0 0.0
        %914 = vmatprep.subr.mxu0 0.0
        %915 = vmatpush2.msra.mxu0 0.0
        %916 = vmatprep.subr.mxu0 0.0
        %917 = vmatpush2.msra.mxu0 0.0
        %918 = vmatprep.subr.mxu0 0.0
        %919 = vmatpush2.msra.mxu0 0.0
        %920 = vmatprep.mubr.f32.mxu0 0.0
        %921 = vmatmul.mubr.f32.gmra.mxu0 %v851
        %v922 = vpop.f32.mrf.mxu0
        %v923 = vadd.f32 0.0, %v922
        %v924 = vpop.f32.mrf.mxu0
        %925 = vdwg.mxu0
        %v926 = vadd.f32 %v847, %v923
        %s927 = scalar_lea.vmem %s259, %s768
        %v928 = vld [vmem:[%s927] sm:$0xf]
        %v930 = vsel %vm295, %v281, 0
        %v933 = vsel %vm299, %v928, 0
        %935 = vmatprep.subr.mxu0 0.0
        %936 = vmatpush1.msra.mxu0 0.0
        %937 = vmatprep.subr.mxu0 0.0
        %938 = vmatpush1.msra.mxu0 0.0
        %939 = vmatprep.subr.mxu0 0.0
        %940 = vmatpush1.msra.mxu0 0.0
        %941 = vmatprep.subr.mxu0 0.0
        %942 = vmatpush1.msra.mxu0 0.0
        %943 = vmatprep.subr.mxu0 0.0
        %944 = vmatpush1.msra.mxu0 0.0
        %945 = vmatprep.subr.mxu0 0.0
        %946 = vmatpush1.msra.mxu0 0.0
        %947 = vmatprep.subr.mxu0 0.0
        %948 = vmatpush1.msra.mxu0 0.0
        %949 = vmatprep.subr.mxu0 0.0
        %950 = vmatpush1.msra.mxu0 0.0
        %951 = vmatprep.subr.mxu0 0.0
        %952 = vmatpush1.msra.mxu0 0.0
        %953 = vmatprep.subr.mxu0 0.0
        %954 = vmatpush1.msra.mxu0 0.0
        %955 = vmatprep.subr.mxu0 0.0
        %956 = vmatpush1.msra.mxu0 0.0
        %957 = vmatprep.subr.mxu0 0.0
        %958 = vmatpush1.msra.mxu0 0.0
        %959 = vmatprep.subr.mxu0 0.0
        %960 = vmatpush1.msra.mxu0 0.0
        %961 = vmatprep.subr.mxu0 0.0
        %962 = vmatpush1.msra.mxu0 0.0
        %963 = vmatprep.subr.mxu0 0.0
        %964 = vmatpush1.msra.mxu0 0.0
        %965 = vmatprep.subr.mxu0 0.0
        %966 = vmatpush1.msra.mxu0 %v933
        %967 = vmatprep.subr.mxu0 0.0
        %968 = vmatpush2.msra.mxu0 0.0
        %969 = vmatprep.subr.mxu0 0.0
        %970 = vmatpush2.msra.mxu0 0.0
        %971 = vmatprep.subr.mxu0 0.0
        %972 = vmatpush2.msra.mxu0 0.0
        %973 = vmatprep.subr.mxu0 0.0
        %974 = vmatpush2.msra.mxu0 0.0
        %975 = vmatprep.subr.mxu0 0.0
        %976 = vmatpush2.msra.mxu0 0.0
        %977 = vmatprep.subr.mxu0 0.0
        %978 = vmatpush2.msra.mxu0 0.0
        %979 = vmatprep.subr.mxu0 0.0
        %980 = vmatpush2.msra.mxu0 0.0
        %981 = vmatprep.subr.mxu0 0.0
        %982 = vmatpush2.msra.mxu0 0.0
        %983 = vmatprep.subr.mxu0 0.0
        %984 = vmatpush2.msra.mxu0 0.0
        %985 = vmatprep.subr.mxu0 0.0
        %986 = vmatpush2.msra.mxu0 0.0
        %987 = vmatprep.subr.mxu0 0.0
        %988 = vmatpush2.msra.mxu0 0.0
        %989 = vmatprep.subr.mxu0 0.0
        %990 = vmatpush2.msra.mxu0 0.0
        %991 = vmatprep.subr.mxu0 0.0
        %992 = vmatpush2.msra.mxu0 0.0
        %993 = vmatprep.subr.mxu0 0.0
        %994 = vmatpush2.msra.mxu0 0.0
        %995 = vmatprep.subr.mxu0 0.0
        %996 = vmatpush2.msra.mxu0 0.0
        %997 = vmatprep.subr.mxu0 0.0
        %998 = vmatpush2.msra.mxu0 0.0
        %999 = vmatprep.mubr.f32.mxu0 0.0
        %1000 = vmatmul.mubr.f32.gmra.mxu0 %v930
        %v1001 = vpop.f32.mrf.mxu0
        %v1002 = vadd.f32 0.0, %v1001
        %v1003 = vpop.f32.mrf.mxu0
        %1004 = vdwg.mxu0
        %v1005 = vadd.f32 %v926, %v1002
        %1007 = vset.pattern.permute.xlu0 0
        %1008 = vperm.xlu0 %1007, %v282
        %v1009 = vpop.permute.xlu0 %1008
        %v1011 = vadd.f32 %v1005, %v1009
        %vm1012 = vcmp.ge.f32.partialorder %v1011, 0.0
        %v1013 = vmul.f32 %v1011, 0.2
        %v1014 = vsel %vm1012, %v1011, %v1013
        %s1015 = smul.u32 %s284, 8
        %s1016 = scalar_lea.vmem %s264, %s1015
        %vm1017 = vcmask 23552
        %1018 = vst.msk [vmem:[%s1016] sm:$0xff] %vm1017, %v1014
      $region45: #{a_call__.4} parent=39 // loop_footer
        %s288 = sadd.s32 1, %s284
      $region46: #{a_call__.4} parent=39 // loop_footer_branch
        %283 = sbr.rel target = $region42
      $region47: #{a_call__.4} parent=39 // loop_exit
        _
      %p1019 = scmp.lt.s32.totalorder %s16, 1
      %s1020 = scalar_select %p1019, %s16, 1
      %s1021 = smul.addr %s1020, 3
      %s1022 = smul.addr %s1021, 8
      %s1023 = scalar_lea.vmem %s5, %s1022
      // Predicated region
      $region48: #{a_call__.4} parent=39 // pred_check
        %p1024 = pneg %p154
      $region49: #{a_call__.4} parent=39 // pred_check_branch
        %1026 = sbr.rel (%p1024) target = $region51
      $region50: #{a_call__.4} parent=39 // pred_region
        _
      $region51: #{a_call__.4} parent=39 // pred_fallthru
        _
    $region40: #{a_call__.4} parent=5 // pred_fallthru
      _
    %p1027 = scmp.le.s32.totalorder 2, %s11
    // Predicated region
    $region52: #{a_call__.4} parent=5 // pred_check
      %p1028 = pneg %p1027
    $region53: #{a_call__.4} parent=5 // pred_check_branch
      %1030 = sbr.rel (%p1028) target = $region55
    $region54: #{a_call__.4} parent=5 // pred_region
      %s1031 = ssub.s32 %s11, 2
      // Predicated region
      $region56: #{a_call__.4} parent=54 // pred_check
        %p1032 = pneg %p160
      $region57: #{a_call__.4} parent=54 // pred_check_branch
        %1034 = sbr.rel (%p1032) target = $region59
      $region58: #{a_call__.4} parent=54 // pred_region
        %p1035 = scmp.lt.s32.totalorder %s17, 1
        %s1036 = scalar_select %p1035, %s17, 1
        %s1037 = smul.addr %s1036, 3
        %s1038 = smul.addr %s1037, 8
        %s1039 = scalar_lea.vmem %s5, %s1038
      $region59: #{a_call__.4} parent=54 // pred_fallthru
        _
    $region55: #{a_call__.4} parent=5 // pred_fallthru
      _
  $region6: #{a_call__.4} parent=0 // loop_footer
    %s15 = sadd.s32 1, %s11
  $region7: #{a_call__.4} parent=0 // loop_footer_branch
    %10 = sbr.rel target = $region3
  $region8: #{a_call__.4} parent=0 // loop_exit
    _

</llo_original>
